<compile_context>
chip_gen: v6e
topology: v6e:2x2x1
jax: 0.10.0
libtpu: 0.0.40
codegen_flags: <defaults>
</compile_context>

<pallas_src>
import functools
import math

import jax
import jax.numpy as jnp
from jax.experimental import pallas as pl
from jax.experimental.pallas import tpu as pltpu

LN_EPS = 1e-5  # torch.nn.LayerNorm default


def _layernorm(x, gamma, beta):
    # f32 math on purpose (keep elementwise/transcendental work off bf16 paths).
    mean = jnp.mean(x, axis=-1, keepdims=True)
    var = jnp.mean((x - mean) ** 2, axis=-1, keepdims=True)
    inv = jax.lax.rsqrt(var + LN_EPS)
    return (x - mean) * inv * gamma + beta


def encoder_layer_kernel(x_tile_ref, k_ref, v_ref,
                         wq_ref, bq_ref, wo_ref, bo_ref,
                         g1_ref, be1_ref, w1_ref, b1_ref, w2_ref, b2_ref,
                         g2_ref, be2_ref,
                         o_ref, ctx_ref, *, num_heads):
    x_tile = x_tile_ref[0]                 # (T, H) bf16 query rows of this step
    k = k_ref[0]                           # (S, H) bf16 (projection hoisted to XLA)
    v = v_ref[0]                           # (S, H) bf16
    _, H = x_tile.shape
    head_dim = H // num_heads
    scale = 1.0 / math.sqrt(head_dim)

    # ---- Q projection for this tile only (K/V were hoisted to the wrapper) ----
    q = jnp.dot(x_tile, wq_ref[...], preferred_element_type=jnp.float32) + bq_ref[...]
    q = (q * scale).astype(jnp.bfloat16)   # fold 1/sqrt(hd) into q once

    # ---- Multi-head self-attention (non-causal) --------------------------------
    # Static head loop: each head's (T,S) probs and (T,hd) context are consumed
    # by the scratch store, so live ranges are bounded per head (no carried
    # accumulator).  Wo is applied once, after the loop, as a full-K matmul.
    # TODO(synk): for S >= 4K on v7x, chunk K/V along S with an online-softmax
    # inner loop (pltpu.emit_pipeline) so k/v and the (T,S) scores aren't fully
    # resident in VMEM.
    for h in range(num_heads):
        lo = h * head_dim
        qh = q[:, lo:lo + head_dim]         # (T, hd) bf16
        kh = k[:, lo:lo + head_dim]         # (S, hd) bf16
        vh = v[:, lo:lo + head_dim]         # (S, hd) bf16
        # Contract last dims directly (no kh.T relayout through the XLU).
        s = jax.lax.dot_general(qh, kh, (((1,), (1,)), ((), ())),
                                preferred_element_type=jnp.float32)   # (T, S) f32
        s = s - jnp.max(s, axis=-1, keepdims=True)
        p = jnp.exp(s)
        inv_l = pl.reciprocal(jnp.sum(p, axis=-1, keepdims=True))     # exact, (T,1)
        p = p * inv_l
        ctx = jnp.dot(p.astype(jnp.bfloat16), vh,
                      preferred_element_type=jnp.float32)             # (T, hd)
        ctx_ref[:, lo:lo + head_dim] = ctx.astype(jnp.bfloat16)

    # Single (T,H)@(H,H) output projection (full MXU K-depth).
    att = jnp.dot(ctx_ref[...], wo_ref[...],
                  preferred_element_type=jnp.float32) + bo_ref[...]

    # dropout p=0.0 -> identity; the reference never adds the first residual.
    y1 = _layernorm(att, g1_ref[...], be1_ref[...])

    # ---- FFN: Linear -> ReLU -> Linear, then residual + LayerNorm --------------
    h1 = jnp.dot(y1.astype(jnp.bfloat16), w1_ref[...],
                 preferred_element_type=jnp.float32) + b1_ref[...]
    h1 = jnp.maximum(h1, 0.0)
    ffn = jnp.dot(h1.astype(jnp.bfloat16), w2_ref[...],
                  preferred_element_type=jnp.float32) + b2_ref[...]

    y2 = _layernorm(ffn + y1, g2_ref[...], be2_ref[...])
    o_ref[0] = y2.astype(o_ref.dtype)


def _tpu_defaults():
    """(preferred query-tile size, vmem_limit_bytes or None) per TPU generation."""
    kind = ""
    try:
        kind = jax.devices()[0].device_kind.lower()
    except Exception:
        pass
    if "v7" in kind or "7x" in kind:
        # 64 MiB physical VMEM: leave headroom for pipeline buffers / scratch.
        return 128, 48 * 1024 * 1024
    if "v6" in kind:
        # 128 MiB VMEM, 256-wide MXU: bigger query tiles improve M-utilization.
        return 256, 100 * 1024 * 1024
    if "v5" in kind:
        # 128-wide MXU: tile 128; plenty of VMEM.
        # TODO(synk): if DMA is exposed on v5e, deepen x_tile/out buffering
        # (pl.Buffered(3)) with the spare VMEM.
        return 128, 100 * 1024 * 1024
    return 128, None  # unknown generation: compiler default VMEM limit


def _pick_tile_s(S, pref):
    """Largest multiple-of-8 divisor of S that is <= pref (or S itself if small)."""
    if S <= pref:
        return S
    for t in range(pref, 7, -8):          # pref, pref-8, ..., 8
        if S % t == 0:
            return t
    # TODO(synk): pad S to a multiple of 128 for ragged long sequences instead
    # of falling back to an untiled query block.
    return S


def _weight_spec(shape, buffered):
    # Full-array block, constant block index -> fetched once per batch sweep.
    idx = lambda b, t: (0, 0)
    if buffered and hasattr(pl, "Buffered"):
        try:
            # Constant index => 2-deep buffering buys nothing; single-buffer to
            # halve the weights' VMEM footprint (matters on v7x).
            return pl.BlockSpec(shape, idx, pipeline_mode=pl.Buffered(1))
        except TypeError:
            return pl.BlockSpec(shape, idx)
    return pl.BlockSpec(shape, idx)


def transformer_encoder_layer(x, params, num_heads, tile_s=None):
    B, S, H = x.shape
    assert H % num_heads == 0

    pref_tile, vmem_limit = _tpu_defaults()
    if tile_s is None:
        tile_s = _pick_tile_s(S, pref_tile)
    assert S % tile_s == 0
    assert tile_s == S or tile_s % 8 == 0
    n_qt = S // tile_s

    bf16, f32 = jnp.bfloat16, jnp.float32

    # ---- Hoisted K|V projection: once per batch, in plain XLA (f32 accum),
    # pre-cast to bf16 MXU operands for the kernel.
    wkv = jnp.concatenate([params["wk"], params["wv"]], axis=1)        # (H, 2H)
    bkv = jnp.concatenate([params["bk"], params["bv"]], axis=1)        # (1, 2H)
    kv = jnp.einsum("bsh,hd->bsd", x, wkv) + bkv                       # (B, S, 2H) f32
    k = kv[..., :H].astype(bf16)
    v = kv[..., H:].astype(bf16)
    x_bf = x.astype(bf16)  # activations stream as bf16 (halves HBM->VMEM DMA)

    # Pack weights: bf16 for MXU operands, f32 biases / LN params.
    wq = params["wq"].astype(bf16)
    bq = params["bq"].astype(f32)
    wo = params["wo"].astype(bf16)
    bo = params["bo"].astype(f32)
    w1 = params["w1"].astype(bf16)
    b1 = params["b1"].astype(f32)
    w2 = params["w2"].astype(bf16)
    b2 = params["b2"].astype(f32)
    g1, be1 = params["ln1_g"].astype(f32), params["ln1_b"].astype(f32)
    g2, be2 = params["ln2_g"].astype(f32), params["ln2_b"].astype(f32)
    weights = [wq, bq, wo, bo, g1, be1, w1, b1, w2, b2, g2, be2]

    out_spec = pl.BlockSpec((1, tile_s, H), lambda b, t: (b, t, 0))
    # NOTE: for H < 128 the output stores are lane-masked; real models use H as
    # a multiple of 128 where this slab is lane-dense (validated in __main__).

    compiler_kwargs = dict(dimension_semantics=("parallel", "parallel"))
    if vmem_limit is not None:
        compiler_kwargs["vmem_limit_bytes"] = vmem_limit

    def build(buffered_weights):
        in_specs = [
            pl.BlockSpec((1, tile_s, H), lambda b, t: (b, t, 0)),  # x query-row tile
            pl.BlockSpec((1, S, H), lambda b, t: (b, 0, 0)),       # K rows (hoisted)
            pl.BlockSpec((1, S, H), lambda b, t: (b, 0, 0)),       # V rows (hoisted)
        ] + [_weight_spec(w.shape, buffered_weights) for w in weights]
        return pl.pallas_call(
            functools.partial(encoder_layer_kernel, num_heads=num_heads),
            out_shape=jax.ShapeDtypeStruct((B, S, H), x.dtype),
            grid_spec=pltpu.PrefetchScalarGridSpec(
                num_scalar_prefetch=0,
                grid=(B, n_qt),
                in_specs=in_specs,
                out_specs=out_spec,
                scratch_shapes=[pltpu.VMEM((tile_s, H), bf16)],    # per-head ctx slab
            ),
            compiler_params=pltpu.CompilerParams(**compiler_kwargs),
        )

    args = (x_bf, k, v, *weights)
    try:
        return build(True)(*args)
    except Exception:
        # Older jax without single-buffer pipeline_mode support on TPU
        # pallas_call: retry with default (double) buffered weights.
        return build(False)(*args)


# ---------------- plain-JAX fp32 reference (for correctness check) ----------------
def reference(x, params, num_heads):
    B, S, H = x.shape
    hd = H // num_heads

    def lin(z, w, b):
        return z @ w + b[0]

    q = lin(x, params["wq"], params["bq"]).reshape(B, S, num_heads, hd)
    k = lin(x, params["wk"], params["bk"]).reshape(B, S, num_heads, hd)
    v = lin(x, params["wv"], params["bv"]).reshape(B, S, num_heads, hd)
    s = jnp.einsum("bqhd,bkhd->bhqk", q, k) / math.sqrt(hd)
    p = jax.nn.softmax(s, axis=-1)
    att = jnp.einsum("bhqk,bkhd->bqhd", p, v).reshape(B, S, H)
    att = lin(att, params["wo"], params["bo"])

    def ln(z, g, b):
        m = jnp.mean(z, axis=-1, keepdims=True)
        var = jnp.mean((z - m) ** 2, axis=-1, keepdims=True)
        return (z - m) * jax.lax.rsqrt(var + LN_EPS) * g + b

    y1 = ln(att, params["ln1_g"], params["ln1_b"])
    h1 = jnp.maximum(lin(y1, params["w1"], params["b1"]), 0.0)
    ffn = lin(h1, params["w2"], params["b2"])
    return ln(ffn + y1, params["ln2_g"], params["ln2_b"])


def init_params(key, hidden, fcn_hidden):
    ks = jax.random.split(key, 12)

    def lin(kw, kb, fan_in, fan_out):
        w = jax.random.normal(kw, (fan_in, fan_out), jnp.float32) / math.sqrt(fan_in)
        b = 0.01 * jax.random.normal(kb, (1, fan_out), jnp.float32)
        return w, b

    wq, bq = lin(ks[0], ks[1], hidden, hidden)
    wk, bk = lin(ks[2], ks[3], hidden, hidden)
    wv, bv = lin(ks[4], ks[5], hidden, hidden)
    wo, bo = lin(ks[6], ks[7], hidden, hidden)
    w1, b1 = lin(ks[8], ks[9], hidden, fcn_hidden)
    w2, b2 = lin(ks[10], ks[11], fcn_hidden, hidden)
    return {
        "wq": wq, "bq": bq, "wk": wk, "bk": bk, "wv": wv, "bv": bv,
        "wo": wo, "bo": bo,
        "ln1_g": jnp.ones((1, hidden), jnp.float32),
        "ln1_b": jnp.zeros((1, hidden), jnp.float32),
        "w1": w1, "b1": b1, "w2": w2, "b2": b2,
        "ln2_g": jnp.ones((1, hidden), jnp.float32),
        "ln2_b": jnp.zeros((1, hidden), jnp.float32),
    }


if __name__ == "__main__":
    def check(batch, seq, hidden, num_heads, fcn_hidden, tol):
        key = jax.random.PRNGKey(0)
        k_x, k_p = jax.random.split(key)
        x = jax.random.normal(k_x, (batch, seq, hidden), jnp.float32)
        params = init_params(k_p, hidden, fcn_hidden)

        out = jax.block_until_ready(transformer_encoder_layer(x, params, num_heads))
        ref = jax.block_until_ready(reference(x, params, num_heads))
        assert out.shape == (batch, seq, hidden)
        # Remaining error vs the fp32 reference comes from bf16 MXU operands
        # (f32 accumulation); the softmax reciprocal is exact now.
        max_err = float(jnp.max(jnp.abs(out - ref)))
        assert max_err < tol, (
            f"mismatch vs pure-JAX reference at {(batch, seq, hidden)}: "
            f"max abs err {max_err}")

    # Small shape consistent with the module (batch=2, seq=8, hidden=32).
    check(batch=2, seq=8, hidden=32, num_heads=4, fcn_hidden=64, tol=1e-1)
    # Lane-dense / tiled path: S and H multiples of 128 — exercises query-row
    # tiling, (8,128)-aligned blocks, the scratch head-concat and single Wo matmul.
    check(batch=1, seq=256, hidden=128, num_heads=4, fcn_hidden=256, tol=1e-1)

    print("KERNEL_OK")
</pallas_src>

<mosaic_0001>
module attributes {stable_mosaic.version = 11 : i64} {
  func.func @encoder_layer_kernel(%arg0: i32, %arg1: i32, %arg2: memref<1x8x32xbf16, #tpu.memory_space<vmem>>, %arg3: memref<1x8x32xbf16, #tpu.memory_space<vmem>>, %arg4: memref<1x8x32xbf16, #tpu.memory_space<vmem>>, %arg5: memref<32x32xbf16, #tpu.memory_space<vmem>>, %arg6: memref<1x32xf32, #tpu.memory_space<vmem>>, %arg7: memref<32x32xbf16, #tpu.memory_space<vmem>>, %arg8: memref<1x32xf32, #tpu.memory_space<vmem>>, %arg9: memref<1x32xf32, #tpu.memory_space<vmem>>, %arg10: memref<1x32xf32, #tpu.memory_space<vmem>>, %arg11: memref<32x64xbf16, #tpu.memory_space<vmem>>, %arg12: memref<1x64xf32, #tpu.memory_space<vmem>>, %arg13: memref<64x32xbf16, #tpu.memory_space<vmem>>, %arg14: memref<1x32xf32, #tpu.memory_space<vmem>>, %arg15: memref<1x32xf32, #tpu.memory_space<vmem>>, %arg16: memref<1x32xf32, #tpu.memory_space<vmem>>, %arg17: memref<1x8x32xf32, #tpu.memory_space<vmem>>, %arg18: memref<8x32xbf16, #tpu.memory_space<vmem>>) attributes {dimension_semantics = [#tpu.dimension_semantics<parallel>, #tpu.dimension_semantics<parallel>], iteration_bounds = array<i64: 2, 1>, scalar_prefetch = 0 : i64, scratch_operands = 1 : i64, tpu.core_type = #tpu.core_type<tc>, window_params = [{transform_indices = @transform_0, window_bounds = array<i64: 1, 8, 32>}, {transform_indices = @transform_1, window_bounds = array<i64: 1, 8, 32>}, {transform_indices = @transform_2, window_bounds = array<i64: 1, 8, 32>}, {pipeline_mode = #tpu.pipeline_mode<synchronous>, transform_indices = @transform_3, window_bounds = array<i64: 32, 32>}, {pipeline_mode = #tpu.pipeline_mode<synchronous>, transform_indices = @transform_4, window_bounds = array<i64: 1, 32>}, {pipeline_mode = #tpu.pipeline_mode<synchronous>, transform_indices = @transform_5, window_bounds = array<i64: 32, 32>}, {pipeline_mode = #tpu.pipeline_mode<synchronous>, transform_indices = @transform_6, window_bounds = array<i64: 1, 32>}, {pipeline_mode = #tpu.pipeline_mode<synchronous>, transform_indices = @transform_7, window_bounds = array<i64: 1, 32>}, {pipeline_mode = #tpu.pipeline_mode<synchronous>, transform_indices = @transform_8, window_bounds = array<i64: 1, 32>}, {pipeline_mode = #tpu.pipeline_mode<synchronous>, transform_indices = @transform_9, window_bounds = array<i64: 32, 64>}, {pipeline_mode = #tpu.pipeline_mode<synchronous>, transform_indices = @transform_10, window_bounds = array<i64: 1, 64>}, {pipeline_mode = #tpu.pipeline_mode<synchronous>, transform_indices = @transform_11, window_bounds = array<i64: 64, 32>}, {pipeline_mode = #tpu.pipeline_mode<synchronous>, transform_indices = @transform_12, window_bounds = array<i64: 1, 32>}, {pipeline_mode = #tpu.pipeline_mode<synchronous>, transform_indices = @transform_13, window_bounds = array<i64: 1, 32>}, {pipeline_mode = #tpu.pipeline_mode<synchronous>, transform_indices = @transform_14, window_bounds = array<i64: 1, 32>}, {transform_indices = @transform_15, window_bounds = array<i64: 1, 8, 32>}]} {
    %c0 = arith.constant 0 : index
    %c0_0 = arith.constant 0 : index
    %c0_1 = arith.constant 0 : index
    %0 = vector.load %arg2[%c0, %c0_0, %c0_1] : memref<1x8x32xbf16, #tpu.memory_space<vmem>>, vector<1x8x32xbf16>
    %1 = vector.shape_cast %0 : vector<1x8x32xbf16> to vector<8x32xbf16>
    %c0_2 = arith.constant 0 : index
    %c0_3 = arith.constant 0 : index
    %c0_4 = arith.constant 0 : index
    %2 = vector.load %arg3[%c0_2, %c0_3, %c0_4] : memref<1x8x32xbf16, #tpu.memory_space<vmem>>, vector<1x8x32xbf16>
    %3 = vector.shape_cast %2 : vector<1x8x32xbf16> to vector<8x32xbf16>
    %c0_5 = arith.constant 0 : index
    %c0_6 = arith.constant 0 : index
    %c0_7 = arith.constant 0 : index
    %4 = vector.load %arg4[%c0_5, %c0_6, %c0_7] : memref<1x8x32xbf16, #tpu.memory_space<vmem>>, vector<1x8x32xbf16>
    %5 = vector.shape_cast %4 : vector<1x8x32xbf16> to vector<8x32xbf16>
    %c0_8 = arith.constant 0 : index
    %c0_9 = arith.constant 0 : index
    %6 = vector.load %arg5[%c0_8, %c0_9] : memref<32x32xbf16, #tpu.memory_space<vmem>>, vector<32x32xbf16>
    %cst = arith.constant dense<0.000000e+00> : vector<8x32xf32>
    %7 = tpu.matmul %1, %6, %cst {dimension_numbers = #tpu.dot_dimension_numbers<[1], [0], [0], [1], [0, 0, 1, 1], [], []>} : vector<8x32xbf16>, vector<32x32xbf16>, vector<8x32xf32> -> vector<8x32xf32>
    %c0_10 = arith.constant 0 : index
    %c0_11 = arith.constant 0 : index
    %8 = vector.load %arg6[%c0_10, %c0_11] : memref<1x32xf32, #tpu.memory_space<vmem>>, vector<1x32xf32>
    %9 = vector.broadcast %8 : vector<1x32xf32> to vector<8x32xf32>
    %10 = arith.addf %7, %9 : vector<8x32xf32>
    %cst_12 = arith.constant 0.353553385 : f32
    %11 = vector.broadcast %cst_12 : f32 to vector<8x32xf32>
    %12 = arith.mulf %10, %11 : vector<8x32xf32>
    %13 = arith.truncf %12 : vector<8x32xf32> to vector<8x32xbf16>
    %14 = vector.extract_strided_slice %13 {offsets = [0, 0], sizes = [8, 8], strides = [1, 1]} : vector<8x32xbf16> to vector<8x8xbf16>
    %15 = vector.extract_strided_slice %3 {offsets = [0, 0], sizes = [8, 8], strides = [1, 1]} : vector<8x32xbf16> to vector<8x8xbf16>
    %16 = vector.extract_strided_slice %5 {offsets = [0, 0], sizes = [8, 8], strides = [1, 1]} : vector<8x32xbf16> to vector<8x8xbf16>
    %cst_13 = arith.constant dense<0.000000e+00> : vector<8x8xf32>
    %17 = tpu.matmul %14, %15, %cst_13 {dimension_numbers = #tpu.dot_dimension_numbers<[1], [1], [0], [0], [0, 0, 1, 0], [], []>} : vector<8x8xbf16>, vector<8x8xbf16>, vector<8x8xf32> -> vector<8x8xf32>
    %cst_14 = arith.constant dense<0xFF800000> : vector<8xf32>
    %18 = vector.multi_reduction <maximumf>, %17, %cst_14 [1] : vector<8x8xf32> to vector<8xf32>
    %19 = vector.shape_cast %18 : vector<8xf32> to vector<8x1xf32>
    %20 = vector.broadcast %19 : vector<8x1xf32> to vector<8x8xf32>
    %21 = arith.subf %17, %20 : vector<8x8xf32>
    %22 = math.exp %21 : vector<8x8xf32>
    %cst_15 = arith.constant dense<0.000000e+00> : vector<8xf32>
    %23 = vector.multi_reduction <add>, %22, %cst_15 [1] : vector<8x8xf32> to vector<8xf32>
    %24 = vector.shape_cast %23 : vector<8xf32> to vector<8x1xf32>
    %25 = tpu.reciprocal %24 : vector<8x1xf32> -> vector<8x1xf32>
    %26 = vector.broadcast %25 : vector<8x1xf32> to vector<8x8xf32>
    %27 = arith.mulf %22, %26 : vector<8x8xf32>
    %28 = arith.truncf %27 : vector<8x8xf32> to vector<8x8xbf16>
    %cst_16 = arith.constant dense<0.000000e+00> : vector<8x8xf32>
    %29 = tpu.matmul %28, %16, %cst_16 {dimension_numbers = #tpu.dot_dimension_numbers<[1], [0], [0], [1], [0, 0, 1, 1], [], []>} : vector<8x8xbf16>, vector<8x8xbf16>, vector<8x8xf32> -> vector<8x8xf32>
    %30 = arith.truncf %29 : vector<8x8xf32> to vector<8x8xbf16>
    %c0_17 = arith.constant 0 : index
    %c0_18 = arith.constant 0 : index
    %31 = vector.load %arg18[%c0_17, %c0_18] : memref<8x32xbf16, #tpu.memory_space<vmem>>, vector<8x8xbf16>
    tpu.vector_store %arg18[%c0_17, %c0_18], %30 {strides = array<i32>} : memref<8x32xbf16, #tpu.memory_space<vmem>>, vector<8x8xbf16>,
    %32 = vector.extract_strided_slice %13 {offsets = [0, 8], sizes = [8, 8], strides = [1, 1]} : vector<8x32xbf16> to vector<8x8xbf16>
    %33 = vector.extract_strided_slice %3 {offsets = [0, 8], sizes = [8, 8], strides = [1, 1]} : vector<8x32xbf16> to vector<8x8xbf16>
    %34 = vector.extract_strided_slice %5 {offsets = [0, 8], sizes = [8, 8], strides = [1, 1]} : vector<8x32xbf16> to vector<8x8xbf16>
    %cst_19 = arith.constant dense<0.000000e+00> : vector<8x8xf32>
    %35 = tpu.matmul %32, %33, %cst_19 {dimension_numbers = #tpu.dot_dimension_numbers<[1], [1], [0], [0], [0, 0, 1, 0], [], []>} : vector<8x8xbf16>, vector<8x8xbf16>, vector<8x8xf32> -> vector<8x8xf32>
    %cst_20 = arith.constant dense<0xFF800000> : vector<8xf32>
    %36 = vector.multi_reduction <maximumf>, %35, %cst_20 [1] : vector<8x8xf32> to vector<8xf32>
    %37 = vector.shape_cast %36 : vector<8xf32> to vector<8x1xf32>
    %38 = vector.broadcast %37 : vector<8x1xf32> to vector<8x8xf32>
    %39 = arith.subf %35, %38 : vector<8x8xf32>
    %40 = math.exp %39 : vector<8x8xf32>
    %cst_21 = arith.constant dense<0.000000e+00> : vector<8xf32>
    %41 = vector.multi_reduction <add>, %40, %cst_21 [1] : vector<8x8xf32> to vector<8xf32>
    %42 = vector.shape_cast %41 : vector<8xf32> to vector<8x1xf32>
    %43 = tpu.reciprocal %42 : vector<8x1xf32> -> vector<8x1xf32>
    %44 = vector.broadcast %43 : vector<8x1xf32> to vector<8x8xf32>
    %45 = arith.mulf %40, %44 : vector<8x8xf32>
    %46 = arith.truncf %45 : vector<8x8xf32> to vector<8x8xbf16>
    %cst_22 = arith.constant dense<0.000000e+00> : vector<8x8xf32>
    %47 = tpu.matmul %46, %34, %cst_22 {dimension_numbers = #tpu.dot_dimension_numbers<[1], [0], [0], [1], [0, 0, 1, 1], [], []>} : vector<8x8xbf16>, vector<8x8xbf16>, vector<8x8xf32> -> vector<8x8xf32>
    %48 = arith.truncf %47 : vector<8x8xf32> to vector<8x8xbf16>
    %c0_23 = arith.constant 0 : index
    %c8 = arith.constant 8 : index
    %49 = vector.load %arg18[%c0_23, %c8] : memref<8x32xbf16, #tpu.memory_space<vmem>>, vector<8x8xbf16>
    tpu.vector_store %arg18[%c0_23, %c8], %48 {strides = array<i32>} : memref<8x32xbf16, #tpu.memory_space<vmem>>, vector<8x8xbf16>,
    %50 = vector.extract_strided_slice %13 {offsets = [0, 16], sizes = [8, 8], strides = [1, 1]} : vector<8x32xbf16> to vector<8x8xbf16>
    %51 = vector.extract_strided_slice %3 {offsets = [0, 16], sizes = [8, 8], strides = [1, 1]} : vector<8x32xbf16> to vector<8x8xbf16>
    %52 = vector.extract_strided_slice %5 {offsets = [0, 16], sizes = [8, 8], strides = [1, 1]} : vector<8x32xbf16> to vector<8x8xbf16>
    %cst_24 = arith.constant dense<0.000000e+00> : vector<8x8xf32>
    %53 = tpu.matmul %50, %51, %cst_24 {dimension_numbers = #tpu.dot_dimension_numbers<[1], [1], [0], [0], [0, 0, 1, 0], [], []>} : vector<8x8xbf16>, vector<8x8xbf16>, vector<8x8xf32> -> vector<8x8xf32>
    %cst_25 = arith.constant dense<0xFF800000> : vector<8xf32>
    %54 = vector.multi_reduction <maximumf>, %53, %cst_25 [1] : vector<8x8xf32> to vector<8xf32>
    %55 = vector.shape_cast %54 : vector<8xf32> to vector<8x1xf32>
    %56 = vector.broadcast %55 : vector<8x1xf32> to vector<8x8xf32>
    %57 = arith.subf %53, %56 : vector<8x8xf32>
    %58 = math.exp %57 : vector<8x8xf32>
    %cst_26 = arith.constant dense<0.000000e+00> : vector<8xf32>
    %59 = vector.multi_reduction <add>, %58, %cst_26 [1] : vector<8x8xf32> to vector<8xf32>
    %60 = vector.shape_cast %59 : vector<8xf32> to vector<8x1xf32>
    %61 = tpu.reciprocal %60 : vector<8x1xf32> -> vector<8x1xf32>
    %62 = vector.broadcast %61 : vector<8x1xf32> to vector<8x8xf32>
    %63 = arith.mulf %58, %62 : vector<8x8xf32>
    %64 = arith.truncf %63 : vector<8x8xf32> to vector<8x8xbf16>
    %cst_27 = arith.constant dense<0.000000e+00> : vector<8x8xf32>
    %65 = tpu.matmul %64, %52, %cst_27 {dimension_numbers = #tpu.dot_dimension_numbers<[1], [0], [0], [1], [0, 0, 1, 1], [], []>} : vector<8x8xbf16>, vector<8x8xbf16>, vector<8x8xf32> -> vector<8x8xf32>
    %66 = arith.truncf %65 : vector<8x8xf32> to vector<8x8xbf16>
    %c0_28 = arith.constant 0 : index
    %c16 = arith.constant 16 : index
    %67 = vector.load %arg18[%c0_28, %c16] : memref<8x32xbf16, #tpu.memory_space<vmem>>, vector<8x8xbf16>
    tpu.vector_store %arg18[%c0_28, %c16], %66 {strides = array<i32>} : memref<8x32xbf16, #tpu.memory_space<vmem>>, vector<8x8xbf16>,
    %68 = vector.extract_strided_slice %13 {offsets = [0, 24], sizes = [8, 8], strides = [1, 1]} : vector<8x32xbf16> to vector<8x8xbf16>
    %69 = vector.extract_strided_slice %3 {offsets = [0, 24], sizes = [8, 8], strides = [1, 1]} : vector<8x32xbf16> to vector<8x8xbf16>
    %70 = vector.extract_strided_slice %5 {offsets = [0, 24], sizes = [8, 8], strides = [1, 1]} : vector<8x32xbf16> to vector<8x8xbf16>
    %cst_29 = arith.constant dense<0.000000e+00> : vector<8x8xf32>
    %71 = tpu.matmul %68, %69, %cst_29 {dimension_numbers = #tpu.dot_dimension_numbers<[1], [1], [0], [0], [0, 0, 1, 0], [], []>} : vector<8x8xbf16>, vector<8x8xbf16>, vector<8x8xf32> -> vector<8x8xf32>
    %cst_30 = arith.constant dense<0xFF800000> : vector<8xf32>
    %72 = vector.multi_reduction <maximumf>, %71, %cst_30 [1] : vector<8x8xf32> to vector<8xf32>
    %73 = vector.shape_cast %72 : vector<8xf32> to vector<8x1xf32>
    %74 = vector.broadcast %73 : vector<8x1xf32> to vector<8x8xf32>
    %75 = arith.subf %71, %74 : vector<8x8xf32>
    %76 = math.exp %75 : vector<8x8xf32>
    %cst_31 = arith.constant dense<0.000000e+00> : vector<8xf32>
    %77 = vector.multi_reduction <add>, %76, %cst_31 [1] : vector<8x8xf32> to vector<8xf32>
    %78 = vector.shape_cast %77 : vector<8xf32> to vector<8x1xf32>
    %79 = tpu.reciprocal %78 : vector<8x1xf32> -> vector<8x1xf32>
    %80 = vector.broadcast %79 : vector<8x1xf32> to vector<8x8xf32>
    %81 = arith.mulf %76, %80 : vector<8x8xf32>
    %82 = arith.truncf %81 : vector<8x8xf32> to vector<8x8xbf16>
    %cst_32 = arith.constant dense<0.000000e+00> : vector<8x8xf32>
    %83 = tpu.matmul %82, %70, %cst_32 {dimension_numbers = #tpu.dot_dimension_numbers<[1], [0], [0], [1], [0, 0, 1, 1], [], []>} : vector<8x8xbf16>, vector<8x8xbf16>, vector<8x8xf32> -> vector<8x8xf32>
    %84 = arith.truncf %83 : vector<8x8xf32> to vector<8x8xbf16>
    %c0_33 = arith.constant 0 : index
    %c24 = arith.constant 24 : index
    %85 = vector.load %arg18[%c0_33, %c24] : memref<8x32xbf16, #tpu.memory_space<vmem>>, vector<8x8xbf16>
    tpu.vector_store %arg18[%c0_33, %c24], %84 {strides = array<i32>} : memref<8x32xbf16, #tpu.memory_space<vmem>>, vector<8x8xbf16>,
    %c0_34 = arith.constant 0 : index
    %c0_35 = arith.constant 0 : index
    %86 = vector.load %arg18[%c0_34, %c0_35] : memref<8x32xbf16, #tpu.memory_space<vmem>>, vector<8x32xbf16>
    %c0_36 = arith.constant 0 : index
    %c0_37 = arith.constant 0 : index
    %87 = vector.load %arg7[%c0_36, %c0_37] : memref<32x32xbf16, #tpu.memory_space<vmem>>, vector<32x32xbf16>
    %cst_38 = arith.constant dense<0.000000e+00> : vector<8x32xf32>
    %88 = tpu.matmul %86, %87, %cst_38 {dimension_numbers = #tpu.dot_dimension_numbers<[1], [0], [0], [1], [0, 0, 1, 1], [], []>} : vector<8x32xbf16>, vector<32x32xbf16>, vector<8x32xf32> -> vector<8x32xf32>
    %c0_39 = arith.constant 0 : index
    %c0_40 = arith.constant 0 : index
    %89 = vector.load %arg8[%c0_39, %c0_40] : memref<1x32xf32, #tpu.memory_space<vmem>>, vector<1x32xf32>
    %90 = vector.broadcast %89 : vector<1x32xf32> to vector<8x32xf32>
    %91 = arith.addf %88, %90 : vector<8x32xf32>
    %c0_41 = arith.constant 0 : index
    %c0_42 = arith.constant 0 : index
    %92 = vector.load %arg9[%c0_41, %c0_42] : memref<1x32xf32, #tpu.memory_space<vmem>>, vector<1x32xf32>
    %c0_43 = arith.constant 0 : index
    %c0_44 = arith.constant 0 : index
    %93 = vector.load %arg10[%c0_43, %c0_44] : memref<1x32xf32, #tpu.memory_space<vmem>>, vector<1x32xf32>
    %cst_45 = arith.constant dense<0.000000e+00> : vector<8xf32>
    %94 = vector.multi_reduction <add>, %91, %cst_45 [1] : vector<8x32xf32> to vector<8xf32>
    %95 = vector.shape_cast %94 : vector<8xf32> to vector<8x1xf32>
    %cst_46 = arith.constant 3.200000e+01 : f32
    %96 = vector.broadcast %cst_46 : f32 to vector<8x1xf32>
    %97 = arith.divf %95, %96 : vector<8x1xf32>
    %98 = vector.broadcast %97 : vector<8x1xf32> to vector<8x32xf32>
    %99 = arith.subf %91, %98 : vector<8x32xf32>
    %100 = arith.mulf %99, %99 : vector<8x32xf32>
    %cst_47 = arith.constant dense<0.000000e+00> : vector<8xf32>
    %101 = vector.multi_reduction <add>, %100, %cst_47 [1] : vector<8x32xf32> to vector<8xf32>
    %102 = vector.shape_cast %101 : vector<8xf32> to vector<8x1xf32>
    %cst_48 = arith.constant 3.200000e+01 : f32
    %103 = vector.broadcast %cst_48 : f32 to vector<8x1xf32>
    %104 = arith.divf %102, %103 : vector<8x1xf32>
    %cst_49 = arith.constant 9.99999974E-6 : f32
    %105 = vector.broadcast %cst_49 : f32 to vector<8x1xf32>
    %106 = arith.addf %104, %105 : vector<8x1xf32>
    %107 = math.rsqrt %106 : vector<8x1xf32>
    %108 = vector.broadcast %97 : vector<8x1xf32> to vector<8x32xf32>
    %109 = arith.subf %91, %108 : vector<8x32xf32>
    %110 = vector.broadcast %107 : vector<8x1xf32> to vector<8x32xf32>
    %111 = arith.mulf %109, %110 : vector<8x32xf32>
    %112 = vector.broadcast %92 : vector<1x32xf32> to vector<8x32xf32>
    %113 = arith.mulf %111, %112 : vector<8x32xf32>
    %114 = vector.broadcast %93 : vector<1x32xf32> to vector<8x32xf32>
    %115 = arith.addf %113, %114 : vector<8x32xf32>
    %116 = arith.truncf %115 : vector<8x32xf32> to vector<8x32xbf16>
    %c0_50 = arith.constant 0 : index
    %c0_51 = arith.constant 0 : index
    %117 = vector.load %arg11[%c0_50, %c0_51] : memref<32x64xbf16, #tpu.memory_space<vmem>>, vector<32x64xbf16>
    %cst_52 = arith.constant dense<0.000000e+00> : vector<8x64xf32>
    %118 = tpu.matmul %116, %117, %cst_52 {dimension_numbers = #tpu.dot_dimension_numbers<[1], [0], [0], [1], [0, 0, 1, 1], [], []>} : vector<8x32xbf16>, vector<32x64xbf16>, vector<8x64xf32> -> vector<8x64xf32>
    %c0_53 = arith.constant 0 : index
    %c0_54 = arith.constant 0 : index
    %119 = vector.load %arg12[%c0_53, %c0_54] : memref<1x64xf32, #tpu.memory_space<vmem>>, vector<1x64xf32>
    %120 = vector.broadcast %119 : vector<1x64xf32> to vector<8x64xf32>
    %121 = arith.addf %118, %120 : vector<8x64xf32>
    %cst_55 = arith.constant 0.000000e+00 : f32
    %122 = vector.broadcast %cst_55 : f32 to vector<8x64xf32>
    %123 = arith.maximumf %121, %122 : vector<8x64xf32>
    %124 = arith.truncf %123 : vector<8x64xf32> to vector<8x64xbf16>
    %c0_56 = arith.constant 0 : index
    %c0_57 = arith.constant 0 : index
    %125 = vector.load %arg13[%c0_56, %c0_57] : memref<64x32xbf16, #tpu.memory_space<vmem>>, vector<64x32xbf16>
    %cst_58 = arith.constant dense<0.000000e+00> : vector<8x32xf32>
    %126 = tpu.matmul %124, %125, %cst_58 {dimension_numbers = #tpu.dot_dimension_numbers<[1], [0], [0], [1], [0, 0, 1, 1], [], []>} : vector<8x64xbf16>, vector<64x32xbf16>, vector<8x32xf32> -> vector<8x32xf32>
    %c0_59 = arith.constant 0 : index
    %c0_60 = arith.constant 0 : index
    %127 = vector.load %arg14[%c0_59, %c0_60] : memref<1x32xf32, #tpu.memory_space<vmem>>, vector<1x32xf32>
    %128 = vector.broadcast %127 : vector<1x32xf32> to vector<8x32xf32>
    %129 = arith.addf %126, %128 : vector<8x32xf32>
    %130 = arith.addf %129, %115 : vector<8x32xf32>
    %c0_61 = arith.constant 0 : index
    %c0_62 = arith.constant 0 : index
    %131 = vector.load %arg15[%c0_61, %c0_62] : memref<1x32xf32, #tpu.memory_space<vmem>>, vector<1x32xf32>
    %c0_63 = arith.constant 0 : index
    %c0_64 = arith.constant 0 : index
    %132 = vector.load %arg16[%c0_63, %c0_64] : memref<1x32xf32, #tpu.memory_space<vmem>>, vector<1x32xf32>
    %cst_65 = arith.constant dense<0.000000e+00> : vector<8xf32>
    %133 = vector.multi_reduction <add>, %130, %cst_65 [1] : vector<8x32xf32> to vector<8xf32>
    %134 = vector.shape_cast %133 : vector<8xf32> to vector<8x1xf32>
    %cst_66 = arith.constant 3.200000e+01 : f32
    %135 = vector.broadcast %cst_66 : f32 to vector<8x1xf32>
    %136 = arith.divf %134, %135 : vector<8x1xf32>
    %137 = vector.broadcast %136 : vector<8x1xf32> to vector<8x32xf32>
    %138 = arith.subf %130, %137 : vector<8x32xf32>
    %139 = arith.mulf %138, %138 : vector<8x32xf32>
    %cst_67 = arith.constant dense<0.000000e+00> : vector<8xf32>
    %140 = vector.multi_reduction <add>, %139, %cst_67 [1] : vector<8x32xf32> to vector<8xf32>
    %141 = vector.shape_cast %140 : vector<8xf32> to vector<8x1xf32>
    %cst_68 = arith.constant 3.200000e+01 : f32
    %142 = vector.broadcast %cst_68 : f32 to vector<8x1xf32>
    %143 = arith.divf %141, %142 : vector<8x1xf32>
    %cst_69 = arith.constant 9.99999974E-6 : f32
    %144 = vector.broadcast %cst_69 : f32 to vector<8x1xf32>
    %145 = arith.addf %143, %144 : vector<8x1xf32>
    %146 = math.rsqrt %145 : vector<8x1xf32>
    %147 = vector.broadcast %136 : vector<8x1xf32> to vector<8x32xf32>
    %148 = arith.subf %130, %147 : vector<8x32xf32>
    %149 = vector.broadcast %146 : vector<8x1xf32> to vector<8x32xf32>
    %150 = arith.mulf %148, %149 : vector<8x32xf32>
    %151 = vector.broadcast %131 : vector<1x32xf32> to vector<8x32xf32>
    %152 = arith.mulf %150, %151 : vector<8x32xf32>
    %153 = vector.broadcast %132 : vector<1x32xf32> to vector<8x32xf32>
    %154 = arith.addf %152, %153 : vector<8x32xf32>
    %c0_70 = arith.constant 0 : index
    %c0_71 = arith.constant 0 : index
    %c0_72 = arith.constant 0 : index
    %155 = vector.load %arg17[%c0_70, %c0_71, %c0_72] : memref<1x8x32xf32, #tpu.memory_space<vmem>>, vector<1x8x32xf32>
    %156 = vector.shape_cast %155 : vector<1x8x32xf32> to vector<8x32xf32>
    %157 = vector.shape_cast %154 : vector<8x32xf32> to vector<1x8x32xf32>
    tpu.vector_store %arg17[%c0_70, %c0_71, %c0_72], %157 {strides = array<i32>} : memref<1x8x32xf32, #tpu.memory_space<vmem>>, vector<1x8x32xf32>,
    return
  }
  func.func @transform_0(%arg0: i32, %arg1: i32) -> (i32, i32, i32) {
    %c0_i32 = arith.constant 0 : i32
    %c0_i32_0 = arith.constant 0 : i32
    return %arg0, %arg1, %c0_i32 : i32, i32, i32
  }
  func.func @transform_1(%arg0: i32, %arg1: i32) -> (i32, i32, i32) {
    %c0_i32 = arith.constant 0 : i32
    %c0_i32_0 = arith.constant 0 : i32
    %c0_i32_1 = arith.constant 0 : i32
    return %arg0, %c0_i32, %c0_i32_0 : i32, i32, i32
  }
  func.func @transform_2(%arg0: i32, %arg1: i32) -> (i32, i32, i32) {
    %c0_i32 = arith.constant 0 : i32
    %c0_i32_0 = arith.constant 0 : i32
    %c0_i32_1 = arith.constant 0 : i32
    return %arg0, %c0_i32, %c0_i32_0 : i32, i32, i32
  }
  func.func @transform_3(%arg0: i32, %arg1: i32) -> (i32, i32) {
    %c0_i32 = arith.constant 0 : i32
    %c0_i32_0 = arith.constant 0 : i32
    %c0_i32_1 = arith.constant 0 : i32
    return %c0_i32, %c0_i32_0 : i32, i32
  }
  func.func @transform_4(%arg0: i32, %arg1: i32) -> (i32, i32) {
    %c0_i32 = arith.constant 0 : i32
    %c0_i32_0 = arith.constant 0 : i32
    %c0_i32_1 = arith.constant 0 : i32
    return %c0_i32, %c0_i32_0 : i32, i32
  }
  func.func @transform_5(%arg0: i32, %arg1: i32) -> (i32, i32) {
    %c0_i32 = arith.constant 0 : i32
    %c0_i32_0 = arith.constant 0 : i32
    %c0_i32_1 = arith.constant 0 : i32
    return %c0_i32, %c0_i32_0 : i32, i32
  }
  func.func @transform_6(%arg0: i32, %arg1: i32) -> (i32, i32) {
    %c0_i32 = arith.constant 0 : i32
    %c0_i32_0 = arith.constant 0 : i32
    %c0_i32_1 = arith.constant 0 : i32
    return %c0_i32, %c0_i32_0 : i32, i32
  }
  func.func @transform_7(%arg0: i32, %arg1: i32) -> (i32, i32) {
    %c0_i32 = arith.constant 0 : i32
    %c0_i32_0 = arith.constant 0 : i32
    %c0_i32_1 = arith.constant 0 : i32
    return %c0_i32, %c0_i32_0 : i32, i32
  }
  func.func @transform_8(%arg0: i32, %arg1: i32) -> (i32, i32) {
    %c0_i32 = arith.constant 0 : i32
    %c0_i32_0 = arith.constant 0 : i32
    %c0_i32_1 = arith.constant 0 : i32
    return %c0_i32, %c0_i32_0 : i32, i32
  }
  func.func @transform_9(%arg0: i32, %arg1: i32) -> (i32, i32) {
    %c0_i32 = arith.constant 0 : i32
    %c0_i32_0 = arith.constant 0 : i32
    %c0_i32_1 = arith.constant 0 : i32
    return %c0_i32, %c0_i32_0 : i32, i32
  }
  func.func @transform_10(%arg0: i32, %arg1: i32) -> (i32, i32) {
    %c0_i32 = arith.constant 0 : i32
    %c0_i32_0 = arith.constant 0 : i32
    %c0_i32_1 = arith.constant 0 : i32
    return %c0_i32, %c0_i32_0 : i32, i32
  }
  func.func @transform_11(%arg0: i32, %arg1: i32) -> (i32, i32) {
    %c0_i32 = arith.constant 0 : i32
    %c0_i32_0 = arith.constant 0 : i32
    %c0_i32_1 = arith.constant 0 : i32
    return %c0_i32, %c0_i32_0 : i32, i32
  }
  func.func @transform_12(%arg0: i32, %arg1: i32) -> (i32, i32) {
    %c0_i32 = arith.constant 0 : i32
    %c0_i32_0 = arith.constant 0 : i32
    %c0_i32_1 = arith.constant 0 : i32
    return %c0_i32, %c0_i32_0 : i32, i32
  }
  func.func @transform_13(%arg0: i32, %arg1: i32) -> (i32, i32) {
    %c0_i32 = arith.constant 0 : i32
    %c0_i32_0 = arith.constant 0 : i32
    %c0_i32_1 = arith.constant 0 : i32
    return %c0_i32, %c0_i32_0 : i32, i32
  }
  func.func @transform_14(%arg0: i32, %arg1: i32) -> (i32, i32) {
    %c0_i32 = arith.constant 0 : i32
    %c0_i32_0 = arith.constant 0 : i32
    %c0_i32_1 = arith.constant 0 : i32
    return %c0_i32, %c0_i32_0 : i32, i32
  }
  func.func @transform_15(%arg0: i32, %arg1: i32) -> (i32, i32, i32) {
    %c0_i32 = arith.constant 0 : i32
    %c0_i32_0 = arith.constant 0 : i32
    return %arg0, %arg1, %c0_i32 : i32, i32, i32
  }
}

module attributes {stable_mosaic.version = 11 : i64} {
  func.func @encoder_layer_kernel(%arg0: i32, %arg1: i32, %arg2: memref<1x8x32xbf16, #tpu.memory_space<vmem>>, %arg3: memref<1x8x32xbf16, #tpu.memory_space<vmem>>, %arg4: memref<1x8x32xbf16, #tpu.memory_space<vmem>>, %arg5: memref<32x32xbf16, #tpu.memory_space<vmem>>, %arg6: memref<1x32xf32, #tpu.memory_space<vmem>>, %arg7: memref<32x32xbf16, #tpu.memory_space<vmem>>, %arg8: memref<1x32xf32, #tpu.memory_space<vmem>>, %arg9: memref<1x32xf32, #tpu.memory_space<vmem>>, %arg10: memref<1x32xf32, #tpu.memory_space<vmem>>, %arg11: memref<32x64xbf16, #tpu.memory_space<vmem>>, %arg12: memref<1x64xf32, #tpu.memory_space<vmem>>, %arg13: memref<64x32xbf16, #tpu.memory_space<vmem>>, %arg14: memref<1x32xf32, #tpu.memory_space<vmem>>, %arg15: memref<1x32xf32, #tpu.memory_space<vmem>>, %arg16: memref<1x32xf32, #tpu.memory_space<vmem>>, %arg17: memref<1x8x32xf32, #tpu.memory_space<vmem>>, %arg18: memref<8x32xbf16, #tpu.memory_space<vmem>>) attributes {dimension_semantics = [#tpu.dimension_semantics<parallel>, #tpu.dimension_semantics<parallel>], iteration_bounds = array<i64: 2, 1>, scalar_prefetch = 0 : i64, scratch_operands = 1 : i64, tpu.core_type = #tpu.core_type<tc>, window_params = [{transform_indices = @transform_0, window_bounds = array<i64: 1, 8, 32>}, {transform_indices = @transform_1, window_bounds = array<i64: 1, 8, 32>}, {transform_indices = @transform_2, window_bounds = array<i64: 1, 8, 32>}, {pipeline_mode = #tpu.pipeline_mode<synchronous>, transform_indices = @transform_3, window_bounds = array<i64: 32, 32>}, {pipeline_mode = #tpu.pipeline_mode<synchronous>, transform_indices = @transform_4, window_bounds = array<i64: 1, 32>}, {pipeline_mode = #tpu.pipeline_mode<synchronous>, transform_indices = @transform_5, window_bounds = array<i64: 32, 32>}, {pipeline_mode = #tpu.pipeline_mode<synchronous>, transform_indices = @transform_6, window_bounds = array<i64: 1, 32>}, {pipeline_mode = #tpu.pipeline_mode<synchronous>, transform_indices = @transform_7, window_bounds = array<i64: 1, 32>}, {pipeline_mode = #tpu.pipeline_mode<synchronous>, transform_indices = @transform_8, window_bounds = array<i64: 1, 32>}, {pipeline_mode = #tpu.pipeline_mode<synchronous>, transform_indices = @transform_9, window_bounds = array<i64: 32, 64>}, {pipeline_mode = #tpu.pipeline_mode<synchronous>, transform_indices = @transform_10, window_bounds = array<i64: 1, 64>}, {pipeline_mode = #tpu.pipeline_mode<synchronous>, transform_indices = @transform_11, window_bounds = array<i64: 64, 32>}, {pipeline_mode = #tpu.pipeline_mode<synchronous>, transform_indices = @transform_12, window_bounds = array<i64: 1, 32>}, {pipeline_mode = #tpu.pipeline_mode<synchronous>, transform_indices = @transform_13, window_bounds = array<i64: 1, 32>}, {pipeline_mode = #tpu.pipeline_mode<synchronous>, transform_indices = @transform_14, window_bounds = array<i64: 1, 32>}, {transform_indices = @transform_15, window_bounds = array<i64: 1, 8, 32>}]} {
    %c0 = arith.constant 0 : index
    %c0_0 = arith.constant 0 : index
    %c0_1 = arith.constant 0 : index
    %0 = vector.load %arg2[%c0, %c0_0, %c0_1] : memref<1x8x32xbf16, #tpu.memory_space<vmem>>, vector<1x8x32xbf16>
    %1 = vector.shape_cast %0 : vector<1x8x32xbf16> to vector<8x32xbf16>
    %c0_2 = arith.constant 0 : index
    %c0_3 = arith.constant 0 : index
    %c0_4 = arith.constant 0 : index
    %2 = vector.load %arg3[%c0_2, %c0_3, %c0_4] : memref<1x8x32xbf16, #tpu.memory_space<vmem>>, vector<1x8x32xbf16>
    %3 = vector.shape_cast %2 : vector<1x8x32xbf16> to vector<8x32xbf16>
    %c0_5 = arith.constant 0 : index
    %c0_6 = arith.constant 0 : index
    %c0_7 = arith.constant 0 : index
    %4 = vector.load %arg4[%c0_5, %c0_6, %c0_7] : memref<1x8x32xbf16, #tpu.memory_space<vmem>>, vector<1x8x32xbf16>
    %5 = vector.shape_cast %4 : vector<1x8x32xbf16> to vector<8x32xbf16>
    %c0_8 = arith.constant 0 : index
    %c0_9 = arith.constant 0 : index
    %6 = vector.load %arg5[%c0_8, %c0_9] : memref<32x32xbf16, #tpu.memory_space<vmem>>, vector<32x32xbf16>
    %cst = arith.constant dense<0.000000e+00> : vector<8x32xf32>
    %7 = tpu.matmul %1, %6, %cst {dimension_numbers = #tpu.dot_dimension_numbers<[1], [0], [0], [1], [0, 0, 1, 1], [], []>} : vector<8x32xbf16>, vector<32x32xbf16>, vector<8x32xf32> -> vector<8x32xf32>
    %c0_10 = arith.constant 0 : index
    %c0_11 = arith.constant 0 : index
    %8 = vector.load %arg6[%c0_10, %c0_11] : memref<1x32xf32, #tpu.memory_space<vmem>>, vector<1x32xf32>
    %9 = vector.broadcast %8 : vector<1x32xf32> to vector<8x32xf32>
    %10 = arith.addf %7, %9 : vector<8x32xf32>
    %cst_12 = arith.constant 0.353553385 : f32
    %11 = vector.broadcast %cst_12 : f32 to vector<8x32xf32>
    %12 = arith.mulf %10, %11 : vector<8x32xf32>
    %13 = arith.truncf %12 : vector<8x32xf32> to vector<8x32xbf16>
    %14 = vector.extract_strided_slice %13 {offsets = [0, 0], sizes = [8, 8], strides = [1, 1]} : vector<8x32xbf16> to vector<8x8xbf16>
    %15 = vector.extract_strided_slice %3 {offsets = [0, 0], sizes = [8, 8], strides = [1, 1]} : vector<8x32xbf16> to vector<8x8xbf16>
    %16 = vector.extract_strided_slice %5 {offsets = [0, 0], sizes = [8, 8], strides = [1, 1]} : vector<8x32xbf16> to vector<8x8xbf16>
    %cst_13 = arith.constant dense<0.000000e+00> : vector<8x8xf32>
    %17 = tpu.matmul %14, %15, %cst_13 {dimension_numbers = #tpu.dot_dimension_numbers<[1], [1], [0], [0], [0, 0, 1, 0], [], []>} : vector<8x8xbf16>, vector<8x8xbf16>, vector<8x8xf32> -> vector<8x8xf32>
    %cst_14 = arith.constant dense<0xFF800000> : vector<8xf32>
    %18 = vector.multi_reduction <maximumf>, %17, %cst_14 [1] : vector<8x8xf32> to vector<8xf32>
    %19 = vector.shape_cast %18 : vector<8xf32> to vector<8x1xf32>
    %20 = vector.broadcast %19 : vector<8x1xf32> to vector<8x8xf32>
    %21 = arith.subf %17, %20 : vector<8x8xf32>
    %22 = math.exp %21 : vector<8x8xf32>
    %cst_15 = arith.constant dense<0.000000e+00> : vector<8xf32>
    %23 = vector.multi_reduction <add>, %22, %cst_15 [1] : vector<8x8xf32> to vector<8xf32>
    %24 = vector.shape_cast %23 : vector<8xf32> to vector<8x1xf32>
    %25 = tpu.reciprocal %24 : vector<8x1xf32> -> vector<8x1xf32>
    %26 = vector.broadcast %25 : vector<8x1xf32> to vector<8x8xf32>
    %27 = arith.mulf %22, %26 : vector<8x8xf32>
    %28 = arith.truncf %27 : vector<8x8xf32> to vector<8x8xbf16>
    %cst_16 = arith.constant dense<0.000000e+00> : vector<8x8xf32>
    %29 = tpu.matmul %28, %16, %cst_16 {dimension_numbers = #tpu.dot_dimension_numbers<[1], [0], [0], [1], [0, 0, 1, 1], [], []>} : vector<8x8xbf16>, vector<8x8xbf16>, vector<8x8xf32> -> vector<8x8xf32>
    %30 = arith.truncf %29 : vector<8x8xf32> to vector<8x8xbf16>
    %c0_17 = arith.constant 0 : index
    %c0_18 = arith.constant 0 : index
    %31 = vector.load %arg18[%c0_17, %c0_18] : memref<8x32xbf16, #tpu.memory_space<vmem>>, vector<8x8xbf16>
    tpu.vector_store %arg18[%c0_17, %c0_18], %30 {strides = array<i32>} : memref<8x32xbf16, #tpu.memory_space<vmem>>, vector<8x8xbf16>,
    %32 = vector.extract_strided_slice %13 {offsets = [0, 8], sizes = [8, 8], strides = [1, 1]} : vector<8x32xbf16> to vector<8x8xbf16>
    %33 = vector.extract_strided_slice %3 {offsets = [0, 8], sizes = [8, 8], strides = [1, 1]} : vector<8x32xbf16> to vector<8x8xbf16>
    %34 = vector.extract_strided_slice %5 {offsets = [0, 8], sizes = [8, 8], strides = [1, 1]} : vector<8x32xbf16> to vector<8x8xbf16>
    %cst_19 = arith.constant dense<0.000000e+00> : vector<8x8xf32>
    %35 = tpu.matmul %32, %33, %cst_19 {dimension_numbers = #tpu.dot_dimension_numbers<[1], [1], [0], [0], [0, 0, 1, 0], [], []>} : vector<8x8xbf16>, vector<8x8xbf16>, vector<8x8xf32> -> vector<8x8xf32>
    %cst_20 = arith.constant dense<0xFF800000> : vector<8xf32>
    %36 = vector.multi_reduction <maximumf>, %35, %cst_20 [1] : vector<8x8xf32> to vector<8xf32>
    %37 = vector.shape_cast %36 : vector<8xf32> to vector<8x1xf32>
    %38 = vector.broadcast %37 : vector<8x1xf32> to vector<8x8xf32>
    %39 = arith.subf %35, %38 : vector<8x8xf32>
    %40 = math.exp %39 : vector<8x8xf32>
    %cst_21 = arith.constant dense<0.000000e+00> : vector<8xf32>
    %41 = vector.multi_reduction <add>, %40, %cst_21 [1] : vector<8x8xf32> to vector<8xf32>
    %42 = vector.shape_cast %41 : vector<8xf32> to vector<8x1xf32>
    %43 = tpu.reciprocal %42 : vector<8x1xf32> -> vector<8x1xf32>
    %44 = vector.broadcast %43 : vector<8x1xf32> to vector<8x8xf32>
    %45 = arith.mulf %40, %44 : vector<8x8xf32>
    %46 = arith.truncf %45 : vector<8x8xf32> to vector<8x8xbf16>
    %cst_22 = arith.constant dense<0.000000e+00> : vector<8x8xf32>
    %47 = tpu.matmul %46, %34, %cst_22 {dimension_numbers = #tpu.dot_dimension_numbers<[1], [0], [0], [1], [0, 0, 1, 1], [], []>} : vector<8x8xbf16>, vector<8x8xbf16>, vector<8x8xf32> -> vector<8x8xf32>
    %48 = arith.truncf %47 : vector<8x8xf32> to vector<8x8xbf16>
    %c0_23 = arith.constant 0 : index
    %c8 = arith.constant 8 : index
    %49 = vector.load %arg18[%c0_23, %c8] : memref<8x32xbf16, #tpu.memory_space<vmem>>, vector<8x8xbf16>
    tpu.vector_store %arg18[%c0_23, %c8], %48 {strides = array<i32>} : memref<8x32xbf16, #tpu.memory_space<vmem>>, vector<8x8xbf16>,
    %50 = vector.extract_strided_slice %13 {offsets = [0, 16], sizes = [8, 8], strides = [1, 1]} : vector<8x32xbf16> to vector<8x8xbf16>
    %51 = vector.extract_strided_slice %3 {offsets = [0, 16], sizes = [8, 8], strides = [1, 1]} : vector<8x32xbf16> to vector<8x8xbf16>
    %52 = vector.extract_strided_slice %5 {offsets = [0, 16], sizes = [8, 8], strides = [1, 1]} : vector<8x32xbf16> to vector<8x8xbf16>
    %cst_24 = arith.constant dense<0.000000e+00> : vector<8x8xf32>
    %53 = tpu.matmul %50, %51, %cst_24 {dimension_numbers = #tpu.dot_dimension_numbers<[1], [1], [0], [0], [0, 0, 1, 0], [], []>} : vector<8x8xbf16>, vector<8x8xbf16>, vector<8x8xf32> -> vector<8x8xf32>
    %cst_25 = arith.constant dense<0xFF800000> : vector<8xf32>
    %54 = vector.multi_reduction <maximumf>, %53, %cst_25 [1] : vector<8x8xf32> to vector<8xf32>
    %55 = vector.shape_cast %54 : vector<8xf32> to vector<8x1xf32>
    %56 = vector.broadcast %55 : vector<8x1xf32> to vector<8x8xf32>
    %57 = arith.subf %53, %56 : vector<8x8xf32>
    %58 = math.exp %57 : vector<8x8xf32>
    %cst_26 = arith.constant dense<0.000000e+00> : vector<8xf32>
    %59 = vector.multi_reduction <add>, %58, %cst_26 [1] : vector<8x8xf32> to vector<8xf32>
    %60 = vector.shape_cast %59 : vector<8xf32> to vector<8x1xf32>
    %61 = tpu.reciprocal %60 : vector<8x1xf32> -> vector<8x1xf32>
    %62 = vector.broadcast %61 : vector<8x1xf32> to vector<8x8xf32>
    %63 = arith.mulf %58, %62 : vector<8x8xf32>
    %64 = arith.truncf %63 : vector<8x8xf32> to vector<8x8xbf16>
    %cst_27 = arith.constant dense<0.000000e+00> : vector<8x8xf32>
    %65 = tpu.matmul %64, %52, %cst_27 {dimension_numbers = #tpu.dot_dimension_numbers<[1], [0], [0], [1], [0, 0, 1, 1], [], []>} : vector<8x8xbf16>, vector<8x8xbf16>, vector<8x8xf32> -> vector<8x8xf32>
    %66 = arith.truncf %65 : vector<8x8xf32> to vector<8x8xbf16>
    %c0_28 = arith.constant 0 : index
    %c16 = arith.constant 16 : index
    %67 = vector.load %arg18[%c0_28, %c16] : memref<8x32xbf16, #tpu.memory_space<vmem>>, vector<8x8xbf16>
    tpu.vector_store %arg18[%c0_28, %c16], %66 {strides = array<i32>} : memref<8x32xbf16, #tpu.memory_space<vmem>>, vector<8x8xbf16>,
    %68 = vector.extract_strided_slice %13 {offsets = [0, 24], sizes = [8, 8], strides = [1, 1]} : vector<8x32xbf16> to vector<8x8xbf16>
    %69 = vector.extract_strided_slice %3 {offsets = [0, 24], sizes = [8, 8], strides = [1, 1]} : vector<8x32xbf16> to vector<8x8xbf16>
    %70 = vector.extract_strided_slice %5 {offsets = [0, 24], sizes = [8, 8], strides = [1, 1]} : vector<8x32xbf16> to vector<8x8xbf16>
    %cst_29 = arith.constant dense<0.000000e+00> : vector<8x8xf32>
    %71 = tpu.matmul %68, %69, %cst_29 {dimension_numbers = #tpu.dot_dimension_numbers<[1], [1], [0], [0], [0, 0, 1, 0], [], []>} : vector<8x8xbf16>, vector<8x8xbf16>, vector<8x8xf32> -> vector<8x8xf32>
    %cst_30 = arith.constant dense<0xFF800000> : vector<8xf32>
    %72 = vector.multi_reduction <maximumf>, %71, %cst_30 [1] : vector<8x8xf32> to vector<8xf32>
    %73 = vector.shape_cast %72 : vector<8xf32> to vector<8x1xf32>
    %74 = vector.broadcast %73 : vector<8x1xf32> to vector<8x8xf32>
    %75 = arith.subf %71, %74 : vector<8x8xf32>
    %76 = math.exp %75 : vector<8x8xf32>
    %cst_31 = arith.constant dense<0.000000e+00> : vector<8xf32>
    %77 = vector.multi_reduction <add>, %76, %cst_31 [1] : vector<8x8xf32> to vector<8xf32>
    %78 = vector.shape_cast %77 : vector<8xf32> to vector<8x1xf32>
    %79 = tpu.reciprocal %78 : vector<8x1xf32> -> vector<8x1xf32>
    %80 = vector.broadcast %79 : vector<8x1xf32> to vector<8x8xf32>
    %81 = arith.mulf %76, %80 : vector<8x8xf32>
    %82 = arith.truncf %81 : vector<8x8xf32> to vector<8x8xbf16>
    %cst_32 = arith.constant dense<0.000000e+00> : vector<8x8xf32>
    %83 = tpu.matmul %82, %70, %cst_32 {dimension_numbers = #tpu.dot_dimension_numbers<[1], [0], [0], [1], [0, 0, 1, 1], [], []>} : vector<8x8xbf16>, vector<8x8xbf16>, vector<8x8xf32> -> vector<8x8xf32>
    %84 = arith.truncf %83 : vector<8x8xf32> to vector<8x8xbf16>
    %c0_33 = arith.constant 0 : index
    %c24 = arith.constant 24 : index
    %85 = vector.load %arg18[%c0_33, %c24] : memref<8x32xbf16, #tpu.memory_space<vmem>>, vector<8x8xbf16>
    tpu.vector_store %arg18[%c0_33, %c24], %84 {strides = array<i32>} : memref<8x32xbf16, #tpu.memory_space<vmem>>, vector<8x8xbf16>,
    %c0_34 = arith.constant 0 : index
    %c0_35 = arith.constant 0 : index
    %86 = vector.load %arg18[%c0_34, %c0_35] : memref<8x32xbf16, #tpu.memory_space<vmem>>, vector<8x32xbf16>
    %c0_36 = arith.constant 0 : index
    %c0_37 = arith.constant 0 : index
    %87 = vector.load %arg7[%c0_36, %c0_37] : memref<32x32xbf16, #tpu.memory_space<vmem>>, vector<32x32xbf16>
    %cst_38 = arith.constant dense<0.000000e+00> : vector<8x32xf32>
    %88 = tpu.matmul %86, %87, %cst_38 {dimension_numbers = #tpu.dot_dimension_numbers<[1], [0], [0], [1], [0, 0, 1, 1], [], []>} : vector<8x32xbf16>, vector<32x32xbf16>, vector<8x32xf32> -> vector<8x32xf32>
    %c0_39 = arith.constant 0 : index
    %c0_40 = arith.constant 0 : index
    %89 = vector.load %arg8[%c0_39, %c0_40] : memref<1x32xf32, #tpu.memory_space<vmem>>, vector<1x32xf32>
    %90 = vector.broadcast %89 : vector<1x32xf32> to vector<8x32xf32>
    %91 = arith.addf %88, %90 : vector<8x32xf32>
    %c0_41 = arith.constant 0 : index
    %c0_42 = arith.constant 0 : index
    %92 = vector.load %arg9[%c0_41, %c0_42] : memref<1x32xf32, #tpu.memory_space<vmem>>, vector<1x32xf32>
    %c0_43 = arith.constant 0 : index
    %c0_44 = arith.constant 0 : index
    %93 = vector.load %arg10[%c0_43, %c0_44] : memref<1x32xf32, #tpu.memory_space<vmem>>, vector<1x32xf32>
    %cst_45 = arith.constant dense<0.000000e+00> : vector<8xf32>
    %94 = vector.multi_reduction <add>, %91, %cst_45 [1] : vector<8x32xf32> to vector<8xf32>
    %95 = vector.shape_cast %94 : vector<8xf32> to vector<8x1xf32>
    %cst_46 = arith.constant 3.200000e+01 : f32
    %96 = vector.broadcast %cst_46 : f32 to vector<8x1xf32>
    %97 = arith.divf %95, %96 : vector<8x1xf32>
    %98 = vector.broadcast %97 : vector<8x1xf32> to vector<8x32xf32>
    %99 = arith.subf %91, %98 : vector<8x32xf32>
    %100 = arith.mulf %99, %99 : vector<8x32xf32>
    %cst_47 = arith.constant dense<0.000000e+00> : vector<8xf32>
    %101 = vector.multi_reduction <add>, %100, %cst_47 [1] : vector<8x32xf32> to vector<8xf32>
    %102 = vector.shape_cast %101 : vector<8xf32> to vector<8x1xf32>
    %cst_48 = arith.constant 3.200000e+01 : f32
    %103 = vector.broadcast %cst_48 : f32 to vector<8x1xf32>
    %104 = arith.divf %102, %103 : vector<8x1xf32>
    %cst_49 = arith.constant 9.99999974E-6 : f32
    %105 = vector.broadcast %cst_49 : f32 to vector<8x1xf32>
    %106 = arith.addf %104, %105 : vector<8x1xf32>
    %107 = math.rsqrt %106 : vector<8x1xf32>
    %108 = vector.broadcast %97 : vector<8x1xf32> to vector<8x32xf32>
    %109 = arith.subf %91, %108 : vector<8x32xf32>
    %110 = vector.broadcast %107 : vector<8x1xf32> to vector<8x32xf32>
    %111 = arith.mulf %109, %110 : vector<8x32xf32>
    %112 = vector.broadcast %92 : vector<1x32xf32> to vector<8x32xf32>
    %113 = arith.mulf %111, %112 : vector<8x32xf32>
    %114 = vector.broadcast %93 : vector<1x32xf32> to vector<8x32xf32>
    %115 = arith.addf %113, %114 : vector<8x32xf32>
    %116 = arith.truncf %115 : vector<8x32xf32> to vector<8x32xbf16>
    %c0_50 = arith.constant 0 : index
    %c0_51 = arith.constant 0 : index
    %117 = vector.load %arg11[%c0_50, %c0_51] : memref<32x64xbf16, #tpu.memory_space<vmem>>, vector<32x64xbf16>
    %cst_52 = arith.constant dense<0.000000e+00> : vector<8x64xf32>
    %118 = tpu.matmul %116, %117, %cst_52 {dimension_numbers = #tpu.dot_dimension_numbers<[1], [0], [0], [1], [0, 0, 1, 1], [], []>} : vector<8x32xbf16>, vector<32x64xbf16>, vector<8x64xf32> -> vector<8x64xf32>
    %c0_53 = arith.constant 0 : index
    %c0_54 = arith.constant 0 : index
    %119 = vector.load %arg12[%c0_53, %c0_54] : memref<1x64xf32, #tpu.memory_space<vmem>>, vector<1x64xf32>
    %120 = vector.broadcast %119 : vector<1x64xf32> to vector<8x64xf32>
    %121 = arith.addf %118, %120 : vector<8x64xf32>
    %cst_55 = arith.constant 0.000000e+00 : f32
    %122 = vector.broadcast %cst_55 : f32 to vector<8x64xf32>
    %123 = arith.maximumf %121, %122 : vector<8x64xf32>
    %124 = arith.truncf %123 : vector<8x64xf32> to vector<8x64xbf16>
    %c0_56 = arith.constant 0 : index
    %c0_57 = arith.constant 0 : index
    %125 = vector.load %arg13[%c0_56, %c0_57] : memref<64x32xbf16, #tpu.memory_space<vmem>>, vector<64x32xbf16>
    %cst_58 = arith.constant dense<0.000000e+00> : vector<8x32xf32>
    %126 = tpu.matmul %124, %125, %cst_58 {dimension_numbers = #tpu.dot_dimension_numbers<[1], [0], [0], [1], [0, 0, 1, 1], [], []>} : vector<8x64xbf16>, vector<64x32xbf16>, vector<8x32xf32> -> vector<8x32xf32>
    %c0_59 = arith.constant 0 : index
    %c0_60 = arith.constant 0 : index
    %127 = vector.load %arg14[%c0_59, %c0_60] : memref<1x32xf32, #tpu.memory_space<vmem>>, vector<1x32xf32>
    %128 = vector.broadcast %127 : vector<1x32xf32> to vector<8x32xf32>
    %129 = arith.addf %126, %128 : vector<8x32xf32>
    %130 = arith.addf %129, %115 : vector<8x32xf32>
    %c0_61 = arith.constant 0 : index
    %c0_62 = arith.constant 0 : index
    %131 = vector.load %arg15[%c0_61, %c0_62] : memref<1x32xf32, #tpu.memory_space<vmem>>, vector<1x32xf32>
    %c0_63 = arith.constant 0 : index
    %c0_64 = arith.constant 0 : index
    %132 = vector.load %arg16[%c0_63, %c0_64] : memref<1x32xf32, #tpu.memory_space<vmem>>, vector<1x32xf32>
    %cst_65 = arith.constant dense<0.000000e+00> : vector<8xf32>
    %133 = vector.multi_reduction <add>, %130, %cst_65 [1] : vector<8x32xf32> to vector<8xf32>
    %134 = vector.shape_cast %133 : vector<8xf32> to vector<8x1xf32>
    %cst_66 = arith.constant 3.200000e+01 : f32
    %135 = vector.broadcast %cst_66 : f32 to vector<8x1xf32>
    %136 = arith.divf %134, %135 : vector<8x1xf32>
    %137 = vector.broadcast %136 : vector<8x1xf32> to vector<8x32xf32>
    %138 = arith.subf %130, %137 : vector<8x32xf32>
    %139 = arith.mulf %138, %138 : vector<8x32xf32>
    %cst_67 = arith.constant dense<0.000000e+00> : vector<8xf32>
    %140 = vector.multi_reduction <add>, %139, %cst_67 [1] : vector<8x32xf32> to vector<8xf32>
    %141 = vector.shape_cast %140 : vector<8xf32> to vector<8x1xf32>
    %cst_68 = arith.constant 3.200000e+01 : f32
    %142 = vector.broadcast %cst_68 : f32 to vector<8x1xf32>
    %143 = arith.divf %141, %142 : vector<8x1xf32>
    %cst_69 = arith.constant 9.99999974E-6 : f32
    %144 = vector.broadcast %cst_69 : f32 to vector<8x1xf32>
    %145 = arith.addf %143, %144 : vector<8x1xf32>
    %146 = math.rsqrt %145 : vector<8x1xf32>
    %147 = vector.broadcast %136 : vector<8x1xf32> to vector<8x32xf32>
    %148 = arith.subf %130, %147 : vector<8x32xf32>
    %149 = vector.broadcast %146 : vector<8x1xf32> to vector<8x32xf32>
    %150 = arith.mulf %148, %149 : vector<8x32xf32>
    %151 = vector.broadcast %131 : vector<1x32xf32> to vector<8x32xf32>
    %152 = arith.mulf %150, %151 : vector<8x32xf32>
    %153 = vector.broadcast %132 : vector<1x32xf32> to vector<8x32xf32>
    %154 = arith.addf %152, %153 : vector<8x32xf32>
    %c0_70 = arith.constant 0 : index
    %c0_71 = arith.constant 0 : index
    %c0_72 = arith.constant 0 : index
    %155 = vector.load %arg17[%c0_70, %c0_71, %c0_72] : memref<1x8x32xf32, #tpu.memory_space<vmem>>, vector<1x8x32xf32>
    %156 = vector.shape_cast %155 : vector<1x8x32xf32> to vector<8x32xf32>
    %157 = vector.shape_cast %154 : vector<8x32xf32> to vector<1x8x32xf32>
    tpu.vector_store %arg17[%c0_70, %c0_71, %c0_72], %157 {strides = array<i32>} : memref<1x8x32xf32, #tpu.memory_space<vmem>>, vector<1x8x32xf32>,
    return
  }
  func.func @transform_0(%arg0: i32, %arg1: i32) -> (i32, i32, i32) {
    %c0_i32 = arith.constant 0 : i32
    %c0_i32_0 = arith.constant 0 : i32
    return %arg0, %arg1, %c0_i32 : i32, i32, i32
  }
  func.func @transform_1(%arg0: i32, %arg1: i32) -> (i32, i32, i32) {
    %c0_i32 = arith.constant 0 : i32
    %c0_i32_0 = arith.constant 0 : i32
    %c0_i32_1 = arith.constant 0 : i32
    return %arg0, %c0_i32, %c0_i32_0 : i32, i32, i32
  }
  func.func @transform_2(%arg0: i32, %arg1: i32) -> (i32, i32, i32) {
    %c0_i32 = arith.constant 0 : i32
    %c0_i32_0 = arith.constant 0 : i32
    %c0_i32_1 = arith.constant 0 : i32
    return %arg0, %c0_i32, %c0_i32_0 : i32, i32, i32
  }
  func.func @transform_3(%arg0: i32, %arg1: i32) -> (i32, i32) {
    %c0_i32 = arith.constant 0 : i32
    %c0_i32_0 = arith.constant 0 : i32
    %c0_i32_1 = arith.constant 0 : i32
    return %c0_i32, %c0_i32_0 : i32, i32
  }
  func.func @transform_4(%arg0: i32, %arg1: i32) -> (i32, i32) {
    %c0_i32 = arith.constant 0 : i32
    %c0_i32_0 = arith.constant 0 : i32
    %c0_i32_1 = arith.constant 0 : i32
    return %c0_i32, %c0_i32_0 : i32, i32
  }
  func.func @transform_5(%arg0: i32, %arg1: i32) -> (i32, i32) {
    %c0_i32 = arith.constant 0 : i32
    %c0_i32_0 = arith.constant 0 : i32
    %c0_i32_1 = arith.constant 0 : i32
    return %c0_i32, %c0_i32_0 : i32, i32
  }
  func.func @transform_6(%arg0: i32, %arg1: i32) -> (i32, i32) {
    %c0_i32 = arith.constant 0 : i32
    %c0_i32_0 = arith.constant 0 : i32
    %c0_i32_1 = arith.constant 0 : i32
    return %c0_i32, %c0_i32_0 : i32, i32
  }
  func.func @transform_7(%arg0: i32, %arg1: i32) -> (i32, i32) {
    %c0_i32 = arith.constant 0 : i32
    %c0_i32_0 = arith.constant 0 : i32
    %c0_i32_1 = arith.constant 0 : i32
    return %c0_i32, %c0_i32_0 : i32, i32
  }
  func.func @transform_8(%arg0: i32, %arg1: i32) -> (i32, i32) {
    %c0_i32 = arith.constant 0 : i32
    %c0_i32_0 = arith.constant 0 : i32
    %c0_i32_1 = arith.constant 0 : i32
    return %c0_i32, %c0_i32_0 : i32, i32
  }
  func.func @transform_9(%arg0: i32, %arg1: i32) -> (i32, i32) {
    %c0_i32 = arith.constant 0 : i32
    %c0_i32_0 = arith.constant 0 : i32
    %c0_i32_1 = arith.constant 0 : i32
    return %c0_i32, %c0_i32_0 : i32, i32
  }
  func.func @transform_10(%arg0: i32, %arg1: i32) -> (i32, i32) {
    %c0_i32 = arith.constant 0 : i32
    %c0_i32_0 = arith.constant 0 : i32
    %c0_i32_1 = arith.constant 0 : i32
    return %c0_i32, %c0_i32_0 : i32, i32
  }
  func.func @transform_11(%arg0: i32, %arg1: i32) -> (i32, i32) {
    %c0_i32 = arith.constant 0 : i32
    %c0_i32_0 = arith.constant 0 : i32
    %c0_i32_1 = arith.constant 0 : i32
    return %c0_i32, %c0_i32_0 : i32, i32
  }
  func.func @transform_12(%arg0: i32, %arg1: i32) -> (i32, i32) {
    %c0_i32 = arith.constant 0 : i32
    %c0_i32_0 = arith.constant 0 : i32
    %c0_i32_1 = arith.constant 0 : i32
    return %c0_i32, %c0_i32_0 : i32, i32
  }
  func.func @transform_13(%arg0: i32, %arg1: i32) -> (i32, i32) {
    %c0_i32 = arith.constant 0 : i32
    %c0_i32_0 = arith.constant 0 : i32
    %c0_i32_1 = arith.constant 0 : i32
    return %c0_i32, %c0_i32_0 : i32, i32
  }
  func.func @transform_14(%arg0: i32, %arg1: i32) -> (i32, i32) {
    %c0_i32 = arith.constant 0 : i32
    %c0_i32_0 = arith.constant 0 : i32
    %c0_i32_1 = arith.constant 0 : i32
    return %c0_i32, %c0_i32_0 : i32, i32
  }
  func.func @transform_15(%arg0: i32, %arg1: i32) -> (i32, i32, i32) {
    %c0_i32 = arith.constant 0 : i32
    %c0_i32_0 = arith.constant 0 : i32
    return %arg0, %arg1, %c0_i32 : i32, i32, i32
  }
}

</mosaic_0001>

<llo_original>
// kernel: tpu_custom_call.1
$region0: #{tpu_custom_call.1}
  #allocation0 [shape = 'u32[]', space=smem, size = 0x4, offset = 0x4, fixed_abs, tag = 'smem constant byte address 0x4 - core index']
  #allocation1 [shape = 'u32[144,128]{1,0:T(1,128)}', space=vmem, size = 0x12000, scoped, tag = 'internal scratch']
  #allocation2 [shape = 'bf16[8,32]{1,0:T(8,128)(2,1)}', space=vmem, size = 0x800, scoped, tag = 'scratch operand']
  %s0 = inlined_call_operand.hbm [shape: bf16[2,8,32], index: 0, kind: input, shape index: {}]
  %s1 = inlined_call_operand.hbm [shape: bf16[2,8,32], index: 1, kind: input, shape index: {}]
  %s2 = inlined_call_operand.hbm [shape: bf16[2,8,32], index: 2, kind: input, shape index: {}]
  %s3 = inlined_call_operand.vmem [shape: bf16[32,32], index: 3, kind: input, shape index: {}]
  %s4 = inlined_call_operand.vmem [shape: f32[1,32], index: 4, kind: input, shape index: {}]
  %s5 = inlined_call_operand.vmem [shape: bf16[32,32], index: 5, kind: input, shape index: {}]
  %s6 = inlined_call_operand.vmem [shape: f32[1,32], index: 6, kind: input, shape index: {}]
  %s7 = inlined_call_operand.vmem [shape: f32[1,32], index: 7, kind: input, shape index: {}]
  %s8 = inlined_call_operand.vmem [shape: f32[1,32], index: 8, kind: input, shape index: {}]
  %s9 = inlined_call_operand.vmem [shape: bf16[32,64], index: 9, kind: input, shape index: {}]
  %s10 = inlined_call_operand.hbm [shape: f32[1,64], index: 10, kind: input, shape index: {}]
  %s11 = inlined_call_operand.vmem [shape: bf16[64,32], index: 11, kind: input, shape index: {}]
  %s12 = inlined_call_operand.vmem [shape: f32[1,32], index: 12, kind: input, shape index: {}]
  %s13 = inlined_call_operand.vmem [shape: f32[1,32], index: 13, kind: input, shape index: {}]
  %s14 = inlined_call_operand.vmem [shape: f32[1,32], index: 14, kind: input, shape index: {}]
  %s15 = inlined_call_operand.hbm [shape: f32[2,8,32], index: 15, kind: output, shape index: {}]
  %s16 = sld [smem:[#allocation0]]
  $region109: #{tpu_custom_call.1} parent=0
    _
  %s18 = ssub.s32 1, %s16
  %s19 = scalar_select 0, %s18, %s16
  $region1: #{tpu_custom_call.1} parent=0
    #allocation3 [shape = 'u8[4096]{0}', space=vmem, size = 0x1000, scoped, tag = 'input window, operand 0']
    #allocation4 [shape = 's32[2]{0}', space=sflag, size = 0x8, scoped, tag = 'scoped memory for tpu_custom_call.1']
    #allocation5 [shape = 's32[2]{0}', space=sflag, size = 0x8, scoped, tag = 'scoped memory for tpu_custom_call.1']
    #allocation6 [shape = 'u8[4096]{0}', space=vmem, size = 0x1000, scoped, tag = 'input window, operand 1']
    #allocation7 [shape = 's32[2]{0}', space=sflag, size = 0x8, scoped, tag = 'scoped memory for tpu_custom_call.1']
    #allocation8 [shape = 'u8[4096]{0}', space=vmem, size = 0x1000, scoped, tag = 'input window, operand 2']
    #allocation9 [shape = 'u8[512]{0}', space=vmem, size = 0x400, scoped, tag = 'input window, operand 10, single buffered']
    #allocation10 [shape = 's32[1]{0}', space=sflag, size = 0x4, scoped, tag = 'scoped memory for tpu_custom_call.1']
    #allocation11 [shape = 'u8[8192]{0}', space=vmem, size = 0x2000, scoped, tag = 'output window, operand 0']
    %20 = vsyncpa [#allocation4], 0
    %s21 = scalar_lea.sflag [#allocation4], 1
    %22 = vsyncpa %s21, 0
    %23 = vsyncpa [#allocation7], 0
    %s24 = scalar_lea.sflag [#allocation7], 1
    %25 = vsyncpa %s24, 0
    %26 = vsyncpa [#allocation10], 0
    %27 = vsyncpa [#allocation5], 0
    %s28 = scalar_lea.sflag [#allocation5], 1
    %29 = vsyncpa %s28, 0
    loop: start=0, step=1, limit=4
    $region2: #{tpu_custom_call.1} parent=1 // loop_pre_header
      _
    $region3: #{tpu_custom_call.1} parent=1 // loop_header
      %s31 = sphi 0, %s35
      %p32 = scmp.ge.s32.totalorder %s31, 4
      %s38 = sphi 0, %s50
      %s39 = sphi 0, %s46
      %s40 = sphi 0, %s38
      %s41 = sphi 0, %s39
      %s42 = sphi 0, %s40
      %s43 = sphi 0, %s41
      %s55 = sphi 0, %s57
      %s58 = sphi 0, %s55
      %s59 = sphi 0, %s58
      %s75 = sphi 0, %s59
      %s81 = sphi 0, %s83
      %s84 = sphi 0, %s81
      %s85 = sphi 0, %s84
      %s101 = sphi 0, %s85
      %s107 = sphi 0, %s109
      %s110 = sphi 0, %s107
      %s111 = sphi 0, %s110
      %s127 = sphi 0, %s111
      %s131 = sphi 0, %s131
      %s133 = sphi 0, %s131
      %s134 = sphi 0, %s133
      %s148 = sphi 0, %s134
      %s152 = sphi 0, %s152
      %s154 = sphi 0, %s152
      %s155 = sphi 0, %s154
      %s169 = sphi 0, %s155
      %s173 = sphi 0, %s173
      %s175 = sphi 0, %s173
      %s176 = sphi 0, %s175
      %s190 = sphi 0, %s176
      %s194 = sphi 0, %s194
      %s196 = sphi 0, %s194
      %s197 = sphi 0, %s196
      %s211 = sphi 0, %s197
      %s215 = sphi 0, %s215
      %s217 = sphi 0, %s215
      %s218 = sphi 0, %s217
      %s232 = sphi 0, %s218
      %s236 = sphi 0, %s236
      %s238 = sphi 0, %s236
      %s239 = sphi 0, %s238
      %s253 = sphi 0, %s239
      %s257 = sphi 0, %s257
      %s259 = sphi 0, %s257
      %s260 = sphi 0, %s259
      %s274 = sphi 0, %s260
      %s278 = sphi 0, %s278
      %s280 = sphi 0, %s278
      %s281 = sphi 0, %s280
      %s295 = sphi 0, %s281
      %s299 = sphi 0, %s299
      %s301 = sphi 0, %s299
      %s302 = sphi 0, %s301
      %s316 = sphi 0, %s302
      %s320 = sphi 0, %s320
      %s322 = sphi 0, %s320
      %s323 = sphi 0, %s322
      %s337 = sphi 0, %s323
      %s341 = sphi 0, %s341
      %s343 = sphi 0, %s341
      %s344 = sphi 0, %s343
      %s358 = sphi 0, %s344
      %s362 = sphi 0, %s362
      %s364 = sphi 0, %s362
      %s365 = sphi 0, %s364
      %s379 = sphi 0, %s365
      %s387 = sphi 0, %s389
      %s390 = sphi 0, %s387
      %s391 = sphi 0, %s390
      %s407 = sphi 0, %s391
    $region4: #{tpu_custom_call.1} parent=1 // loop_header_branch
      %34 = sbr.rel (%p32) target = $region8
    $region5: #{tpu_custom_call.1} parent=1 // loop_body
      %s36 = ssub.s32 %s31, 1
      %s37 = ssub.s32 %s31, 2
      %s44 = sadd.s32 1, %s39
      %p45 = scmp.ge.s32.totalorder %s44, 1
      %s46 = scalar_select %p45, 0, %s44
      %s47 = sadd.s32 1, %s38
      %s48 = scalar_select %p45, %s47, %s38
      %p49 = scmp.ge.s32.totalorder %s48, 2
      %s50 = scalar_select %p49, 0, %s48
      %s51 = ssub.s32 %s38, %s50
      %s52 = ssub.s32 %s39, %s46
      %s53 = sor.u32 %s51, %s52
      %p54 = scmp.eq.s32.totalorder %s53, 0
      %s56 = sadd.s32 %s55, 1
      %s57 = scalar_select %p54, %s55, %s56
      %p60 = pneg %p54
      %p61 = scmp.eq.s32.totalorder %s31, 1
      %p62 = por %p60, %p61
      %p63 = scmp.ne.s32.totalorder %s55, %s58
      %p64 = scmp.eq.s32.totalorder %s31, 0
      %p65 = por %p63, %p64
      %p66 = scmp.ne.s32.totalorder %s55, %s58
      %p67 = scmp.eq.s32.totalorder %s36, 1
      %p68 = por %p66, %p67
      %p69 = scmp.ne.s32.totalorder %s58, %s59
      %p70 = scmp.eq.s32.totalorder %s36, 0
      %p71 = por %p69, %p70
      %p72 = scmp.ne.s32.totalorder %s58, %s59
      %p73 = scmp.eq.s32.totalorder %s37, 1
      %p74 = por %p72, %p73
      %p76 = scmp.ne.s32.totalorder %s59, %s75
      %p77 = scmp.eq.s32.totalorder %s37, 0
      %p78 = por %p76, %p77
      %s79 = ssub.s32 %s38, %s50
      %p80 = scmp.eq.s32.totalorder %s79, 0
      %s82 = sadd.s32 %s81, 1
      %s83 = scalar_select %p80, %s81, %s82
      %p86 = pneg %p80
      %p87 = scmp.eq.s32.totalorder %s31, 1
      %p88 = por %p86, %p87
      %p89 = scmp.ne.s32.totalorder %s81, %s84
      %p90 = scmp.eq.s32.totalorder %s31, 0
      %p91 = por %p89, %p90
      %p92 = scmp.ne.s32.totalorder %s81, %s84
      %p93 = scmp.eq.s32.totalorder %s36, 1
      %p94 = por %p92, %p93
      %p95 = scmp.ne.s32.totalorder %s84, %s85
      %p96 = scmp.eq.s32.totalorder %s36, 0
      %p97 = por %p95, %p96
      %p98 = scmp.ne.s32.totalorder %s84, %s85
      %p99 = scmp.eq.s32.totalorder %s37, 1
      %p100 = por %p98, %p99
      %p102 = scmp.ne.s32.totalorder %s85, %s101
      %p103 = scmp.eq.s32.totalorder %s37, 0
      %p104 = por %p102, %p103
      %s105 = ssub.s32 %s38, %s50
      %p106 = scmp.eq.s32.totalorder %s105, 0
      %s108 = sadd.s32 %s107, 1
      %s109 = scalar_select %p106, %s107, %s108
      %p112 = pneg %p106
      %p113 = scmp.eq.s32.totalorder %s31, 1
      %p114 = por %p112, %p113
      %p115 = scmp.ne.s32.totalorder %s107, %s110
      %p116 = scmp.eq.s32.totalorder %s31, 0
      %p117 = por %p115, %p116
      %p118 = scmp.ne.s32.totalorder %s107, %s110
      %p119 = scmp.eq.s32.totalorder %s36, 1
      %p120 = por %p118, %p119
      %p121 = scmp.ne.s32.totalorder %s110, %s111
      %p122 = scmp.eq.s32.totalorder %s36, 0
      %p123 = por %p121, %p122
      %p124 = scmp.ne.s32.totalorder %s110, %s111
      %p125 = scmp.eq.s32.totalorder %s37, 1
      %p126 = por %p124, %p125
      %p128 = scmp.ne.s32.totalorder %s111, %s127
      %p129 = scmp.eq.s32.totalorder %s37, 0
      %p130 = por %p128, %p129
      %s132 = sadd.s32 %s131, 1
      %p135 = scmp.eq.s32.totalorder %s31, 1
      %p136 = scmp.ne.s32.totalorder %s131, %s133
      %p137 = scmp.eq.s32.totalorder %s31, 0
      %p138 = por %p136, %p137
      %p139 = scmp.ne.s32.totalorder %s131, %s133
      %p140 = scmp.eq.s32.totalorder %s36, 1
      %p141 = por %p139, %p140
      %p142 = scmp.ne.s32.totalorder %s133, %s134
      %p143 = scmp.eq.s32.totalorder %s36, 0
      %p144 = por %p142, %p143
      %p145 = scmp.ne.s32.totalorder %s133, %s134
      %p146 = scmp.eq.s32.totalorder %s37, 1
      %p147 = por %p145, %p146
      %p149 = scmp.ne.s32.totalorder %s134, %s148
      %p150 = scmp.eq.s32.totalorder %s37, 0
      %p151 = por %p149, %p150
      %s153 = sadd.s32 %s152, 1
      %p156 = scmp.eq.s32.totalorder %s31, 1
      %p157 = scmp.ne.s32.totalorder %s152, %s154
      %p158 = scmp.eq.s32.totalorder %s31, 0
      %p159 = por %p157, %p158
      %p160 = scmp.ne.s32.totalorder %s152, %s154
      %p161 = scmp.eq.s32.totalorder %s36, 1
      %p162 = por %p160, %p161
      %p163 = scmp.ne.s32.totalorder %s154, %s155
      %p164 = scmp.eq.s32.totalorder %s36, 0
      %p165 = por %p163, %p164
      %p166 = scmp.ne.s32.totalorder %s154, %s155
      %p167 = scmp.eq.s32.totalorder %s37, 1
      %p168 = por %p166, %p167
      %p170 = scmp.ne.s32.totalorder %s155, %s169
      %p171 = scmp.eq.s32.totalorder %s37, 0
      %p172 = por %p170, %p171
      %s174 = sadd.s32 %s173, 1
      %p177 = scmp.eq.s32.totalorder %s31, 1
      %p178 = scmp.ne.s32.totalorder %s173, %s175
      %p179 = scmp.eq.s32.totalorder %s31, 0
      %p180 = por %p178, %p179
      %p181 = scmp.ne.s32.totalorder %s173, %s175
      %p182 = scmp.eq.s32.totalorder %s36, 1
      %p183 = por %p181, %p182
      %p184 = scmp.ne.s32.totalorder %s175, %s176
      %p185 = scmp.eq.s32.totalorder %s36, 0
      %p186 = por %p184, %p185
      %p187 = scmp.ne.s32.totalorder %s175, %s176
      %p188 = scmp.eq.s32.totalorder %s37, 1
      %p189 = por %p187, %p188
      %p191 = scmp.ne.s32.totalorder %s176, %s190
      %p192 = scmp.eq.s32.totalorder %s37, 0
      %p193 = por %p191, %p192
      %s195 = sadd.s32 %s194, 1
      %p198 = scmp.eq.s32.totalorder %s31, 1
      %p199 = scmp.ne.s32.totalorder %s194, %s196
      %p200 = scmp.eq.s32.totalorder %s31, 0
      %p201 = por %p199, %p200
      %p202 = scmp.ne.s32.totalorder %s194, %s196
      %p203 = scmp.eq.s32.totalorder %s36, 1
      %p204 = por %p202, %p203
      %p205 = scmp.ne.s32.totalorder %s196, %s197
      %p206 = scmp.eq.s32.totalorder %s36, 0
      %p207 = por %p205, %p206
      %p208 = scmp.ne.s32.totalorder %s196, %s197
      %p209 = scmp.eq.s32.totalorder %s37, 1
      %p210 = por %p208, %p209
      %p212 = scmp.ne.s32.totalorder %s197, %s211
      %p213 = scmp.eq.s32.totalorder %s37, 0
      %p214 = por %p212, %p213
      %s216 = sadd.s32 %s215, 1
      %p219 = scmp.eq.s32.totalorder %s31, 1
      %p220 = scmp.ne.s32.totalorder %s215, %s217
      %p221 = scmp.eq.s32.totalorder %s31, 0
      %p222 = por %p220, %p221
      %p223 = scmp.ne.s32.totalorder %s215, %s217
      %p224 = scmp.eq.s32.totalorder %s36, 1
      %p225 = por %p223, %p224
      %p226 = scmp.ne.s32.totalorder %s217, %s218
      %p227 = scmp.eq.s32.totalorder %s36, 0
      %p228 = por %p226, %p227
      %p229 = scmp.ne.s32.totalorder %s217, %s218
      %p230 = scmp.eq.s32.totalorder %s37, 1
      %p231 = por %p229, %p230
      %p233 = scmp.ne.s32.totalorder %s218, %s232
      %p234 = scmp.eq.s32.totalorder %s37, 0
      %p235 = por %p233, %p234
      %s237 = sadd.s32 %s236, 1
      %p240 = scmp.eq.s32.totalorder %s31, 1
      %p241 = scmp.ne.s32.totalorder %s236, %s238
      %p242 = scmp.eq.s32.totalorder %s31, 0
      %p243 = por %p241, %p242
      %p244 = scmp.ne.s32.totalorder %s236, %s238
      %p245 = scmp.eq.s32.totalorder %s36, 1
      %p246 = por %p244, %p245
      %p247 = scmp.ne.s32.totalorder %s238, %s239
      %p248 = scmp.eq.s32.totalorder %s36, 0
      %p249 = por %p247, %p248
      %p250 = scmp.ne.s32.totalorder %s238, %s239
      %p251 = scmp.eq.s32.totalorder %s37, 1
      %p252 = por %p250, %p251
      %p254 = scmp.ne.s32.totalorder %s239, %s253
      %p255 = scmp.eq.s32.totalorder %s37, 0
      %p256 = por %p254, %p255
      %s258 = sadd.s32 %s257, 1
      %p261 = scmp.eq.s32.totalorder %s31, 1
      %p262 = scmp.ne.s32.totalorder %s257, %s259
      %p263 = scmp.eq.s32.totalorder %s31, 0
      %p264 = por %p262, %p263
      %p265 = scmp.ne.s32.totalorder %s257, %s259
      %p266 = scmp.eq.s32.totalorder %s36, 1
      %p267 = por %p265, %p266
      %p268 = scmp.ne.s32.totalorder %s259, %s260
      %p269 = scmp.eq.s32.totalorder %s36, 0
      %p270 = por %p268, %p269
      %p271 = scmp.ne.s32.totalorder %s259, %s260
      %p272 = scmp.eq.s32.totalorder %s37, 1
      %p273 = por %p271, %p272
      %p275 = scmp.ne.s32.totalorder %s260, %s274
      %p276 = scmp.eq.s32.totalorder %s37, 0
      %p277 = por %p275, %p276
      %s279 = sadd.s32 %s278, 1
      %p282 = scmp.eq.s32.totalorder %s31, 1
      %p283 = scmp.ne.s32.totalorder %s278, %s280
      %p284 = scmp.eq.s32.totalorder %s31, 0
      %p285 = por %p283, %p284
      %p286 = scmp.ne.s32.totalorder %s278, %s280
      %p287 = scmp.eq.s32.totalorder %s36, 1
      %p288 = por %p286, %p287
      %p289 = scmp.ne.s32.totalorder %s280, %s281
      %p290 = scmp.eq.s32.totalorder %s36, 0
      %p291 = por %p289, %p290
      %p292 = scmp.ne.s32.totalorder %s280, %s281
      %p293 = scmp.eq.s32.totalorder %s37, 1
      %p294 = por %p292, %p293
      %p296 = scmp.ne.s32.totalorder %s281, %s295
      %p297 = scmp.eq.s32.totalorder %s37, 0
      %p298 = por %p296, %p297
      %s300 = sadd.s32 %s299, 1
      %p303 = scmp.eq.s32.totalorder %s31, 1
      %p304 = scmp.ne.s32.totalorder %s299, %s301
      %p305 = scmp.eq.s32.totalorder %s31, 0
      %p306 = por %p304, %p305
      %p307 = scmp.ne.s32.totalorder %s299, %s301
      %p308 = scmp.eq.s32.totalorder %s36, 1
      %p309 = por %p307, %p308
      %p310 = scmp.ne.s32.totalorder %s301, %s302
      %p311 = scmp.eq.s32.totalorder %s36, 0
      %p312 = por %p310, %p311
      %p313 = scmp.ne.s32.totalorder %s301, %s302
      %p314 = scmp.eq.s32.totalorder %s37, 1
      %p315 = por %p313, %p314
      %p317 = scmp.ne.s32.totalorder %s302, %s316
      %p318 = scmp.eq.s32.totalorder %s37, 0
      %p319 = por %p317, %p318
      %s321 = sadd.s32 %s320, 1
      %p324 = scmp.eq.s32.totalorder %s31, 1
      %p325 = scmp.ne.s32.totalorder %s320, %s322
      %p326 = scmp.eq.s32.totalorder %s31, 0
      %p327 = por %p325, %p326
      %p328 = scmp.ne.s32.totalorder %s320, %s322
      %p329 = scmp.eq.s32.totalorder %s36, 1
      %p330 = por %p328, %p329
      %p331 = scmp.ne.s32.totalorder %s322, %s323
      %p332 = scmp.eq.s32.totalorder %s36, 0
      %p333 = por %p331, %p332
      %p334 = scmp.ne.s32.totalorder %s322, %s323
      %p335 = scmp.eq.s32.totalorder %s37, 1
      %p336 = por %p334, %p335
      %p338 = scmp.ne.s32.totalorder %s323, %s337
      %p339 = scmp.eq.s32.totalorder %s37, 0
      %p340 = por %p338, %p339
      %s342 = sadd.s32 %s341, 1
      %p345 = scmp.eq.s32.totalorder %s31, 1
      %p346 = scmp.ne.s32.totalorder %s341, %s343
      %p347 = scmp.eq.s32.totalorder %s31, 0
      %p348 = por %p346, %p347
      %p349 = scmp.ne.s32.totalorder %s341, %s343
      %p350 = scmp.eq.s32.totalorder %s36, 1
      %p351 = por %p349, %p350
      %p352 = scmp.ne.s32.totalorder %s343, %s344
      %p353 = scmp.eq.s32.totalorder %s36, 0
      %p354 = por %p352, %p353
      %p355 = scmp.ne.s32.totalorder %s343, %s344
      %p356 = scmp.eq.s32.totalorder %s37, 1
      %p357 = por %p355, %p356
      %p359 = scmp.ne.s32.totalorder %s344, %s358
      %p360 = scmp.eq.s32.totalorder %s37, 0
      %p361 = por %p359, %p360
      %s363 = sadd.s32 %s362, 1
      %p366 = scmp.eq.s32.totalorder %s31, 1
      %p367 = scmp.ne.s32.totalorder %s362, %s364
      %p368 = scmp.eq.s32.totalorder %s31, 0
      %p369 = por %p367, %p368
      %p370 = scmp.ne.s32.totalorder %s362, %s364
      %p371 = scmp.eq.s32.totalorder %s36, 1
      %p372 = por %p370, %p371
      %p373 = scmp.ne.s32.totalorder %s364, %s365
      %p374 = scmp.eq.s32.totalorder %s36, 0
      %p375 = por %p373, %p374
      %p376 = scmp.ne.s32.totalorder %s364, %s365
      %p377 = scmp.eq.s32.totalorder %s37, 1
      %p378 = por %p376, %p377
      %p380 = scmp.ne.s32.totalorder %s365, %s379
      %p381 = scmp.eq.s32.totalorder %s37, 0
      %p382 = por %p380, %p381
      %s383 = ssub.s32 %s38, %s50
      %s384 = ssub.s32 %s39, %s46
      %s385 = sor.u32 %s383, %s384
      %p386 = scmp.eq.s32.totalorder %s385, 0
      %s388 = sadd.s32 %s387, 1
      %s389 = scalar_select %p386, %s387, %s388
      %p392 = pneg %p386
      %p393 = scmp.eq.s32.totalorder %s31, 1
      %p394 = por %p392, %p393
      %p395 = scmp.ne.s32.totalorder %s387, %s390
      %p396 = scmp.eq.s32.totalorder %s31, 0
      %p397 = por %p395, %p396
      %p398 = scmp.ne.s32.totalorder %s387, %s390
      %p399 = scmp.eq.s32.totalorder %s36, 1
      %p400 = por %p398, %p399
      %p401 = scmp.ne.s32.totalorder %s390, %s391
      %p402 = scmp.eq.s32.totalorder %s36, 0
      %p403 = por %p401, %p402
      %p404 = scmp.ne.s32.totalorder %s390, %s391
      %p405 = scmp.eq.s32.totalorder %s37, 1
      %p406 = por %p404, %p405
      %p408 = scmp.ne.s32.totalorder %s391, %s407
      %p409 = scmp.eq.s32.totalorder %s37, 0
      %p410 = por %p408, %p409
      %p411 = scmp.le.s32.totalorder 1, %s31
      %p412 = scmp.lt.s32.totalorder %s31, 3
      %p413 = pnand %p411, %p412
      %p414 = pneg %p413
      // Predicated region
      $region9: #{tpu_custom_call.1} parent=5 // pred_check
        _
      $region10: #{tpu_custom_call.1} parent=5 // pred_check_branch
        %416 = sbr.rel (%p413) target = $region12
      $region11: #{tpu_custom_call.1} parent=5 // pred_region
        %s417 = ssub.s32 %s31, 1
        // Predicated region
        $region13: #{tpu_custom_call.1} parent=11 // pred_check
          %p418 = pneg %p144
        $region14: #{tpu_custom_call.1} parent=11 // pred_check_branch
          %420 = sbr.rel (%p418) target = $region16
        $region15: #{tpu_custom_call.1} parent=11 // pred_region
          _
        $region16: #{tpu_custom_call.1} parent=11 // pred_fallthru
          _
        // Predicated region
        $region17: #{tpu_custom_call.1} parent=11 // pred_check
          %p421 = pneg %p165
        $region18: #{tpu_custom_call.1} parent=11 // pred_check_branch
          %423 = sbr.rel (%p421) target = $region20
        $region19: #{tpu_custom_call.1} parent=11 // pred_region
          _
        $region20: #{tpu_custom_call.1} parent=11 // pred_fallthru
          _
        // Predicated region
        $region21: #{tpu_custom_call.1} parent=11 // pred_check
          %p424 = pneg %p186
        $region22: #{tpu_custom_call.1} parent=11 // pred_check_branch
          %426 = sbr.rel (%p424) target = $region24
        $region23: #{tpu_custom_call.1} parent=11 // pred_region
          _
        $region24: #{tpu_custom_call.1} parent=11 // pred_fallthru
          _
        // Predicated region
        $region25: #{tpu_custom_call.1} parent=11 // pred_check
          %p427 = pneg %p207
        $region26: #{tpu_custom_call.1} parent=11 // pred_check_branch
          %429 = sbr.rel (%p427) target = $region28
        $region27: #{tpu_custom_call.1} parent=11 // pred_region
          _
        $region28: #{tpu_custom_call.1} parent=11 // pred_fallthru
          _
        // Predicated region
        $region29: #{tpu_custom_call.1} parent=11 // pred_check
          %p430 = pneg %p228
        $region30: #{tpu_custom_call.1} parent=11 // pred_check_branch
          %432 = sbr.rel (%p430) target = $region32
        $region31: #{tpu_custom_call.1} parent=11 // pred_region
          _
        $region32: #{tpu_custom_call.1} parent=11 // pred_fallthru
          _
        // Predicated region
        $region33: #{tpu_custom_call.1} parent=11 // pred_check
          %p433 = pneg %p249
        $region34: #{tpu_custom_call.1} parent=11 // pred_check_branch
          %435 = sbr.rel (%p433) target = $region36
        $region35: #{tpu_custom_call.1} parent=11 // pred_region
          _
        $region36: #{tpu_custom_call.1} parent=11 // pred_fallthru
          _
        // Predicated region
        $region37: #{tpu_custom_call.1} parent=11 // pred_check
          %p436 = pneg %p270
        $region38: #{tpu_custom_call.1} parent=11 // pred_check_branch
          %438 = sbr.rel (%p436) target = $region40
        $region39: #{tpu_custom_call.1} parent=11 // pred_region
          _
        $region40: #{tpu_custom_call.1} parent=11 // pred_fallthru
          _
        // Predicated region
        $region41: #{tpu_custom_call.1} parent=11 // pred_check
          %p439 = pneg %p291
        $region42: #{tpu_custom_call.1} parent=11 // pred_check_branch
          %441 = sbr.rel (%p439) target = $region44
        $region43: #{tpu_custom_call.1} parent=11 // pred_region
          %s443 = ssub.s32 16, 16
          %444 = vsyncadd [#allocation10], %s443
          %s446 = sshll.u32 [#allocation9], 4
          %s447 = int_to_ptr.vmem [resolvable:$true] %s446
          %449 = dma.hbm_to_vmem [thread:$0]  %s10, 16, %s447, [#allocation10]
        $region44: #{tpu_custom_call.1} parent=11 // pred_fallthru
          _
        // Predicated region
        $region45: #{tpu_custom_call.1} parent=11 // pred_check
          %p450 = pneg %p312
        $region46: #{tpu_custom_call.1} parent=11 // pred_check_branch
          %452 = sbr.rel (%p450) target = $region48
        $region47: #{tpu_custom_call.1} parent=11 // pred_region
          _
        $region48: #{tpu_custom_call.1} parent=11 // pred_fallthru
          _
        // Predicated region
        $region49: #{tpu_custom_call.1} parent=11 // pred_check
          %p453 = pneg %p333
        $region50: #{tpu_custom_call.1} parent=11 // pred_check_branch
          %455 = sbr.rel (%p453) target = $region52
        $region51: #{tpu_custom_call.1} parent=11 // pred_region
          _
        $region52: #{tpu_custom_call.1} parent=11 // pred_fallthru
          _
        // Predicated region
        $region53: #{tpu_custom_call.1} parent=11 // pred_check
          %p456 = pneg %p354
        $region54: #{tpu_custom_call.1} parent=11 // pred_check_branch
          %458 = sbr.rel (%p456) target = $region56
        $region55: #{tpu_custom_call.1} parent=11 // pred_region
          _
        $region56: #{tpu_custom_call.1} parent=11 // pred_fallthru
          _
        // Predicated region
        $region57: #{tpu_custom_call.1} parent=11 // pred_check
          %p459 = pneg %p375
        $region58: #{tpu_custom_call.1} parent=11 // pred_check_branch
          %461 = sbr.rel (%p459) target = $region60
        $region59: #{tpu_custom_call.1} parent=11 // pred_region
          _
        $region60: #{tpu_custom_call.1} parent=11 // pred_fallthru
          _
      $region12: #{tpu_custom_call.1} parent=5 // pred_fallthru
        _
      %p462 = scmp.lt.s32.totalorder %s31, 2
      // Predicated region
      $region61: #{tpu_custom_call.1} parent=5 // pred_check
        %p463 = pneg %p462
      $region62: #{tpu_custom_call.1} parent=5 // pred_check_branch
        %465 = sbr.rel (%p463) target = $region64
      $region63: #{tpu_custom_call.1} parent=5 // pred_region
        // Predicated region
        $region65: #{tpu_custom_call.1} parent=63 // pred_check
          %p466 = pneg %p65
        $region66: #{tpu_custom_call.1} parent=63 // pred_check_branch
          %468 = sbr.rel (%p466) target = $region68
        $region67: #{tpu_custom_call.1} parent=63 // pred_region
          %s469 = sand.u32 %s55, 1
          %s470 = scalar_lea.sflag [#allocation4], %s469
          %s471 = sand.u32 %s55, 1
          %s472 = smul.addr %s471, 4
          %s473 = scalar_lea.vmem [#allocation3], %s472
          %s475 = ssub.s32 64, 64
          %476 = vsyncadd %s470, %s475
          %s477 = sadd.s32 %s39, %s38
          %s478 = smul.addr %s477, 64
          %s479 = scalar_lea.hbm %s0, %s478
          %s481 = sshll.u32 %s473, 4
          %s482 = int_to_ptr.vmem [resolvable:$true] %s481
          %484 = dma.hbm_to_vmem [thread:$0]  %s479, 64, %s482, %s470
        $region68: #{tpu_custom_call.1} parent=63 // pred_fallthru
          _
        // Predicated region
        $region69: #{tpu_custom_call.1} parent=63 // pred_check
          %p485 = pneg %p91
        $region70: #{tpu_custom_call.1} parent=63 // pred_check_branch
          %487 = sbr.rel (%p485) target = $region72
        $region71: #{tpu_custom_call.1} parent=63 // pred_region
          %s488 = sand.u32 %s31, 1
          %s489 = scalar_lea.sflag [#allocation7], %s488
          %s490 = sand.u32 %s81, 1
          %s491 = smul.addr %s490, 4
          %s492 = scalar_lea.vmem [#allocation6], %s491
          %s494 = ssub.s32 64, 64
          %495 = vsyncadd %s489, %s494
          %s496 = smul.addr %s38, 64
          %s497 = scalar_lea.hbm %s1, %s496
          %s499 = sshll.u32 %s492, 4
          %s500 = int_to_ptr.vmem [resolvable:$true] %s499
          %502 = dma.hbm_to_vmem [thread:$0]  %s497, 64, %s500, %s489
        $region72: #{tpu_custom_call.1} parent=63 // pred_fallthru
          _
        // Predicated region
        $region73: #{tpu_custom_call.1} parent=63 // pred_check
          %p503 = pneg %p117
        $region74: #{tpu_custom_call.1} parent=63 // pred_check_branch
          %505 = sbr.rel (%p503) target = $region76
        $region75: #{tpu_custom_call.1} parent=63 // pred_region
          %s506 = sand.u32 %s31, 1
          %s507 = scalar_lea.sflag [#allocation7], %s506
          %s508 = sand.u32 %s107, 1
          %s509 = smul.addr %s508, 4
          %s510 = scalar_lea.vmem [#allocation8], %s509
          %s512 = ssub.s32 64, 64
          %513 = vsyncadd %s507, %s512
          %s514 = smul.addr %s38, 64
          %s515 = scalar_lea.hbm %s2, %s514
          %s517 = sshll.u32 %s510, 4
          %s518 = int_to_ptr.vmem [resolvable:$true] %s517
          %520 = dma.hbm_to_vmem [thread:$0]  %s515, 64, %s518, %s507
        $region76: #{tpu_custom_call.1} parent=63 // pred_fallthru
          _
      $region64: #{tpu_custom_call.1} parent=5 // pred_fallthru
        _
      %p521 = scmp.le.s32.totalorder 1, %s31
      %p522 = scmp.lt.s32.totalorder %s31, 3
      %p523 = pnand %p521, %p522
      %p524 = pneg %p523
      // Predicated region
      $region77: #{tpu_custom_call.1} parent=5 // pred_check
        _
      $region78: #{tpu_custom_call.1} parent=5 // pred_check_branch
        %526 = sbr.rel (%p523) target = $region80
      $region79: #{tpu_custom_call.1} parent=5 // pred_region
        %s527 = ssub.s32 %s31, 1
        %s528 = sand.u32 %s58, 1
        %s529 = scalar_lea.sflag [#allocation4], %s528
        %s530 = sand.u32 %s58, 1
        %s531 = smul.addr %s530, 4
        %s532 = scalar_lea.vmem [#allocation3], %s531
        // Predicated region
        $region81: #{tpu_custom_call.1} parent=79 // pred_check
          %p533 = pneg %p71
        $region82: #{tpu_custom_call.1} parent=79 // pred_check_branch
          %535 = sbr.rel (%p533) target = $region84
        $region83: #{tpu_custom_call.1} parent=79 // pred_region
          %536 = dma.done %s529, 64
        $region84: #{tpu_custom_call.1} parent=79 // pred_fallthru
          _
        %s537 = sand.u32 %s36, 1
        %s538 = scalar_lea.sflag [#allocation7], %s537
        %s539 = sand.u32 %s84, 1
        %s540 = smul.addr %s539, 4
        %s541 = scalar_lea.vmem [#allocation6], %s540
        // Predicated region
        $region85: #{tpu_custom_call.1} parent=79 // pred_check
          %p542 = pneg %p97
        $region86: #{tpu_custom_call.1} parent=79 // pred_check_branch
          %544 = sbr.rel (%p542) target = $region88
        $region87: #{tpu_custom_call.1} parent=79 // pred_region
          %545 = dma.done %s538, 64
        $region88: #{tpu_custom_call.1} parent=79 // pred_fallthru
          _
        %s546 = sand.u32 %s36, 1
        %s547 = scalar_lea.sflag [#allocation7], %s546
        %s548 = sand.u32 %s110, 1
        %s549 = smul.addr %s548, 4
        %s550 = scalar_lea.vmem [#allocation8], %s549
        // Predicated region
        $region89: #{tpu_custom_call.1} parent=79 // pred_check
          %p551 = pneg %p123
        $region90: #{tpu_custom_call.1} parent=79 // pred_check_branch
          %553 = sbr.rel (%p551) target = $region92
        $region91: #{tpu_custom_call.1} parent=79 // pred_region
          %554 = dma.done %s547, 64
        $region92: #{tpu_custom_call.1} parent=79 // pred_fallthru
          _
        // Predicated region
        $region93: #{tpu_custom_call.1} parent=79 // pred_check
          %p555 = pneg %p291
        $region94: #{tpu_custom_call.1} parent=79 // pred_check_branch
          %557 = sbr.rel (%p555) target = $region96
        $region95: #{tpu_custom_call.1} parent=79 // pred_region
          %558 = dma.done [#allocation10], 16
        $region96: #{tpu_custom_call.1} parent=79 // pred_fallthru
          _
        %s559 = sand.u32 %s58, 1
        %s560 = scalar_lea.sflag [#allocation4], %s559
        %s561 = sand.u32 %s58, 1
        %s562 = smul.addr %s561, 4
        %s563 = scalar_lea.vmem [#allocation3], %s562
        %p564 = pneg %p71
        %p565 = pneg %p68
        %s566 = sand.u32 %s36, 1
        %s567 = scalar_lea.sflag [#allocation7], %s566
        %s568 = sand.u32 %s84, 1
        %s569 = smul.addr %s568, 4
        %s570 = scalar_lea.vmem [#allocation6], %s569
        %p571 = pneg %p97
        %p572 = pneg %p94
        %s573 = sand.u32 %s36, 1
        %s574 = scalar_lea.sflag [#allocation7], %s573
        %s575 = sand.u32 %s110, 1
        %s576 = smul.addr %s575, 4
        %s577 = scalar_lea.vmem [#allocation8], %s576
        %p578 = pneg %p123
        %p579 = pneg %p120
        %p580 = pneg %p144
        %p581 = pneg %p141
        %p582 = pneg %p165
        %p583 = pneg %p162
        %p584 = pneg %p186
        %p585 = pneg %p183
        %p586 = pneg %p207
        %p587 = pneg %p204
        %p588 = pneg %p228
        %p589 = pneg %p225
        %p590 = pneg %p249
        %p591 = pneg %p246
        %p592 = pneg %p270
        %p593 = pneg %p267
        %p594 = pneg %p291
        %p595 = pneg %p288
        %p596 = pneg %p312
        %p597 = pneg %p309
        %p598 = pneg %p333
        %p599 = pneg %p330
        %p600 = pneg %p354
        %p601 = pneg %p351
        %p602 = pneg %p375
        %p603 = pneg %p372
        %p604 = pneg %p403
        %p605 = pneg %p400
        %s606 = sand.u32 %s390, 1
        %s607 = scalar_lea.sflag [#allocation5], %s606
        %s608 = sand.u32 %s390, 1
        %s609 = smul.addr %s608, 8
        %s610 = scalar_lea.vmem [#allocation11], %s609
        %v612 = vld [vmem:[%s532] sm:$0xf]
        %v613 = vld [vmem:[%s541] sm:$0xf]
        %v614 = vld [vmem:[%s550] sm:$0xf]
        %v615 = vld [vmem:[%s3] sm:$0xf]
        %v616 = vld [vmem:[%s3 + $0x4] sm:$0xf]
        %v617 = vld [vmem:[%s3 + $0x8] sm:$0xf]
        %v618 = vld [vmem:[%s3 + $0xc] sm:$0xf]
        %v619 = vld [vmem:[%s4] sm:$0x1]
        %v621 = vlaneseq
        %v622 = vshrl.u32 %v621, 7
        %v623 = vsub.s32 0, %v622
        %v624 = vrot.slane %v619, %v623
        %v630 = vunpack.c.l.b16 %v615
        %v631 = vunpack.c.l.b16 %v616
        %v632 = vunpack.c.l.b16 %v617
        %v633 = vunpack.c.l.b16 %v618
        %v634 = vpack.c.b16 %v631, %v630
        %v635 = vpack.c.b16 %v633, %v632
        %vm638 = vcmask 261120
        %v640 = vsel %vm638, %v612, 0
        %642 = vmatprep.subr.bf16.mxu0 0
        %643 = vmatpush1.bf16.msra.mxu0 0
        %644 = vmatprep.subr.bf16.mxu0 0
        %645 = vmatpush1.bf16.msra.mxu0 0
        %646 = vmatprep.subr.bf16.mxu0 0
        %647 = vmatpush1.bf16.msra.mxu0 0
        %648 = vmatprep.subr.bf16.mxu0 0
        %649 = vmatpush1.bf16.msra.mxu0 0
        %650 = vmatprep.subr.bf16.mxu0 0
        %651 = vmatpush1.bf16.msra.mxu0 0
        %652 = vmatprep.subr.bf16.mxu0 0
        %653 = vmatpush1.bf16.msra.mxu0 0
        %654 = vmatprep.subr.bf16.mxu0 0
        %655 = vmatpush1.bf16.msra.mxu0 %v635
        %656 = vmatprep.subr.bf16.mxu0 0
        %657 = vmatpush1.bf16.msra.mxu0 %v634
        %658 = vmatprep.subr.bf16.mxu0 0
        %659 = vmatpush2.bf16.msra.mxu0 0
        %660 = vmatprep.subr.bf16.mxu0 0
        %661 = vmatpush2.bf16.msra.mxu0 0
        %662 = vmatprep.subr.bf16.mxu0 0
        %663 = vmatpush2.bf16.msra.mxu0 0
        %664 = vmatprep.subr.bf16.mxu0 0
        %665 = vmatpush2.bf16.msra.mxu0 0
        %666 = vmatprep.subr.bf16.mxu0 0
        %667 = vmatpush2.bf16.msra.mxu0 0
        %668 = vmatprep.subr.bf16.mxu0 0
        %669 = vmatpush2.bf16.msra.mxu0 0
        %670 = vmatprep.subr.bf16.mxu0 0
        %671 = vmatpush2.bf16.msra.mxu0 0
        %672 = vmatprep.subr.bf16.mxu0 0
        %673 = vmatpush2.bf16.msra.mxu0 0
        %674 = vmatprep.mubr.bf16.mxu0 0
        %675 = vmatmul.mubr.bf16.gmra.mxu0 %v640
        %v676 = vpop.f32.mrf.mxu0
        %v677 = vadd.f32 %v624, %v676
        %v678 = vpop.f32.mrf.mxu0
        %v679 = vpop.f32.mrf.mxu0
        %v680 = vpop.f32.mrf.mxu0
        %681 = vdwg.mxu0
        %v682 = vmul.f32 %v677, 0.35355338
        %v683 = vpack.c.bf16 %v682, %v682
        %vm684 = vcmask 64512
        %v686 = vsel %vm684, %v683, 0
        %v689 = vsel %vm684, %v613, 0
        %691 = vmatprep.subr.bf16.mxu0 0
        %692 = vmatpush1.bf16.xpose.msra.mxu0 0
        %693 = vmatprep.subr.bf16.mxu0 0
        %694 = vmatpush1.bf16.xpose.msra.mxu0 0
        %695 = vmatprep.subr.bf16.mxu0 0
        %696 = vmatpush1.bf16.xpose.msra.mxu0 0
        %697 = vmatprep.subr.bf16.mxu0 0
        %698 = vmatpush1.bf16.xpose.msra.mxu0 0
        %699 = vmatprep.subr.bf16.mxu0 0
        %700 = vmatpush1.bf16.xpose.msra.mxu0 0
        %701 = vmatprep.subr.bf16.mxu0 0
        %702 = vmatpush1.bf16.xpose.msra.mxu0 0
        %703 = vmatprep.subr.bf16.mxu0 0
        %704 = vmatpush1.bf16.xpose.msra.mxu0 0
        %705 = vmatprep.subr.bf16.mxu0 0
        %706 = vmatpush1.bf16.xpose.msra.mxu0 %v689
        %707 = vmatprep.subr.bf16.mxu0 0
        %708 = vmatpush2.bf16.xpose.msra.mxu0 0
        %709 = vmatprep.subr.bf16.mxu0 0
        %710 = vmatpush2.bf16.xpose.msra.mxu0 0
        %711 = vmatprep.subr.bf16.mxu0 0
        %712 = vmatpush2.bf16.xpose.msra.mxu0 0
        %713 = vmatprep.subr.bf16.mxu0 0
        %714 = vmatpush2.bf16.xpose.msra.mxu0 0
        %715 = vmatprep.subr.bf16.mxu0 0
        %716 = vmatpush2.bf16.xpose.msra.mxu0 0
        %717 = vmatprep.subr.bf16.mxu0 0
        %718 = vmatpush2.bf16.xpose.msra.mxu0 0
        %719 = vmatprep.subr.bf16.mxu0 0
        %720 = vmatpush2.bf16.xpose.msra.mxu0 0
        %721 = vmatprep.subr.bf16.mxu0 0
        %722 = vmatpush2.bf16.xpose.msra.mxu0 0
        %723 = vmatprep.mubr.bf16.mxu0 0
        %724 = vmatmul.mubr.bf16.gmra.mxu0 %v686
        %v725 = vpop.f32.mrf.mxu0
        %v726 = vadd.f32 0.0, %v725
        %v727 = vpop.f32.mrf.mxu0
        %v728 = vpop.f32.mrf.mxu0
        %v729 = vpop.f32.mrf.mxu0
        %730 = vdwg.mxu0
        %v731 = vsel %vm684, %v726, -inf
        %732 = vmax.xlane.f32.xlu0 %v731
        %v733 = vpop.xlane.xlu0 %732
        %v734 = vsub.f32 %v726, %v733
        %v735 = vmul.f32 %v734, 1.442695
        %v736 = vpow.pop %v735
        %v737 = vsel %vm684, %v736, 0.0
        %738 = vadd.xlane.f32.xlu0 %v737
        %v739 = vpop.xlane.xlu0 %738
        %v740 = vrcp.pop %v739
        %v741 = vmul.f32 %v736, %v740
        %v742 = vpack.c.bf16 %v741, %v741
        %v744 = vsel %vm684, %v742, 0
        %vm746 = vcmask 1043456
        %v748 = vsel %vm746, %v614, 0
        %750 = vmatprep.subr.bf16.mxu0 0
        %751 = vmatpush1.bf16.msra.mxu0 0
        %752 = vmatprep.subr.bf16.mxu0 0
        %753 = vmatpush1.bf16.msra.mxu0 0
        %754 = vmatprep.subr.bf16.mxu0 0
        %755 = vmatpush1.bf16.msra.mxu0 0
        %756 = vmatprep.subr.bf16.mxu0 0
        %757 = vmatpush1.bf16.msra.mxu0 0
        %758 = vmatprep.subr.bf16.mxu0 0
        %759 = vmatpush1.bf16.msra.mxu0 0
        %760 = vmatprep.subr.bf16.mxu0 0
        %761 = vmatpush1.bf16.msra.mxu0 0
        %762 = vmatprep.subr.bf16.mxu0 0
        %763 = vmatpush1.bf16.msra.mxu0 0
        %764 = vmatprep.subr.bf16.mxu0 0
        %765 = vmatpush1.bf16.msra.mxu0 %v748
        %766 = vmatprep.subr.bf16.mxu0 0
        %767 = vmatpush2.bf16.msra.mxu0 0
        %768 = vmatprep.subr.bf16.mxu0 0
        %769 = vmatpush2.bf16.msra.mxu0 0
        %770 = vmatprep.subr.bf16.mxu0 0
        %771 = vmatpush2.bf16.msra.mxu0 0
        %772 = vmatprep.subr.bf16.mxu0 0
        %773 = vmatpush2.bf16.msra.mxu0 0
        %774 = vmatprep.subr.bf16.mxu0 0
        %775 = vmatpush2.bf16.msra.mxu0 0
        %776 = vmatprep.subr.bf16.mxu0 0
        %777 = vmatpush2.bf16.msra.mxu0 0
        %778 = vmatprep.subr.bf16.mxu0 0
        %779 = vmatpush2.bf16.msra.mxu0 0
        %780 = vmatprep.subr.bf16.mxu0 0
        %781 = vmatpush2.bf16.msra.mxu0 0
        %782 = vmatprep.mubr.bf16.mxu0 0
        %783 = vmatmul.mubr.bf16.gmra.mxu0 %v744
        %v784 = vpop.f32.mrf.mxu0
        %v785 = vadd.f32 0.0, %v784
        %v786 = vpop.f32.mrf.mxu0
        %v787 = vpop.f32.mrf.mxu0
        %v788 = vpop.f32.mrf.mxu0
        %789 = vdwg.mxu0
        %v790 = vpack.c.bf16 %v785, %v785
        %vm791 = vcmask 60416
        %792 = vst.msk [vmem:[#allocation2] sm:$0xf] %vm791, %v790
        %794 = vrot.lane.b32.xlu0 %v683, 120
        %v795 = vpop.permute.xlu0 %794
        %v797 = vunpack.c.l.b16 %v613
        %v798 = vpack.c.b16 %v797, %v797
        %799 = vrot.lane.b32.xlu0 %v798, 120
        %v800 = vpop.permute.xlu0 %799
        %v802 = vsel %vm684, %v795, 0
        %v805 = vsel %vm684, %v800, 0
        %807 = vmatprep.subr.bf16.mxu0 0
        %808 = vmatpush1.bf16.xpose.msra.mxu0 0
        %809 = vmatprep.subr.bf16.mxu0 0
        %810 = vmatpush1.bf16.xpose.msra.mxu0 0
        %811 = vmatprep.subr.bf16.mxu0 0
        %812 = vmatpush1.bf16.xpose.msra.mxu0 0
        %813 = vmatprep.subr.bf16.mxu0 0
        %814 = vmatpush1.bf16.xpose.msra.mxu0 0
        %815 = vmatprep.subr.bf16.mxu0 0
        %816 = vmatpush1.bf16.xpose.msra.mxu0 0
        %817 = vmatprep.subr.bf16.mxu0 0
        %818 = vmatpush1.bf16.xpose.msra.mxu0 0
        %819 = vmatprep.subr.bf16.mxu0 0
        %820 = vmatpush1.bf16.xpose.msra.mxu0 0
        %821 = vmatprep.subr.bf16.mxu0 0
        %822 = vmatpush1.bf16.xpose.msra.mxu0 %v805
        %823 = vmatprep.subr.bf16.mxu0 0
        %824 = vmatpush2.bf16.xpose.msra.mxu0 0
        %825 = vmatprep.subr.bf16.mxu0 0
        %826 = vmatpush2.bf16.xpose.msra.mxu0 0
        %827 = vmatprep.subr.bf16.mxu0 0
        %828 = vmatpush2.bf16.xpose.msra.mxu0 0
        %829 = vmatprep.subr.bf16.mxu0 0
        %830 = vmatpush2.bf16.xpose.msra.mxu0 0
        %831 = vmatprep.subr.bf16.mxu0 0
        %832 = vmatpush2.bf16.xpose.msra.mxu0 0
        %833 = vmatprep.subr.bf16.mxu0 0
        %834 = vmatpush2.bf16.xpose.msra.mxu0 0
        %835 = vmatprep.subr.bf16.mxu0 0
        %836 = vmatpush2.bf16.xpose.msra.mxu0 0
        %837 = vmatprep.subr.bf16.mxu0 0
        %838 = vmatpush2.bf16.xpose.msra.mxu0 0
        %839 = vmatprep.mubr.bf16.mxu0 0
        %840 = vmatmul.mubr.bf16.gmra.mxu0 %v802
        %v841 = vpop.f32.mrf.mxu0
        %v842 = vadd.f32 0.0, %v841
        %v843 = vpop.f32.mrf.mxu0
        %v844 = vpop.f32.mrf.mxu0
        %v845 = vpop.f32.mrf.mxu0
        %846 = vdwg.mxu0
        %v847 = vsel %vm684, %v842, -inf
        %848 = vmax.xlane.f32.xlu0 %v847
        %v849 = vpop.xlane.xlu0 %848
        %v850 = vsub.f32 %v842, %v849
        %v851 = vmul.f32 %v850, 1.442695
        %v852 = vpow.pop %v851
        %v853 = vsel %vm684, %v852, 0.0
        %854 = vadd.xlane.f32.xlu0 %v853
        %v855 = vpop.xlane.xlu0 %854
        %v856 = vrcp.pop %v855
        %v857 = vmul.f32 %v852, %v856
        %v858 = vpack.c.bf16 %v857, %v857
        %v860 = vunpack.c.l.b16 %v614
        %v861 = vpack.c.b16 %v860, %v860
        %862 = vrot.lane.b32.xlu0 %v861, 120
        %v863 = vpop.permute.xlu0 %862
        %v865 = vsel %vm684, %v858, 0
        %v868 = vsel %vm746, %v863, 0
        %870 = vmatprep.subr.bf16.mxu0 0
        %871 = vmatpush1.bf16.msra.mxu0 0
        %872 = vmatprep.subr.bf16.mxu0 0
        %873 = vmatpush1.bf16.msra.mxu0 0
        %874 = vmatprep.subr.bf16.mxu0 0
        %875 = vmatpush1.bf16.msra.mxu0 0
        %876 = vmatprep.subr.bf16.mxu0 0
        %877 = vmatpush1.bf16.msra.mxu0 0
        %878 = vmatprep.subr.bf16.mxu0 0
        %879 = vmatpush1.bf16.msra.mxu0 0
        %880 = vmatprep.subr.bf16.mxu0 0
        %881 = vmatpush1.bf16.msra.mxu0 0
        %882 = vmatprep.subr.bf16.mxu0 0
        %883 = vmatpush1.bf16.msra.mxu0 0
        %884 = vmatprep.subr.bf16.mxu0 0
        %885 = vmatpush1.bf16.msra.mxu0 %v868
        %886 = vmatprep.subr.bf16.mxu0 0
        %887 = vmatpush2.bf16.msra.mxu0 0
        %888 = vmatprep.subr.bf16.mxu0 0
        %889 = vmatpush2.bf16.msra.mxu0 0
        %890 = vmatprep.subr.bf16.mxu0 0
        %891 = vmatpush2.bf16.msra.mxu0 0
        %892 = vmatprep.subr.bf16.mxu0 0
        %893 = vmatpush2.bf16.msra.mxu0 0
        %894 = vmatprep.subr.bf16.mxu0 0
        %895 = vmatpush2.bf16.msra.mxu0 0
        %896 = vmatprep.subr.bf16.mxu0 0
        %897 = vmatpush2.bf16.msra.mxu0 0
        %898 = vmatprep.subr.bf16.mxu0 0
        %899 = vmatpush2.bf16.msra.mxu0 0
        %900 = vmatprep.subr.bf16.mxu0 0
        %901 = vmatpush2.bf16.msra.mxu0 0
        %902 = vmatprep.mubr.bf16.mxu0 0
        %903 = vmatmul.mubr.bf16.gmra.mxu0 %v865
        %v904 = vpop.f32.mrf.mxu0
        %v905 = vadd.f32 0.0, %v904
        %v906 = vpop.f32.mrf.mxu0
        %v907 = vpop.f32.mrf.mxu0
        %v908 = vpop.f32.mrf.mxu0
        %909 = vdwg.mxu0
        %v910 = vpack.c.bf16 %v905, %v905
        %v912 = vunpack.c.l.b16 %v910
        %v913 = vpack.c.b16 %v912, %v912
        %914 = vrot.lane.b32.xlu0 %v913, 8
        %v915 = vpop.permute.xlu0 %914
        %vm917 = vcmask 126016
        %918 = vst.msk [vmem:[#allocation2] sm:$0xf] %vm917, %v915
        %919 = vrot.lane.b32.xlu0 %v683, 112
        %v920 = vpop.permute.xlu0 %919
        %921 = vrot.lane.b32.xlu0 %v798, 112
        %v922 = vpop.permute.xlu0 %921
        %v924 = vsel %vm684, %v920, 0
        %v927 = vsel %vm684, %v922, 0
        %929 = vmatprep.subr.bf16.mxu0 0
        %930 = vmatpush1.bf16.xpose.msra.mxu0 0
        %931 = vmatprep.subr.bf16.mxu0 0
        %932 = vmatpush1.bf16.xpose.msra.mxu0 0
        %933 = vmatprep.subr.bf16.mxu0 0
        %934 = vmatpush1.bf16.xpose.msra.mxu0 0
        %935 = vmatprep.subr.bf16.mxu0 0
        %936 = vmatpush1.bf16.xpose.msra.mxu0 0
        %937 = vmatprep.subr.bf16.mxu0 0
        %938 = vmatpush1.bf16.xpose.msra.mxu0 0
        %939 = vmatprep.subr.bf16.mxu0 0
        %940 = vmatpush1.bf16.xpose.msra.mxu0 0
        %941 = vmatprep.subr.bf16.mxu0 0
        %942 = vmatpush1.bf16.xpose.msra.mxu0 0
        %943 = vmatprep.subr.bf16.mxu0 0
        %944 = vmatpush1.bf16.xpose.msra.mxu0 %v927
        %945 = vmatprep.subr.bf16.mxu0 0
        %946 = vmatpush2.bf16.xpose.msra.mxu0 0
        %947 = vmatprep.subr.bf16.mxu0 0
        %948 = vmatpush2.bf16.xpose.msra.mxu0 0
        %949 = vmatprep.subr.bf16.mxu0 0
        %950 = vmatpush2.bf16.xpose.msra.mxu0 0
        %951 = vmatprep.subr.bf16.mxu0 0
        %952 = vmatpush2.bf16.xpose.msra.mxu0 0
        %953 = vmatprep.subr.bf16.mxu0 0
        %954 = vmatpush2.bf16.xpose.msra.mxu0 0
        %955 = vmatprep.subr.bf16.mxu0 0
        %956 = vmatpush2.bf16.xpose.msra.mxu0 0
        %957 = vmatprep.subr.bf16.mxu0 0
        %958 = vmatpush2.bf16.xpose.msra.mxu0 0
        %959 = vmatprep.subr.bf16.mxu0 0
        %960 = vmatpush2.bf16.xpose.msra.mxu0 0
        %961 = vmatprep.mubr.bf16.mxu0 0
        %962 = vmatmul.mubr.bf16.gmra.mxu0 %v924
        %v963 = vpop.f32.mrf.mxu0
        %v964 = vadd.f32 0.0, %v963
        %v965 = vpop.f32.mrf.mxu0
        %v966 = vpop.f32.mrf.mxu0
        %v967 = vpop.f32.mrf.mxu0
        %968 = vdwg.mxu0
        %v969 = vsel %vm684, %v964, -inf
        %970 = vmax.xlane.f32.xlu0 %v969
        %v971 = vpop.xlane.xlu0 %970
        %v972 = vsub.f32 %v964, %v971
        %v973 = vmul.f32 %v972, 1.442695
        %v974 = vpow.pop %v973
        %v975 = vsel %vm684, %v974, 0.0
        %976 = vadd.xlane.f32.xlu0 %v975
        %v977 = vpop.xlane.xlu0 %976
        %v978 = vrcp.pop %v977
        %v979 = vmul.f32 %v974, %v978
        %v980 = vpack.c.bf16 %v979, %v979
        %981 = vrot.lane.b32.xlu0 %v861, 112
        %v982 = vpop.permute.xlu0 %981
        %v984 = vsel %vm684, %v980, 0
        %v987 = vsel %vm746, %v982, 0
        %989 = vmatprep.subr.bf16.mxu0 0
        %990 = vmatpush1.bf16.msra.mxu0 0
        %991 = vmatprep.subr.bf16.mxu0 0
        %992 = vmatpush1.bf16.msra.mxu0 0
        %993 = vmatprep.subr.bf16.mxu0 0
        %994 = vmatpush1.bf16.msra.mxu0 0
        %995 = vmatprep.subr.bf16.mxu0 0
        %996 = vmatpush1.bf16.msra.mxu0 0
        %997 = vmatprep.subr.bf16.mxu0 0
        %998 = vmatpush1.bf16.msra.mxu0 0
        %999 = vmatprep.subr.bf16.mxu0 0
        %1000 = vmatpush1.bf16.msra.mxu0 0
        %1001 = vmatprep.subr.bf16.mxu0 0
        %1002 = vmatpush1.bf16.msra.mxu0 0
        %1003 = vmatprep.subr.bf16.mxu0 0
        %1004 = vmatpush1.bf16.msra.mxu0 %v987
        %1005 = vmatprep.subr.bf16.mxu0 0
        %1006 = vmatpush2.bf16.msra.mxu0 0
        %1007 = vmatprep.subr.bf16.mxu0 0
        %1008 = vmatpush2.bf16.msra.mxu0 0
        %1009 = vmatprep.subr.bf16.mxu0 0
        %1010 = vmatpush2.bf16.msra.mxu0 0
        %1011 = vmatprep.subr.bf16.mxu0 0
        %1012 = vmatpush2.bf16.msra.mxu0 0
        %1013 = vmatprep.subr.bf16.mxu0 0
        %1014 = vmatpush2.bf16.msra.mxu0 0
        %1015 = vmatprep.subr.bf16.mxu0 0
        %1016 = vmatpush2.bf16.msra.mxu0 0
        %1017 = vmatprep.subr.bf16.mxu0 0
        %1018 = vmatpush2.bf16.msra.mxu0 0
        %1019 = vmatprep.subr.bf16.mxu0 0
        %1020 = vmatpush2.bf16.msra.mxu0 0
        %1021 = vmatprep.mubr.bf16.mxu0 0
        %1022 = vmatmul.mubr.bf16.gmra.mxu0 %v984
        %v1023 = vpop.f32.mrf.mxu0
        %v1024 = vadd.f32 0.0, %v1023
        %v1025 = vpop.f32.mrf.mxu0
        %v1026 = vpop.f32.mrf.mxu0
        %v1027 = vpop.f32.mrf.mxu0
        %1028 = vdwg.mxu0
        %v1029 = vpack.c.bf16 %v1024, %v1024
        %v1031 = vunpack.c.l.b16 %v1029
        %v1032 = vpack.c.b16 %v1031, %v1031
        %1033 = vrot.lane.b32.xlu0 %v1032, 16
        %v1034 = vpop.permute.xlu0 %1033
        %vm1036 = vcmask 191616
        %1037 = vst.msk [vmem:[#allocation2] sm:$0xf] %vm1036, %v1034
        %1038 = vrot.lane.b32.xlu0 %v683, 104
        %v1039 = vpop.permute.xlu0 %1038
        %1040 = vrot.lane.b32.xlu0 %v798, 104
        %v1041 = vpop.permute.xlu0 %1040
        %v1043 = vsel %vm684, %v1039, 0
        %v1046 = vsel %vm684, %v1041, 0
        %1048 = vmatprep.subr.bf16.mxu0 0
        %1049 = vmatpush1.bf16.xpose.msra.mxu0 0
        %1050 = vmatprep.subr.bf16.mxu0 0
        %1051 = vmatpush1.bf16.xpose.msra.mxu0 0
        %1052 = vmatprep.subr.bf16.mxu0 0
        %1053 = vmatpush1.bf16.xpose.msra.mxu0 0
        %1054 = vmatprep.subr.bf16.mxu0 0
        %1055 = vmatpush1.bf16.xpose.msra.mxu0 0
        %1056 = vmatprep.subr.bf16.mxu0 0
        %1057 = vmatpush1.bf16.xpose.msra.mxu0 0
        %1058 = vmatprep.subr.bf16.mxu0 0
        %1059 = vmatpush1.bf16.xpose.msra.mxu0 0
        %1060 = vmatprep.subr.bf16.mxu0 0
        %1061 = vmatpush1.bf16.xpose.msra.mxu0 0
        %1062 = vmatprep.subr.bf16.mxu0 0
        %1063 = vmatpush1.bf16.xpose.msra.mxu0 %v1046
        %1064 = vmatprep.subr.bf16.mxu0 0
        %1065 = vmatpush2.bf16.xpose.msra.mxu0 0
        %1066 = vmatprep.subr.bf16.mxu0 0
        %1067 = vmatpush2.bf16.xpose.msra.mxu0 0
        %1068 = vmatprep.subr.bf16.mxu0 0
        %1069 = vmatpush2.bf16.xpose.msra.mxu0 0
        %1070 = vmatprep.subr.bf16.mxu0 0
        %1071 = vmatpush2.bf16.xpose.msra.mxu0 0
        %1072 = vmatprep.subr.bf16.mxu0 0
        %1073 = vmatpush2.bf16.xpose.msra.mxu0 0
        %1074 = vmatprep.subr.bf16.mxu0 0
        %1075 = vmatpush2.bf16.xpose.msra.mxu0 0
        %1076 = vmatprep.subr.bf16.mxu0 0
        %1077 = vmatpush2.bf16.xpose.msra.mxu0 0
        %1078 = vmatprep.subr.bf16.mxu0 0
        %1079 = vmatpush2.bf16.xpose.msra.mxu0 0
        %1080 = vmatprep.mubr.bf16.mxu0 0
        %1081 = vmatmul.mubr.bf16.gmra.mxu0 %v1043
        %v1082 = vpop.f32.mrf.mxu0
        %v1083 = vadd.f32 0.0, %v1082
        %v1084 = vpop.f32.mrf.mxu0
        %v1085 = vpop.f32.mrf.mxu0
        %v1086 = vpop.f32.mrf.mxu0
        %1087 = vdwg.mxu0
        %v1088 = vsel %vm684, %v1083, -inf
        %1089 = vmax.xlane.f32.xlu0 %v1088
        %v1090 = vpop.xlane.xlu0 %1089
        %v1091 = vsub.f32 %v1083, %v1090
        %v1092 = vmul.f32 %v1091, 1.442695
        %v1093 = vpow.pop %v1092
        %v1094 = vsel %vm684, %v1093, 0.0
        %1095 = vadd.xlane.f32.xlu0 %v1094
        %v1096 = vpop.xlane.xlu0 %1095
        %v1097 = vrcp.pop %v1096
        %v1098 = vmul.f32 %v1093, %v1097
        %v1099 = vpack.c.bf16 %v1098, %v1098
        %1100 = vrot.lane.b32.xlu0 %v861, 104
        %v1101 = vpop.permute.xlu0 %1100
        %v1103 = vsel %vm684, %v1099, 0
        %v1106 = vsel %vm746, %v1101, 0
        %1108 = vmatprep.subr.bf16.mxu0 0
        %1109 = vmatpush1.bf16.msra.mxu0 0
        %1110 = vmatprep.subr.bf16.mxu0 0
        %1111 = vmatpush1.bf16.msra.mxu0 0
        %1112 = vmatprep.subr.bf16.mxu0 0
        %1113 = vmatpush1.bf16.msra.mxu0 0
        %1114 = vmatprep.subr.bf16.mxu0 0
        %1115 = vmatpush1.bf16.msra.mxu0 0
        %1116 = vmatprep.subr.bf16.mxu0 0
        %1117 = vmatpush1.bf16.msra.mxu0 0
        %1118 = vmatprep.subr.bf16.mxu0 0
        %1119 = vmatpush1.bf16.msra.mxu0 0
        %1120 = vmatprep.subr.bf16.mxu0 0
        %1121 = vmatpush1.bf16.msra.mxu0 0
        %1122 = vmatprep.subr.bf16.mxu0 0
        %1123 = vmatpush1.bf16.msra.mxu0 %v1106
        %1124 = vmatprep.subr.bf16.mxu0 0
        %1125 = vmatpush2.bf16.msra.mxu0 0
        %1126 = vmatprep.subr.bf16.mxu0 0
        %1127 = vmatpush2.bf16.msra.mxu0 0
        %1128 = vmatprep.subr.bf16.mxu0 0
        %1129 = vmatpush2.bf16.msra.mxu0 0
        %1130 = vmatprep.subr.bf16.mxu0 0
        %1131 = vmatpush2.bf16.msra.mxu0 0
        %1132 = vmatprep.subr.bf16.mxu0 0
        %1133 = vmatpush2.bf16.msra.mxu0 0
        %1134 = vmatprep.subr.bf16.mxu0 0
        %1135 = vmatpush2.bf16.msra.mxu0 0
        %1136 = vmatprep.subr.bf16.mxu0 0
        %1137 = vmatpush2.bf16.msra.mxu0 0
        %1138 = vmatprep.subr.bf16.mxu0 0
        %1139 = vmatpush2.bf16.msra.mxu0 0
        %1140 = vmatprep.mubr.bf16.mxu0 0
        %1141 = vmatmul.mubr.bf16.gmra.mxu0 %v1103
        %v1142 = vpop.f32.mrf.mxu0
        %v1143 = vadd.f32 0.0, %v1142
        %v1144 = vpop.f32.mrf.mxu0
        %v1145 = vpop.f32.mrf.mxu0
        %v1146 = vpop.f32.mrf.mxu0
        %1147 = vdwg.mxu0
        %v1148 = vpack.c.bf16 %v1143, %v1143
        %v1150 = vunpack.c.l.b16 %v1148
        %v1151 = vpack.c.b16 %v1150, %v1150
        %1152 = vrot.lane.b32.xlu0 %v1151, 24
        %v1153 = vpop.permute.xlu0 %1152
        %vm1155 = vcmask 257216
        %1156 = vst.msk [vmem:[#allocation2] sm:$0xf] %vm1155, %v1153
        %v1157 = vld [vmem:[#allocation2] sm:$0xf]
        %v1158 = vld [vmem:[%s5] sm:$0xf]
        %v1159 = vld [vmem:[%s5 + $0x4] sm:$0xf]
        %v1160 = vld [vmem:[%s5 + $0x8] sm:$0xf]
        %v1161 = vld [vmem:[%s5 + $0xc] sm:$0xf]
        %v1162 = vld [vmem:[%s6] sm:$0x1]
        %v1164 = vlaneseq
        %v1165 = vshrl.u32 %v1164, 7
        %v1166 = vsub.s32 0, %v1165
        %v1167 = vrot.slane %v1162, %v1166
        %v1173 = vunpack.c.l.b16 %v1158
        %v1174 = vunpack.c.l.b16 %v1159
        %v1175 = vunpack.c.l.b16 %v1160
        %v1176 = vunpack.c.l.b16 %v1161
        %v1177 = vpack.c.b16 %v1174, %v1173
        %v1178 = vpack.c.b16 %v1176, %v1175
        %v1182 = vsel %vm638, %v1157, 0
        %1184 = vmatprep.subr.bf16.mxu0 0
        %1185 = vmatpush1.bf16.msra.mxu0 0
        %1186 = vmatprep.subr.bf16.mxu0 0
        %1187 = vmatpush1.bf16.msra.mxu0 0
        %1188 = vmatprep.subr.bf16.mxu0 0
        %1189 = vmatpush1.bf16.msra.mxu0 0
        %1190 = vmatprep.subr.bf16.mxu0 0
        %1191 = vmatpush1.bf16.msra.mxu0 0
        %1192 = vmatprep.subr.bf16.mxu0 0
        %1193 = vmatpush1.bf16.msra.mxu0 0
        %1194 = vmatprep.subr.bf16.mxu0 0
        %1195 = vmatpush1.bf16.msra.mxu0 0
        %1196 = vmatprep.subr.bf16.mxu0 0
        %1197 = vmatpush1.bf16.msra.mxu0 %v1178
        %1198 = vmatprep.subr.bf16.mxu0 0
        %1199 = vmatpush1.bf16.msra.mxu0 %v1177
        %1200 = vmatprep.subr.bf16.mxu0 0
        %1201 = vmatpush2.bf16.msra.mxu0 0
        %1202 = vmatprep.subr.bf16.mxu0 0
        %1203 = vmatpush2.bf16.msra.mxu0 0
        %1204 = vmatprep.subr.bf16.mxu0 0
        %1205 = vmatpush2.bf16.msra.mxu0 0
        %1206 = vmatprep.subr.bf16.mxu0 0
        %1207 = vmatpush2.bf16.msra.mxu0 0
        %1208 = vmatprep.subr.bf16.mxu0 0
        %1209 = vmatpush2.bf16.msra.mxu0 0
        %1210 = vmatprep.subr.bf16.mxu0 0
        %1211 = vmatpush2.bf16.msra.mxu0 0
        %1212 = vmatprep.subr.bf16.mxu0 0
        %1213 = vmatpush2.bf16.msra.mxu0 0
        %1214 = vmatprep.subr.bf16.mxu0 0
        %1215 = vmatpush2.bf16.msra.mxu0 0
        %1216 = vmatprep.mubr.bf16.mxu0 0
        %1217 = vmatmul.mubr.bf16.gmra.mxu0 %v1182
        %v1218 = vpop.f32.mrf.mxu0
        %v1219 = vadd.f32 %v1167, %v1218
        %v1220 = vpop.f32.mrf.mxu0
        %v1221 = vpop.f32.mrf.mxu0
        %v1222 = vpop.f32.mrf.mxu0
        %1223 = vdwg.mxu0
        %v1224 = vld [vmem:[%s7] sm:$0x1]
        %v1225 = vld [vmem:[%s8] sm:$0x1]
        %v1226 = vsel %vm638, %v1219, 0.0
        %1227 = vadd.xlane.f32.xlu0 %v1226
        %v1228 = vpop.xlane.xlu0 %1227
        %v1229 = vrcp.pop 32.0
        %v1230 = vmul.f32 %v1228, %v1229
        %v1231 = vsub.f32 %v1219, %v1230
        %v1232 = vmul.f32 %v1231, %v1231
        %v1233 = vsel %vm638, %v1232, 0.0
        %1234 = vadd.xlane.f32.xlu0 %v1233
        %v1235 = vpop.xlane.xlu0 %1234
        %v1236 = vmul.f32 %v1235, %v1229
        %v1237 = vadd.f32 %v1236, 1e-05
        %v1238 = vrsqrt.pop %v1237
        %v1239 = vmul.f32 %v1231, %v1238
        %v1241 = vlaneseq
        %v1242 = vshrl.u32 %v1241, 7
        %v1243 = vsub.s32 0, %v1242
        %v1244 = vrot.slane %v1224, %v1243
        %v1246 = vmul.f32 %v1239, %v1244
        %v1248 = vlaneseq
        %v1249 = vshrl.u32 %v1248, 7
        %v1250 = vsub.s32 0, %v1249
        %v1251 = vrot.slane %v1225, %v1250
        %v1253 = vadd.f32 %v1246, %v1251
        %v1254 = vpack.c.bf16 %v1253, %v1253
        %v1255 = vld [vmem:[%s9] sm:$0xf]
        %v1256 = vld [vmem:[%s9 + $0x4] sm:$0xf]
        %v1257 = vld [vmem:[%s9 + $0x8] sm:$0xf]
        %v1258 = vld [vmem:[%s9 + $0xc] sm:$0xf]
        %v1259 = vld [vmem:[#allocation9] sm:$0x1]
        %v1261 = vlaneseq
        %v1262 = vshrl.u32 %v1261, 7
        %v1263 = vsub.s32 0, %v1262
        %v1264 = vrot.slane %v1259, %v1263
        %v1270 = vunpack.c.l.b16 %v1255
        %v1271 = vunpack.c.l.b16 %v1256
        %v1272 = vunpack.c.l.b16 %v1257
        %v1273 = vunpack.c.l.b16 %v1258
        %v1274 = vpack.c.b16 %v1271, %v1270
        %v1275 = vpack.c.b16 %v1273, %v1272
        %v1279 = vsel %vm638, %v1254, 0
        %1281 = vmatprep.subr.bf16.mxu0 0
        %1282 = vmatpush1.bf16.msra.mxu0 0
        %1283 = vmatprep.subr.bf16.mxu0 0
        %1284 = vmatpush1.bf16.msra.mxu0 0
        %1285 = vmatprep.subr.bf16.mxu0 0
        %1286 = vmatpush1.bf16.msra.mxu0 0
        %1287 = vmatprep.subr.bf16.mxu0 0
        %1288 = vmatpush1.bf16.msra.mxu0 0
        %1289 = vmatprep.subr.bf16.mxu0 0
        %1290 = vmatpush1.bf16.msra.mxu0 0
        %1291 = vmatprep.subr.bf16.mxu0 0
        %1292 = vmatpush1.bf16.msra.mxu0 0
        %1293 = vmatprep.subr.bf16.mxu0 0
        %1294 = vmatpush1.bf16.msra.mxu0 %v1275
        %1295 = vmatprep.subr.bf16.mxu0 0
        %1296 = vmatpush1.bf16.msra.mxu0 %v1274
        %1297 = vmatprep.subr.bf16.mxu0 0
        %1298 = vmatpush2.bf16.msra.mxu0 0
        %1299 = vmatprep.subr.bf16.mxu0 0
        %1300 = vmatpush2.bf16.msra.mxu0 0
        %1301 = vmatprep.subr.bf16.mxu0 0
        %1302 = vmatpush2.bf16.msra.mxu0 0
        %1303 = vmatprep.subr.bf16.mxu0 0
        %1304 = vmatpush2.bf16.msra.mxu0 0
        %1305 = vmatprep.subr.bf16.mxu0 0
        %1306 = vmatpush2.bf16.msra.mxu0 0
        %1307 = vmatprep.subr.bf16.mxu0 0
        %1308 = vmatpush2.bf16.msra.mxu0 0
        %1309 = vmatprep.subr.bf16.mxu0 0
        %1310 = vmatpush2.bf16.msra.mxu0 0
        %1311 = vmatprep.subr.bf16.mxu0 0
        %1312 = vmatpush2.bf16.msra.mxu0 0
        %1313 = vmatprep.mubr.bf16.mxu0 0
        %1314 = vmatmul.mubr.bf16.gmra.mxu0 %v1279
        %v1315 = vpop.f32.mrf.mxu0
        %v1316 = vadd.f32 %v1264, %v1315
        %v1317 = vpop.f32.mrf.mxu0
        %v1318 = vpop.f32.mrf.mxu0
        %v1319 = vpop.f32.mrf.mxu0
        %1320 = vdwg.mxu0
        %v1321 = vmax.f32 %v1316, 0.0
        %v1322 = vpack.c.bf16 %v1321, %v1321
        %v1323 = vld [vmem:[%s11] sm:$0xf]
        %v1324 = vld [vmem:[%s11 + $0x4] sm:$0xf]
        %v1325 = vld [vmem:[%s11 + $0x8] sm:$0xf]
        %v1326 = vld [vmem:[%s11 + $0xc] sm:$0xf]
        %v1327 = vld [vmem:[%s11 + $0x10] sm:$0xf]
        %v1328 = vld [vmem:[%s11 + $0x14] sm:$0xf]
        %v1329 = vld [vmem:[%s11 + $0x18] sm:$0xf]
        %v1330 = vld [vmem:[%s11 + $0x1c] sm:$0xf]
        %v1331 = vld [vmem:[%s12] sm:$0x1]
        %v1333 = vlaneseq
        %v1334 = vshrl.u32 %v1333, 7
        %v1335 = vsub.s32 0, %v1334
        %v1336 = vrot.slane %v1331, %v1335
        %v1346 = vunpack.c.l.b16 %v1323
        %v1347 = vunpack.c.l.b16 %v1324
        %v1348 = vunpack.c.l.b16 %v1325
        %v1349 = vunpack.c.l.b16 %v1326
        %v1350 = vunpack.c.l.b16 %v1327
        %v1351 = vunpack.c.l.b16 %v1328
        %v1352 = vunpack.c.l.b16 %v1329
        %v1353 = vunpack.c.l.b16 %v1330
        %v1354 = vpack.c.b16 %v1347, %v1346
        %v1355 = vpack.c.b16 %v1349, %v1348
        %v1356 = vpack.c.b16 %v1351, %v1350
        %v1357 = vpack.c.b16 %v1353, %v1352
        %vm1362 = vcmask 523264
        %v1364 = vsel %vm1362, %v1322, 0
        %1366 = vmatprep.subr.bf16.mxu0 0
        %1367 = vmatpush1.bf16.msra.mxu0 0
        %1368 = vmatprep.subr.bf16.mxu0 0
        %1369 = vmatpush1.bf16.msra.mxu0 0
        %1370 = vmatprep.subr.bf16.mxu0 0
        %1371 = vmatpush1.bf16.msra.mxu0 0
        %1372 = vmatprep.subr.bf16.mxu0 0
        %1373 = vmatpush1.bf16.msra.mxu0 0
        %1374 = vmatprep.subr.bf16.mxu0 0
        %1375 = vmatpush1.bf16.msra.mxu0 %v1357
        %1376 = vmatprep.subr.bf16.mxu0 0
        %1377 = vmatpush1.bf16.msra.mxu0 %v1356
        %1378 = vmatprep.subr.bf16.mxu0 0
        %1379 = vmatpush1.bf16.msra.mxu0 %v1355
        %1380 = vmatprep.subr.bf16.mxu0 0
        %1381 = vmatpush1.bf16.msra.mxu0 %v1354
        %1382 = vmatprep.subr.bf16.mxu0 0
        %1383 = vmatpush2.bf16.msra.mxu0 0
        %1384 = vmatprep.subr.bf16.mxu0 0
        %1385 = vmatpush2.bf16.msra.mxu0 0
        %1386 = vmatprep.subr.bf16.mxu0 0
        %1387 = vmatpush2.bf16.msra.mxu0 0
        %1388 = vmatprep.subr.bf16.mxu0 0
        %1389 = vmatpush2.bf16.msra.mxu0 0
        %1390 = vmatprep.subr.bf16.mxu0 0
        %1391 = vmatpush2.bf16.msra.mxu0 0
        %1392 = vmatprep.subr.bf16.mxu0 0
        %1393 = vmatpush2.bf16.msra.mxu0 0
        %1394 = vmatprep.subr.bf16.mxu0 0
        %1395 = vmatpush2.bf16.msra.mxu0 0
        %1396 = vmatprep.subr.bf16.mxu0 0
        %1397 = vmatpush2.bf16.msra.mxu0 0
        %1398 = vmatprep.mubr.bf16.mxu0 0
        %1399 = vmatmul.mubr.bf16.gmra.mxu0 %v1364
        %v1400 = vpop.f32.mrf.mxu0
        %v1401 = vadd.f32 %v1336, %v1400
        %v1402 = vpop.f32.mrf.mxu0
        %v1403 = vpop.f32.mrf.mxu0
        %v1404 = vpop.f32.mrf.mxu0
        %1405 = vdwg.mxu0
        %v1406 = vadd.f32 %v1401, %v1253
        %v1407 = vld [vmem:[%s13] sm:$0x1]
        %v1408 = vld [vmem:[%s14] sm:$0x1]
        %v1409 = vsel %vm638, %v1406, 0.0
        %1410 = vadd.xlane.f32.xlu0 %v1409
        %v1411 = vpop.xlane.xlu0 %1410
        %v1412 = vmul.f32 %v1411, %v1229
        %v1413 = vsub.f32 %v1406, %v1412
        %v1414 = vmul.f32 %v1413, %v1413
        %v1415 = vsel %vm638, %v1414, 0.0
        %1416 = vadd.xlane.f32.xlu0 %v1415
        %v1417 = vpop.xlane.xlu0 %1416
        %v1418 = vmul.f32 %v1417, %v1229
        %v1419 = vadd.f32 %v1418, 1e-05
        %v1420 = vrsqrt.pop %v1419
        %v1421 = vmul.f32 %v1413, %v1420
        %v1423 = vlaneseq
        %v1424 = vshrl.u32 %v1423, 7
        %v1425 = vsub.s32 0, %v1424
        %v1426 = vrot.slane %v1407, %v1425
        %v1428 = vmul.f32 %v1421, %v1426
        %v1430 = vlaneseq
        %v1431 = vshrl.u32 %v1430, 7
        %v1432 = vsub.s32 0, %v1431
        %v1433 = vrot.slane %v1408, %v1432
        %v1435 = vadd.f32 %v1428, %v1433
        %1436 = vst.msk [vmem:[%s610] sm:$0xff] %vm638, %v1435
        %s1437 = sand.u32 %s390, 1
        %s1438 = scalar_lea.sflag [#allocation5], %s1437
        %s1439 = sand.u32 %s390, 1
        %s1440 = smul.addr %s1439, 8
        %s1441 = scalar_lea.vmem [#allocation11], %s1440
        // Predicated region
        $region97: #{tpu_custom_call.1} parent=79 // pred_check
          %p1442 = pneg %p400
        $region98: #{tpu_custom_call.1} parent=79 // pred_check_branch
          %1444 = sbr.rel (%p1442) target = $region100
        $region99: #{tpu_custom_call.1} parent=79 // pred_region
          %s1446 = ssub.s32 128, 128
          %1447 = vsyncadd %s1438, %s1446
          %s1448 = sadd.s32 %s41, %s40
          %s1449 = smul.addr %s1448, 128
          %s1450 = scalar_lea.hbm %s15, %s1449
          %s1452 = sshll.u32 %s1441, 4
          %s1453 = int_to_ptr.vmem [resolvable:$true] %s1452
          %1455 = dma.vmem_to_hbm [thread:$0]  %s1453, 128, %s1450, %s1438
        $region100: #{tpu_custom_call.1} parent=79 // pred_fallthru
          _
      $region80: #{tpu_custom_call.1} parent=5 // pred_fallthru
        _
      %p1456 = scmp.le.s32.totalorder 2, %s31
      // Predicated region
      $region101: #{tpu_custom_call.1} parent=5 // pred_check
        %p1457 = pneg %p1456
      $region102: #{tpu_custom_call.1} parent=5 // pred_check_branch
        %1459 = sbr.rel (%p1457) target = $region104
      $region103: #{tpu_custom_call.1} parent=5 // pred_region
        %s1460 = ssub.s32 %s31, 2
        // Predicated region
        $region105: #{tpu_custom_call.1} parent=103 // pred_check
          %p1461 = pneg %p406
        $region106: #{tpu_custom_call.1} parent=103 // pred_check_branch
          %1463 = sbr.rel (%p1461) target = $region108
        $region107: #{tpu_custom_call.1} parent=103 // pred_region
          %s1464 = sand.u32 %s391, 1
          %s1465 = scalar_lea.sflag [#allocation5], %s1464
          %s1466 = sand.u32 %s391, 1
          %s1467 = smul.addr %s1466, 8
          %s1468 = scalar_lea.vmem [#allocation11], %s1467
          %1469 = dma.done %s1465, 128
        $region108: #{tpu_custom_call.1} parent=103 // pred_fallthru
          _
      $region104: #{tpu_custom_call.1} parent=5 // pred_fallthru
        _
    $region6: #{tpu_custom_call.1} parent=1 // loop_footer
      %s35 = sadd.s32 1, %s31
    $region7: #{tpu_custom_call.1} parent=1 // loop_footer_branch
      %30 = sbr.rel target = $region3
    $region8: #{tpu_custom_call.1} parent=1 // loop_exit
      _
    %1470 = vsyncpa [#allocation4], 1
    %s1471 = scalar_lea.sflag [#allocation4], 1
    %1472 = vsyncpa %s1471, 1
    %1473 = vsyncpa [#allocation7], 1
    %s1474 = scalar_lea.sflag [#allocation7], 1
    %1475 = vsyncpa %s1474, 1
    %1476 = vsyncpa [#allocation10], 1
    %1477 = vsyncpa [#allocation5], 1
    %s1478 = scalar_lea.sflag [#allocation5], 1
    %1479 = vsyncpa %s1478, 1

// kernel: tpu_custom_call.1
$region0: #{tpu_custom_call.1}
  #allocation0 [shape = 'u32[]', space=smem, size = 0x4, offset = 0x4, fixed_abs, tag = 'smem constant byte address 0x4 - core index']
  #allocation1 [shape = 'u32[144,128]{1,0:T(1,128)}', space=vmem, size = 0x12000, scoped, tag = 'internal scratch']
  #allocation2 [shape = 'bf16[8,32]{1,0:T(8,128)(2,1)}', space=vmem, size = 0x800, scoped, tag = 'scratch operand']
  %s0 = inlined_call_operand.hbm [shape: bf16[2,8,32], index: 0, kind: input, shape index: {}]
  %s1 = inlined_call_operand.hbm [shape: bf16[2,8,32], index: 1, kind: input, shape index: {}]
  %s2 = inlined_call_operand.hbm [shape: bf16[2,8,32], index: 2, kind: input, shape index: {}]
  %s3 = inlined_call_operand.vmem [shape: bf16[32,32], index: 3, kind: input, shape index: {}]
  %s4 = inlined_call_operand.vmem [shape: f32[1,32], index: 4, kind: input, shape index: {}]
  %s5 = inlined_call_operand.vmem [shape: bf16[32,32], index: 5, kind: input, shape index: {}]
  %s6 = inlined_call_operand.vmem [shape: f32[1,32], index: 6, kind: input, shape index: {}]
  %s7 = inlined_call_operand.vmem [shape: f32[1,32], index: 7, kind: input, shape index: {}]
  %s8 = inlined_call_operand.vmem [shape: f32[1,32], index: 8, kind: input, shape index: {}]
  %s9 = inlined_call_operand.vmem [shape: bf16[32,64], index: 9, kind: input, shape index: {}]
  %s10 = inlined_call_operand.hbm [shape: f32[1,64], index: 10, kind: input, shape index: {}]
  %s11 = inlined_call_operand.vmem [shape: bf16[64,32], index: 11, kind: input, shape index: {}]
  %s12 = inlined_call_operand.vmem [shape: f32[1,32], index: 12, kind: input, shape index: {}]
  %s13 = inlined_call_operand.vmem [shape: f32[1,32], index: 13, kind: input, shape index: {}]
  %s14 = inlined_call_operand.vmem [shape: f32[1,32], index: 14, kind: input, shape index: {}]
  %s15 = inlined_call_operand.hbm [shape: f32[2,8,32], index: 15, kind: output, shape index: {}]
  %s16 = sld [smem:[#allocation0]]
  $region109: #{tpu_custom_call.1} parent=0
    _
  %s18 = ssub.s32 1, %s16
  %s19 = scalar_select 0, %s18, %s16
  $region1: #{tpu_custom_call.1} parent=0
    #allocation3 [shape = 'u8[4096]{0}', space=vmem, size = 0x1000, scoped, tag = 'input window, operand 0']
    #allocation4 [shape = 's32[2]{0}', space=sflag, size = 0x8, scoped, tag = 'scoped memory for tpu_custom_call.1']
    #allocation5 [shape = 's32[2]{0}', space=sflag, size = 0x8, scoped, tag = 'scoped memory for tpu_custom_call.1']
    #allocation6 [shape = 'u8[4096]{0}', space=vmem, size = 0x1000, scoped, tag = 'input window, operand 1']
    #allocation7 [shape = 's32[2]{0}', space=sflag, size = 0x8, scoped, tag = 'scoped memory for tpu_custom_call.1']
    #allocation8 [shape = 'u8[4096]{0}', space=vmem, size = 0x1000, scoped, tag = 'input window, operand 2']
    #allocation9 [shape = 'u8[512]{0}', space=vmem, size = 0x400, scoped, tag = 'input window, operand 10, single buffered']
    #allocation10 [shape = 's32[1]{0}', space=sflag, size = 0x4, scoped, tag = 'scoped memory for tpu_custom_call.1']
    #allocation11 [shape = 'u8[8192]{0}', space=vmem, size = 0x2000, scoped, tag = 'output window, operand 0']
    %20 = vsyncpa [#allocation4], 0
    %s21 = scalar_lea.sflag [#allocation4], 1
    %22 = vsyncpa %s21, 0
    %23 = vsyncpa [#allocation7], 0
    %s24 = scalar_lea.sflag [#allocation7], 1
    %25 = vsyncpa %s24, 0
    %26 = vsyncpa [#allocation10], 0
    %27 = vsyncpa [#allocation5], 0
    %s28 = scalar_lea.sflag [#allocation5], 1
    %29 = vsyncpa %s28, 0
    loop: start=0, step=1, limit=4
    $region2: #{tpu_custom_call.1} parent=1 // loop_pre_header
      _
    $region3: #{tpu_custom_call.1} parent=1 // loop_header
      %s31 = sphi 0, %s35
      %p32 = scmp.ge.s32.totalorder %s31, 4
      %s38 = sphi 0, %s50
      %s39 = sphi 0, %s46
      %s40 = sphi 0, %s38
      %s41 = sphi 0, %s39
      %s42 = sphi 0, %s40
      %s43 = sphi 0, %s41
      %s55 = sphi 0, %s57
      %s58 = sphi 0, %s55
      %s59 = sphi 0, %s58
      %s75 = sphi 0, %s59
      %s81 = sphi 0, %s83
      %s84 = sphi 0, %s81
      %s85 = sphi 0, %s84
      %s101 = sphi 0, %s85
      %s107 = sphi 0, %s109
      %s110 = sphi 0, %s107
      %s111 = sphi 0, %s110
      %s127 = sphi 0, %s111
      %s131 = sphi 0, %s131
      %s133 = sphi 0, %s131
      %s134 = sphi 0, %s133
      %s148 = sphi 0, %s134
      %s152 = sphi 0, %s152
      %s154 = sphi 0, %s152
      %s155 = sphi 0, %s154
      %s169 = sphi 0, %s155
      %s173 = sphi 0, %s173
      %s175 = sphi 0, %s173
      %s176 = sphi 0, %s175
      %s190 = sphi 0, %s176
      %s194 = sphi 0, %s194
      %s196 = sphi 0, %s194
      %s197 = sphi 0, %s196
      %s211 = sphi 0, %s197
      %s215 = sphi 0, %s215
      %s217 = sphi 0, %s215
      %s218 = sphi 0, %s217
      %s232 = sphi 0, %s218
      %s236 = sphi 0, %s236
      %s238 = sphi 0, %s236
      %s239 = sphi 0, %s238
      %s253 = sphi 0, %s239
      %s257 = sphi 0, %s257
      %s259 = sphi 0, %s257
      %s260 = sphi 0, %s259
      %s274 = sphi 0, %s260
      %s278 = sphi 0, %s278
      %s280 = sphi 0, %s278
      %s281 = sphi 0, %s280
      %s295 = sphi 0, %s281
      %s299 = sphi 0, %s299
      %s301 = sphi 0, %s299
      %s302 = sphi 0, %s301
      %s316 = sphi 0, %s302
      %s320 = sphi 0, %s320
      %s322 = sphi 0, %s320
      %s323 = sphi 0, %s322
      %s337 = sphi 0, %s323
      %s341 = sphi 0, %s341
      %s343 = sphi 0, %s341
      %s344 = sphi 0, %s343
      %s358 = sphi 0, %s344
      %s362 = sphi 0, %s362
      %s364 = sphi 0, %s362
      %s365 = sphi 0, %s364
      %s379 = sphi 0, %s365
      %s387 = sphi 0, %s389
      %s390 = sphi 0, %s387
      %s391 = sphi 0, %s390
      %s407 = sphi 0, %s391
    $region4: #{tpu_custom_call.1} parent=1 // loop_header_branch
      %34 = sbr.rel (%p32) target = $region8
    $region5: #{tpu_custom_call.1} parent=1 // loop_body
      %s36 = ssub.s32 %s31, 1
      %s37 = ssub.s32 %s31, 2
      %s44 = sadd.s32 1, %s39
      %p45 = scmp.ge.s32.totalorder %s44, 1
      %s46 = scalar_select %p45, 0, %s44
      %s47 = sadd.s32 1, %s38
      %s48 = scalar_select %p45, %s47, %s38
      %p49 = scmp.ge.s32.totalorder %s48, 2
      %s50 = scalar_select %p49, 0, %s48
      %s51 = ssub.s32 %s38, %s50
      %s52 = ssub.s32 %s39, %s46
      %s53 = sor.u32 %s51, %s52
      %p54 = scmp.eq.s32.totalorder %s53, 0
      %s56 = sadd.s32 %s55, 1
      %s57 = scalar_select %p54, %s55, %s56
      %p60 = pneg %p54
      %p61 = scmp.eq.s32.totalorder %s31, 1
      %p62 = por %p60, %p61
      %p63 = scmp.ne.s32.totalorder %s55, %s58
      %p64 = scmp.eq.s32.totalorder %s31, 0
      %p65 = por %p63, %p64
      %p66 = scmp.ne.s32.totalorder %s55, %s58
      %p67 = scmp.eq.s32.totalorder %s36, 1
      %p68 = por %p66, %p67
      %p69 = scmp.ne.s32.totalorder %s58, %s59
      %p70 = scmp.eq.s32.totalorder %s36, 0
      %p71 = por %p69, %p70
      %p72 = scmp.ne.s32.totalorder %s58, %s59
      %p73 = scmp.eq.s32.totalorder %s37, 1
      %p74 = por %p72, %p73
      %p76 = scmp.ne.s32.totalorder %s59, %s75
      %p77 = scmp.eq.s32.totalorder %s37, 0
      %p78 = por %p76, %p77
      %s79 = ssub.s32 %s38, %s50
      %p80 = scmp.eq.s32.totalorder %s79, 0
      %s82 = sadd.s32 %s81, 1
      %s83 = scalar_select %p80, %s81, %s82
      %p86 = pneg %p80
      %p87 = scmp.eq.s32.totalorder %s31, 1
      %p88 = por %p86, %p87
      %p89 = scmp.ne.s32.totalorder %s81, %s84
      %p90 = scmp.eq.s32.totalorder %s31, 0
      %p91 = por %p89, %p90
      %p92 = scmp.ne.s32.totalorder %s81, %s84
      %p93 = scmp.eq.s32.totalorder %s36, 1
      %p94 = por %p92, %p93
      %p95 = scmp.ne.s32.totalorder %s84, %s85
      %p96 = scmp.eq.s32.totalorder %s36, 0
      %p97 = por %p95, %p96
      %p98 = scmp.ne.s32.totalorder %s84, %s85
      %p99 = scmp.eq.s32.totalorder %s37, 1
      %p100 = por %p98, %p99
      %p102 = scmp.ne.s32.totalorder %s85, %s101
      %p103 = scmp.eq.s32.totalorder %s37, 0
      %p104 = por %p102, %p103
      %s105 = ssub.s32 %s38, %s50
      %p106 = scmp.eq.s32.totalorder %s105, 0
      %s108 = sadd.s32 %s107, 1
      %s109 = scalar_select %p106, %s107, %s108
      %p112 = pneg %p106
      %p113 = scmp.eq.s32.totalorder %s31, 1
      %p114 = por %p112, %p113
      %p115 = scmp.ne.s32.totalorder %s107, %s110
      %p116 = scmp.eq.s32.totalorder %s31, 0
      %p117 = por %p115, %p116
      %p118 = scmp.ne.s32.totalorder %s107, %s110
      %p119 = scmp.eq.s32.totalorder %s36, 1
      %p120 = por %p118, %p119
      %p121 = scmp.ne.s32.totalorder %s110, %s111
      %p122 = scmp.eq.s32.totalorder %s36, 0
      %p123 = por %p121, %p122
      %p124 = scmp.ne.s32.totalorder %s110, %s111
      %p125 = scmp.eq.s32.totalorder %s37, 1
      %p126 = por %p124, %p125
      %p128 = scmp.ne.s32.totalorder %s111, %s127
      %p129 = scmp.eq.s32.totalorder %s37, 0
      %p130 = por %p128, %p129
      %s132 = sadd.s32 %s131, 1
      %p135 = scmp.eq.s32.totalorder %s31, 1
      %p136 = scmp.ne.s32.totalorder %s131, %s133
      %p137 = scmp.eq.s32.totalorder %s31, 0
      %p138 = por %p136, %p137
      %p139 = scmp.ne.s32.totalorder %s131, %s133
      %p140 = scmp.eq.s32.totalorder %s36, 1
      %p141 = por %p139, %p140
      %p142 = scmp.ne.s32.totalorder %s133, %s134
      %p143 = scmp.eq.s32.totalorder %s36, 0
      %p144 = por %p142, %p143
      %p145 = scmp.ne.s32.totalorder %s133, %s134
      %p146 = scmp.eq.s32.totalorder %s37, 1
      %p147 = por %p145, %p146
      %p149 = scmp.ne.s32.totalorder %s134, %s148
      %p150 = scmp.eq.s32.totalorder %s37, 0
      %p151 = por %p149, %p150
      %s153 = sadd.s32 %s152, 1
      %p156 = scmp.eq.s32.totalorder %s31, 1
      %p157 = scmp.ne.s32.totalorder %s152, %s154
      %p158 = scmp.eq.s32.totalorder %s31, 0
      %p159 = por %p157, %p158
      %p160 = scmp.ne.s32.totalorder %s152, %s154
      %p161 = scmp.eq.s32.totalorder %s36, 1
      %p162 = por %p160, %p161
      %p163 = scmp.ne.s32.totalorder %s154, %s155
      %p164 = scmp.eq.s32.totalorder %s36, 0
      %p165 = por %p163, %p164
      %p166 = scmp.ne.s32.totalorder %s154, %s155
      %p167 = scmp.eq.s32.totalorder %s37, 1
      %p168 = por %p166, %p167
      %p170 = scmp.ne.s32.totalorder %s155, %s169
      %p171 = scmp.eq.s32.totalorder %s37, 0
      %p172 = por %p170, %p171
      %s174 = sadd.s32 %s173, 1
      %p177 = scmp.eq.s32.totalorder %s31, 1
      %p178 = scmp.ne.s32.totalorder %s173, %s175
      %p179 = scmp.eq.s32.totalorder %s31, 0
      %p180 = por %p178, %p179
      %p181 = scmp.ne.s32.totalorder %s173, %s175
      %p182 = scmp.eq.s32.totalorder %s36, 1
      %p183 = por %p181, %p182
      %p184 = scmp.ne.s32.totalorder %s175, %s176
      %p185 = scmp.eq.s32.totalorder %s36, 0
      %p186 = por %p184, %p185
      %p187 = scmp.ne.s32.totalorder %s175, %s176
      %p188 = scmp.eq.s32.totalorder %s37, 1
      %p189 = por %p187, %p188
      %p191 = scmp.ne.s32.totalorder %s176, %s190
      %p192 = scmp.eq.s32.totalorder %s37, 0
      %p193 = por %p191, %p192
      %s195 = sadd.s32 %s194, 1
      %p198 = scmp.eq.s32.totalorder %s31, 1
      %p199 = scmp.ne.s32.totalorder %s194, %s196
      %p200 = scmp.eq.s32.totalorder %s31, 0
      %p201 = por %p199, %p200
      %p202 = scmp.ne.s32.totalorder %s194, %s196
      %p203 = scmp.eq.s32.totalorder %s36, 1
      %p204 = por %p202, %p203
      %p205 = scmp.ne.s32.totalorder %s196, %s197
      %p206 = scmp.eq.s32.totalorder %s36, 0
      %p207 = por %p205, %p206
      %p208 = scmp.ne.s32.totalorder %s196, %s197
      %p209 = scmp.eq.s32.totalorder %s37, 1
      %p210 = por %p208, %p209
      %p212 = scmp.ne.s32.totalorder %s197, %s211
      %p213 = scmp.eq.s32.totalorder %s37, 0
      %p214 = por %p212, %p213
      %s216 = sadd.s32 %s215, 1
      %p219 = scmp.eq.s32.totalorder %s31, 1
      %p220 = scmp.ne.s32.totalorder %s215, %s217
      %p221 = scmp.eq.s32.totalorder %s31, 0
      %p222 = por %p220, %p221
      %p223 = scmp.ne.s32.totalorder %s215, %s217
      %p224 = scmp.eq.s32.totalorder %s36, 1
      %p225 = por %p223, %p224
      %p226 = scmp.ne.s32.totalorder %s217, %s218
      %p227 = scmp.eq.s32.totalorder %s36, 0
      %p228 = por %p226, %p227
      %p229 = scmp.ne.s32.totalorder %s217, %s218
      %p230 = scmp.eq.s32.totalorder %s37, 1
      %p231 = por %p229, %p230
      %p233 = scmp.ne.s32.totalorder %s218, %s232
      %p234 = scmp.eq.s32.totalorder %s37, 0
      %p235 = por %p233, %p234
      %s237 = sadd.s32 %s236, 1
      %p240 = scmp.eq.s32.totalorder %s31, 1
      %p241 = scmp.ne.s32.totalorder %s236, %s238
      %p242 = scmp.eq.s32.totalorder %s31, 0
      %p243 = por %p241, %p242
      %p244 = scmp.ne.s32.totalorder %s236, %s238
      %p245 = scmp.eq.s32.totalorder %s36, 1
      %p246 = por %p244, %p245
      %p247 = scmp.ne.s32.totalorder %s238, %s239
      %p248 = scmp.eq.s32.totalorder %s36, 0
      %p249 = por %p247, %p248
      %p250 = scmp.ne.s32.totalorder %s238, %s239
      %p251 = scmp.eq.s32.totalorder %s37, 1
      %p252 = por %p250, %p251
      %p254 = scmp.ne.s32.totalorder %s239, %s253
      %p255 = scmp.eq.s32.totalorder %s37, 0
      %p256 = por %p254, %p255
      %s258 = sadd.s32 %s257, 1
      %p261 = scmp.eq.s32.totalorder %s31, 1
      %p262 = scmp.ne.s32.totalorder %s257, %s259
      %p263 = scmp.eq.s32.totalorder %s31, 0
      %p264 = por %p262, %p263
      %p265 = scmp.ne.s32.totalorder %s257, %s259
      %p266 = scmp.eq.s32.totalorder %s36, 1
      %p267 = por %p265, %p266
      %p268 = scmp.ne.s32.totalorder %s259, %s260
      %p269 = scmp.eq.s32.totalorder %s36, 0
      %p270 = por %p268, %p269
      %p271 = scmp.ne.s32.totalorder %s259, %s260
      %p272 = scmp.eq.s32.totalorder %s37, 1
      %p273 = por %p271, %p272
      %p275 = scmp.ne.s32.totalorder %s260, %s274
      %p276 = scmp.eq.s32.totalorder %s37, 0
      %p277 = por %p275, %p276
      %s279 = sadd.s32 %s278, 1
      %p282 = scmp.eq.s32.totalorder %s31, 1
      %p283 = scmp.ne.s32.totalorder %s278, %s280
      %p284 = scmp.eq.s32.totalorder %s31, 0
      %p285 = por %p283, %p284
      %p286 = scmp.ne.s32.totalorder %s278, %s280
      %p287 = scmp.eq.s32.totalorder %s36, 1
      %p288 = por %p286, %p287
      %p289 = scmp.ne.s32.totalorder %s280, %s281
      %p290 = scmp.eq.s32.totalorder %s36, 0
      %p291 = por %p289, %p290
      %p292 = scmp.ne.s32.totalorder %s280, %s281
      %p293 = scmp.eq.s32.totalorder %s37, 1
      %p294 = por %p292, %p293
      %p296 = scmp.ne.s32.totalorder %s281, %s295
      %p297 = scmp.eq.s32.totalorder %s37, 0
      %p298 = por %p296, %p297
      %s300 = sadd.s32 %s299, 1
      %p303 = scmp.eq.s32.totalorder %s31, 1
      %p304 = scmp.ne.s32.totalorder %s299, %s301
      %p305 = scmp.eq.s32.totalorder %s31, 0
      %p306 = por %p304, %p305
      %p307 = scmp.ne.s32.totalorder %s299, %s301
      %p308 = scmp.eq.s32.totalorder %s36, 1
      %p309 = por %p307, %p308
      %p310 = scmp.ne.s32.totalorder %s301, %s302
      %p311 = scmp.eq.s32.totalorder %s36, 0
      %p312 = por %p310, %p311
      %p313 = scmp.ne.s32.totalorder %s301, %s302
      %p314 = scmp.eq.s32.totalorder %s37, 1
      %p315 = por %p313, %p314
      %p317 = scmp.ne.s32.totalorder %s302, %s316
      %p318 = scmp.eq.s32.totalorder %s37, 0
      %p319 = por %p317, %p318
      %s321 = sadd.s32 %s320, 1
      %p324 = scmp.eq.s32.totalorder %s31, 1
      %p325 = scmp.ne.s32.totalorder %s320, %s322
      %p326 = scmp.eq.s32.totalorder %s31, 0
      %p327 = por %p325, %p326
      %p328 = scmp.ne.s32.totalorder %s320, %s322
      %p329 = scmp.eq.s32.totalorder %s36, 1
      %p330 = por %p328, %p329
      %p331 = scmp.ne.s32.totalorder %s322, %s323
      %p332 = scmp.eq.s32.totalorder %s36, 0
      %p333 = por %p331, %p332
      %p334 = scmp.ne.s32.totalorder %s322, %s323
      %p335 = scmp.eq.s32.totalorder %s37, 1
      %p336 = por %p334, %p335
      %p338 = scmp.ne.s32.totalorder %s323, %s337
      %p339 = scmp.eq.s32.totalorder %s37, 0
      %p340 = por %p338, %p339
      %s342 = sadd.s32 %s341, 1
      %p345 = scmp.eq.s32.totalorder %s31, 1
      %p346 = scmp.ne.s32.totalorder %s341, %s343
      %p347 = scmp.eq.s32.totalorder %s31, 0
      %p348 = por %p346, %p347
      %p349 = scmp.ne.s32.totalorder %s341, %s343
      %p350 = scmp.eq.s32.totalorder %s36, 1
      %p351 = por %p349, %p350
      %p352 = scmp.ne.s32.totalorder %s343, %s344
      %p353 = scmp.eq.s32.totalorder %s36, 0
      %p354 = por %p352, %p353
      %p355 = scmp.ne.s32.totalorder %s343, %s344
      %p356 = scmp.eq.s32.totalorder %s37, 1
      %p357 = por %p355, %p356
      %p359 = scmp.ne.s32.totalorder %s344, %s358
      %p360 = scmp.eq.s32.totalorder %s37, 0
      %p361 = por %p359, %p360
      %s363 = sadd.s32 %s362, 1
      %p366 = scmp.eq.s32.totalorder %s31, 1
      %p367 = scmp.ne.s32.totalorder %s362, %s364
      %p368 = scmp.eq.s32.totalorder %s31, 0
      %p369 = por %p367, %p368
      %p370 = scmp.ne.s32.totalorder %s362, %s364
      %p371 = scmp.eq.s32.totalorder %s36, 1
      %p372 = por %p370, %p371
      %p373 = scmp.ne.s32.totalorder %s364, %s365
      %p374 = scmp.eq.s32.totalorder %s36, 0
      %p375 = por %p373, %p374
      %p376 = scmp.ne.s32.totalorder %s364, %s365
      %p377 = scmp.eq.s32.totalorder %s37, 1
      %p378 = por %p376, %p377
      %p380 = scmp.ne.s32.totalorder %s365, %s379
      %p381 = scmp.eq.s32.totalorder %s37, 0
      %p382 = por %p380, %p381
      %s383 = ssub.s32 %s38, %s50
      %s384 = ssub.s32 %s39, %s46
      %s385 = sor.u32 %s383, %s384
      %p386 = scmp.eq.s32.totalorder %s385, 0
      %s388 = sadd.s32 %s387, 1
      %s389 = scalar_select %p386, %s387, %s388
      %p392 = pneg %p386
      %p393 = scmp.eq.s32.totalorder %s31, 1
      %p394 = por %p392, %p393
      %p395 = scmp.ne.s32.totalorder %s387, %s390
      %p396 = scmp.eq.s32.totalorder %s31, 0
      %p397 = por %p395, %p396
      %p398 = scmp.ne.s32.totalorder %s387, %s390
      %p399 = scmp.eq.s32.totalorder %s36, 1
      %p400 = por %p398, %p399
      %p401 = scmp.ne.s32.totalorder %s390, %s391
      %p402 = scmp.eq.s32.totalorder %s36, 0
      %p403 = por %p401, %p402
      %p404 = scmp.ne.s32.totalorder %s390, %s391
      %p405 = scmp.eq.s32.totalorder %s37, 1
      %p406 = por %p404, %p405
      %p408 = scmp.ne.s32.totalorder %s391, %s407
      %p409 = scmp.eq.s32.totalorder %s37, 0
      %p410 = por %p408, %p409
      %p411 = scmp.le.s32.totalorder 1, %s31
      %p412 = scmp.lt.s32.totalorder %s31, 3
      %p413 = pnand %p411, %p412
      %p414 = pneg %p413
      // Predicated region
      $region9: #{tpu_custom_call.1} parent=5 // pred_check
        _
      $region10: #{tpu_custom_call.1} parent=5 // pred_check_branch
        %416 = sbr.rel (%p413) target = $region12
      $region11: #{tpu_custom_call.1} parent=5 // pred_region
        %s417 = ssub.s32 %s31, 1
        // Predicated region
        $region13: #{tpu_custom_call.1} parent=11 // pred_check
          %p418 = pneg %p144
        $region14: #{tpu_custom_call.1} parent=11 // pred_check_branch
          %420 = sbr.rel (%p418) target = $region16
        $region15: #{tpu_custom_call.1} parent=11 // pred_region
          _
        $region16: #{tpu_custom_call.1} parent=11 // pred_fallthru
          _
        // Predicated region
        $region17: #{tpu_custom_call.1} parent=11 // pred_check
          %p421 = pneg %p165
        $region18: #{tpu_custom_call.1} parent=11 // pred_check_branch
          %423 = sbr.rel (%p421) target = $region20
        $region19: #{tpu_custom_call.1} parent=11 // pred_region
          _
        $region20: #{tpu_custom_call.1} parent=11 // pred_fallthru
          _
        // Predicated region
        $region21: #{tpu_custom_call.1} parent=11 // pred_check
          %p424 = pneg %p186
        $region22: #{tpu_custom_call.1} parent=11 // pred_check_branch
          %426 = sbr.rel (%p424) target = $region24
        $region23: #{tpu_custom_call.1} parent=11 // pred_region
          _
        $region24: #{tpu_custom_call.1} parent=11 // pred_fallthru
          _
        // Predicated region
        $region25: #{tpu_custom_call.1} parent=11 // pred_check
          %p427 = pneg %p207
        $region26: #{tpu_custom_call.1} parent=11 // pred_check_branch
          %429 = sbr.rel (%p427) target = $region28
        $region27: #{tpu_custom_call.1} parent=11 // pred_region
          _
        $region28: #{tpu_custom_call.1} parent=11 // pred_fallthru
          _
        // Predicated region
        $region29: #{tpu_custom_call.1} parent=11 // pred_check
          %p430 = pneg %p228
        $region30: #{tpu_custom_call.1} parent=11 // pred_check_branch
          %432 = sbr.rel (%p430) target = $region32
        $region31: #{tpu_custom_call.1} parent=11 // pred_region
          _
        $region32: #{tpu_custom_call.1} parent=11 // pred_fallthru
          _
        // Predicated region
        $region33: #{tpu_custom_call.1} parent=11 // pred_check
          %p433 = pneg %p249
        $region34: #{tpu_custom_call.1} parent=11 // pred_check_branch
          %435 = sbr.rel (%p433) target = $region36
        $region35: #{tpu_custom_call.1} parent=11 // pred_region
          _
        $region36: #{tpu_custom_call.1} parent=11 // pred_fallthru
          _
        // Predicated region
        $region37: #{tpu_custom_call.1} parent=11 // pred_check
          %p436 = pneg %p270
        $region38: #{tpu_custom_call.1} parent=11 // pred_check_branch
          %438 = sbr.rel (%p436) target = $region40
        $region39: #{tpu_custom_call.1} parent=11 // pred_region
          _
        $region40: #{tpu_custom_call.1} parent=11 // pred_fallthru
          _
        // Predicated region
        $region41: #{tpu_custom_call.1} parent=11 // pred_check
          %p439 = pneg %p291
        $region42: #{tpu_custom_call.1} parent=11 // pred_check_branch
          %441 = sbr.rel (%p439) target = $region44
        $region43: #{tpu_custom_call.1} parent=11 // pred_region
          %s443 = ssub.s32 16, 16
          %444 = vsyncadd [#allocation10], %s443
          %s446 = sshll.u32 [#allocation9], 4
          %s447 = int_to_ptr.vmem [resolvable:$true] %s446
          %449 = dma.hbm_to_vmem [thread:$0]  %s10, 16, %s447, [#allocation10]
        $region44: #{tpu_custom_call.1} parent=11 // pred_fallthru
          _
        // Predicated region
        $region45: #{tpu_custom_call.1} parent=11 // pred_check
          %p450 = pneg %p312
        $region46: #{tpu_custom_call.1} parent=11 // pred_check_branch
          %452 = sbr.rel (%p450) target = $region48
        $region47: #{tpu_custom_call.1} parent=11 // pred_region
          _
        $region48: #{tpu_custom_call.1} parent=11 // pred_fallthru
          _
        // Predicated region
        $region49: #{tpu_custom_call.1} parent=11 // pred_check
          %p453 = pneg %p333
        $region50: #{tpu_custom_call.1} parent=11 // pred_check_branch
          %455 = sbr.rel (%p453) target = $region52
        $region51: #{tpu_custom_call.1} parent=11 // pred_region
          _
        $region52: #{tpu_custom_call.1} parent=11 // pred_fallthru
          _
        // Predicated region
        $region53: #{tpu_custom_call.1} parent=11 // pred_check
          %p456 = pneg %p354
        $region54: #{tpu_custom_call.1} parent=11 // pred_check_branch
          %458 = sbr.rel (%p456) target = $region56
        $region55: #{tpu_custom_call.1} parent=11 // pred_region
          _
        $region56: #{tpu_custom_call.1} parent=11 // pred_fallthru
          _
        // Predicated region
        $region57: #{tpu_custom_call.1} parent=11 // pred_check
          %p459 = pneg %p375
        $region58: #{tpu_custom_call.1} parent=11 // pred_check_branch
          %461 = sbr.rel (%p459) target = $region60
        $region59: #{tpu_custom_call.1} parent=11 // pred_region
          _
        $region60: #{tpu_custom_call.1} parent=11 // pred_fallthru
          _
      $region12: #{tpu_custom_call.1} parent=5 // pred_fallthru
        _
      %p462 = scmp.lt.s32.totalorder %s31, 2
      // Predicated region
      $region61: #{tpu_custom_call.1} parent=5 // pred_check
        %p463 = pneg %p462
      $region62: #{tpu_custom_call.1} parent=5 // pred_check_branch
        %465 = sbr.rel (%p463) target = $region64
      $region63: #{tpu_custom_call.1} parent=5 // pred_region
        // Predicated region
        $region65: #{tpu_custom_call.1} parent=63 // pred_check
          %p466 = pneg %p65
        $region66: #{tpu_custom_call.1} parent=63 // pred_check_branch
          %468 = sbr.rel (%p466) target = $region68
        $region67: #{tpu_custom_call.1} parent=63 // pred_region
          %s469 = sand.u32 %s55, 1
          %s470 = scalar_lea.sflag [#allocation4], %s469
          %s471 = sand.u32 %s55, 1
          %s472 = smul.addr %s471, 4
          %s473 = scalar_lea.vmem [#allocation3], %s472
          %s475 = ssub.s32 64, 64
          %476 = vsyncadd %s470, %s475
          %s477 = sadd.s32 %s39, %s38
          %s478 = smul.addr %s477, 64
          %s479 = scalar_lea.hbm %s0, %s478
          %s481 = sshll.u32 %s473, 4
          %s482 = int_to_ptr.vmem [resolvable:$true] %s481
          %484 = dma.hbm_to_vmem [thread:$0]  %s479, 64, %s482, %s470
        $region68: #{tpu_custom_call.1} parent=63 // pred_fallthru
          _
        // Predicated region
        $region69: #{tpu_custom_call.1} parent=63 // pred_check
          %p485 = pneg %p91
        $region70: #{tpu_custom_call.1} parent=63 // pred_check_branch
          %487 = sbr.rel (%p485) target = $region72
        $region71: #{tpu_custom_call.1} parent=63 // pred_region
          %s488 = sand.u32 %s31, 1
          %s489 = scalar_lea.sflag [#allocation7], %s488
          %s490 = sand.u32 %s81, 1
          %s491 = smul.addr %s490, 4
          %s492 = scalar_lea.vmem [#allocation6], %s491
          %s494 = ssub.s32 64, 64
          %495 = vsyncadd %s489, %s494
          %s496 = smul.addr %s38, 64
          %s497 = scalar_lea.hbm %s1, %s496
          %s499 = sshll.u32 %s492, 4
          %s500 = int_to_ptr.vmem [resolvable:$true] %s499
          %502 = dma.hbm_to_vmem [thread:$0]  %s497, 64, %s500, %s489
        $region72: #{tpu_custom_call.1} parent=63 // pred_fallthru
          _
        // Predicated region
        $region73: #{tpu_custom_call.1} parent=63 // pred_check
          %p503 = pneg %p117
        $region74: #{tpu_custom_call.1} parent=63 // pred_check_branch
          %505 = sbr.rel (%p503) target = $region76
        $region75: #{tpu_custom_call.1} parent=63 // pred_region
          %s506 = sand.u32 %s31, 1
          %s507 = scalar_lea.sflag [#allocation7], %s506
          %s508 = sand.u32 %s107, 1
          %s509 = smul.addr %s508, 4
          %s510 = scalar_lea.vmem [#allocation8], %s509
          %s512 = ssub.s32 64, 64
          %513 = vsyncadd %s507, %s512
          %s514 = smul.addr %s38, 64
          %s515 = scalar_lea.hbm %s2, %s514
          %s517 = sshll.u32 %s510, 4
          %s518 = int_to_ptr.vmem [resolvable:$true] %s517
          %520 = dma.hbm_to_vmem [thread:$0]  %s515, 64, %s518, %s507
        $region76: #{tpu_custom_call.1} parent=63 // pred_fallthru
          _
      $region64: #{tpu_custom_call.1} parent=5 // pred_fallthru
        _
      %p521 = scmp.le.s32.totalorder 1, %s31
      %p522 = scmp.lt.s32.totalorder %s31, 3
      %p523 = pnand %p521, %p522
      %p524 = pneg %p523
      // Predicated region
      $region77: #{tpu_custom_call.1} parent=5 // pred_check
        _
      $region78: #{tpu_custom_call.1} parent=5 // pred_check_branch
        %526 = sbr.rel (%p523) target = $region80
      $region79: #{tpu_custom_call.1} parent=5 // pred_region
        %s527 = ssub.s32 %s31, 1
        %s528 = sand.u32 %s58, 1
        %s529 = scalar_lea.sflag [#allocation4], %s528
        %s530 = sand.u32 %s58, 1
        %s531 = smul.addr %s530, 4
        %s532 = scalar_lea.vmem [#allocation3], %s531
        // Predicated region
        $region81: #{tpu_custom_call.1} parent=79 // pred_check
          %p533 = pneg %p71
        $region82: #{tpu_custom_call.1} parent=79 // pred_check_branch
          %535 = sbr.rel (%p533) target = $region84
        $region83: #{tpu_custom_call.1} parent=79 // pred_region
          %536 = dma.done %s529, 64
        $region84: #{tpu_custom_call.1} parent=79 // pred_fallthru
          _
        %s537 = sand.u32 %s36, 1
        %s538 = scalar_lea.sflag [#allocation7], %s537
        %s539 = sand.u32 %s84, 1
        %s540 = smul.addr %s539, 4
        %s541 = scalar_lea.vmem [#allocation6], %s540
        // Predicated region
        $region85: #{tpu_custom_call.1} parent=79 // pred_check
          %p542 = pneg %p97
        $region86: #{tpu_custom_call.1} parent=79 // pred_check_branch
          %544 = sbr.rel (%p542) target = $region88
        $region87: #{tpu_custom_call.1} parent=79 // pred_region
          %545 = dma.done %s538, 64
        $region88: #{tpu_custom_call.1} parent=79 // pred_fallthru
          _
        %s546 = sand.u32 %s36, 1
        %s547 = scalar_lea.sflag [#allocation7], %s546
        %s548 = sand.u32 %s110, 1
        %s549 = smul.addr %s548, 4
        %s550 = scalar_lea.vmem [#allocation8], %s549
        // Predicated region
        $region89: #{tpu_custom_call.1} parent=79 // pred_check
          %p551 = pneg %p123
        $region90: #{tpu_custom_call.1} parent=79 // pred_check_branch
          %553 = sbr.rel (%p551) target = $region92
        $region91: #{tpu_custom_call.1} parent=79 // pred_region
          %554 = dma.done %s547, 64
        $region92: #{tpu_custom_call.1} parent=79 // pred_fallthru
          _
        // Predicated region
        $region93: #{tpu_custom_call.1} parent=79 // pred_check
          %p555 = pneg %p291
        $region94: #{tpu_custom_call.1} parent=79 // pred_check_branch
          %557 = sbr.rel (%p555) target = $region96
        $region95: #{tpu_custom_call.1} parent=79 // pred_region
          %558 = dma.done [#allocation10], 16
        $region96: #{tpu_custom_call.1} parent=79 // pred_fallthru
          _
        %s559 = sand.u32 %s58, 1
        %s560 = scalar_lea.sflag [#allocation4], %s559
        %s561 = sand.u32 %s58, 1
        %s562 = smul.addr %s561, 4
        %s563 = scalar_lea.vmem [#allocation3], %s562
        %p564 = pneg %p71
        %p565 = pneg %p68
        %s566 = sand.u32 %s36, 1
        %s567 = scalar_lea.sflag [#allocation7], %s566
        %s568 = sand.u32 %s84, 1
        %s569 = smul.addr %s568, 4
        %s570 = scalar_lea.vmem [#allocation6], %s569
        %p571 = pneg %p97
        %p572 = pneg %p94
        %s573 = sand.u32 %s36, 1
        %s574 = scalar_lea.sflag [#allocation7], %s573
        %s575 = sand.u32 %s110, 1
        %s576 = smul.addr %s575, 4
        %s577 = scalar_lea.vmem [#allocation8], %s576
        %p578 = pneg %p123
        %p579 = pneg %p120
        %p580 = pneg %p144
        %p581 = pneg %p141
        %p582 = pneg %p165
        %p583 = pneg %p162
        %p584 = pneg %p186
        %p585 = pneg %p183
        %p586 = pneg %p207
        %p587 = pneg %p204
        %p588 = pneg %p228
        %p589 = pneg %p225
        %p590 = pneg %p249
        %p591 = pneg %p246
        %p592 = pneg %p270
        %p593 = pneg %p267
        %p594 = pneg %p291
        %p595 = pneg %p288
        %p596 = pneg %p312
        %p597 = pneg %p309
        %p598 = pneg %p333
        %p599 = pneg %p330
        %p600 = pneg %p354
        %p601 = pneg %p351
        %p602 = pneg %p375
        %p603 = pneg %p372
        %p604 = pneg %p403
        %p605 = pneg %p400
        %s606 = sand.u32 %s390, 1
        %s607 = scalar_lea.sflag [#allocation5], %s606
        %s608 = sand.u32 %s390, 1
        %s609 = smul.addr %s608, 8
        %s610 = scalar_lea.vmem [#allocation11], %s609
        %v612 = vld [vmem:[%s532] sm:$0xf]
        %v613 = vld [vmem:[%s541] sm:$0xf]
        %v614 = vld [vmem:[%s550] sm:$0xf]
        %v615 = vld [vmem:[%s3] sm:$0xf]
        %v616 = vld [vmem:[%s3 + $0x4] sm:$0xf]
        %v617 = vld [vmem:[%s3 + $0x8] sm:$0xf]
        %v618 = vld [vmem:[%s3 + $0xc] sm:$0xf]
        %v619 = vld [vmem:[%s4] sm:$0x1]
        %v621 = vlaneseq
        %v622 = vshrl.u32 %v621, 7
        %v623 = vsub.s32 0, %v622
        %v624 = vrot.slane %v619, %v623
        %v630 = vunpack.c.l.b16 %v615
        %v631 = vunpack.c.l.b16 %v616
        %v632 = vunpack.c.l.b16 %v617
        %v633 = vunpack.c.l.b16 %v618
        %v634 = vpack.c.b16 %v631, %v630
        %v635 = vpack.c.b16 %v633, %v632
        %vm638 = vcmask 261120
        %v640 = vsel %vm638, %v612, 0
        %642 = vmatprep.subr.bf16.mxu0 0
        %643 = vmatpush1.bf16.msra.mxu0 0
        %644 = vmatprep.subr.bf16.mxu0 0
        %645 = vmatpush1.bf16.msra.mxu0 0
        %646 = vmatprep.subr.bf16.mxu0 0
        %647 = vmatpush1.bf16.msra.mxu0 0
        %648 = vmatprep.subr.bf16.mxu0 0
        %649 = vmatpush1.bf16.msra.mxu0 0
        %650 = vmatprep.subr.bf16.mxu0 0
        %651 = vmatpush1.bf16.msra.mxu0 0
        %652 = vmatprep.subr.bf16.mxu0 0
        %653 = vmatpush1.bf16.msra.mxu0 0
        %654 = vmatprep.subr.bf16.mxu0 0
        %655 = vmatpush1.bf16.msra.mxu0 %v635
        %656 = vmatprep.subr.bf16.mxu0 0
        %657 = vmatpush1.bf16.msra.mxu0 %v634
        %658 = vmatprep.subr.bf16.mxu0 0
        %659 = vmatpush2.bf16.msra.mxu0 0
        %660 = vmatprep.subr.bf16.mxu0 0
        %661 = vmatpush2.bf16.msra.mxu0 0
        %662 = vmatprep.subr.bf16.mxu0 0
        %663 = vmatpush2.bf16.msra.mxu0 0
        %664 = vmatprep.subr.bf16.mxu0 0
        %665 = vmatpush2.bf16.msra.mxu0 0
        %666 = vmatprep.subr.bf16.mxu0 0
        %667 = vmatpush2.bf16.msra.mxu0 0
        %668 = vmatprep.subr.bf16.mxu0 0
        %669 = vmatpush2.bf16.msra.mxu0 0
        %670 = vmatprep.subr.bf16.mxu0 0
        %671 = vmatpush2.bf16.msra.mxu0 0
        %672 = vmatprep.subr.bf16.mxu0 0
        %673 = vmatpush2.bf16.msra.mxu0 0
        %674 = vmatprep.mubr.bf16.mxu0 0
        %675 = vmatmul.mubr.bf16.gmra.mxu0 %v640
        %v676 = vpop.f32.mrf.mxu0
        %v677 = vadd.f32 %v624, %v676
        %v678 = vpop.f32.mrf.mxu0
        %v679 = vpop.f32.mrf.mxu0
        %v680 = vpop.f32.mrf.mxu0
        %681 = vdwg.mxu0
        %v682 = vmul.f32 %v677, 0.35355338
        %v683 = vpack.c.bf16 %v682, %v682
        %vm684 = vcmask 64512
        %v686 = vsel %vm684, %v683, 0
        %v689 = vsel %vm684, %v613, 0
        %691 = vmatprep.subr.bf16.mxu0 0
        %692 = vmatpush1.bf16.xpose.msra.mxu0 0
        %693 = vmatprep.subr.bf16.mxu0 0
        %694 = vmatpush1.bf16.xpose.msra.mxu0 0
        %695 = vmatprep.subr.bf16.mxu0 0
        %696 = vmatpush1.bf16.xpose.msra.mxu0 0
        %697 = vmatprep.subr.bf16.mxu0 0
        %698 = vmatpush1.bf16.xpose.msra.mxu0 0
        %699 = vmatprep.subr.bf16.mxu0 0
        %700 = vmatpush1.bf16.xpose.msra.mxu0 0
        %701 = vmatprep.subr.bf16.mxu0 0
        %702 = vmatpush1.bf16.xpose.msra.mxu0 0
        %703 = vmatprep.subr.bf16.mxu0 0
        %704 = vmatpush1.bf16.xpose.msra.mxu0 0
        %705 = vmatprep.subr.bf16.mxu0 0
        %706 = vmatpush1.bf16.xpose.msra.mxu0 %v689
        %707 = vmatprep.subr.bf16.mxu0 0
        %708 = vmatpush2.bf16.xpose.msra.mxu0 0
        %709 = vmatprep.subr.bf16.mxu0 0
        %710 = vmatpush2.bf16.xpose.msra.mxu0 0
        %711 = vmatprep.subr.bf16.mxu0 0
        %712 = vmatpush2.bf16.xpose.msra.mxu0 0
        %713 = vmatprep.subr.bf16.mxu0 0
        %714 = vmatpush2.bf16.xpose.msra.mxu0 0
        %715 = vmatprep.subr.bf16.mxu0 0
        %716 = vmatpush2.bf16.xpose.msra.mxu0 0
        %717 = vmatprep.subr.bf16.mxu0 0
        %718 = vmatpush2.bf16.xpose.msra.mxu0 0
        %719 = vmatprep.subr.bf16.mxu0 0
        %720 = vmatpush2.bf16.xpose.msra.mxu0 0
        %721 = vmatprep.subr.bf16.mxu0 0
        %722 = vmatpush2.bf16.xpose.msra.mxu0 0
        %723 = vmatprep.mubr.bf16.mxu0 0
        %724 = vmatmul.mubr.bf16.gmra.mxu0 %v686
        %v725 = vpop.f32.mrf.mxu0
        %v726 = vadd.f32 0.0, %v725
        %v727 = vpop.f32.mrf.mxu0
        %v728 = vpop.f32.mrf.mxu0
        %v729 = vpop.f32.mrf.mxu0
        %730 = vdwg.mxu0
        %v731 = vsel %vm684, %v726, -inf
        %732 = vmax.xlane.f32.xlu0 %v731
        %v733 = vpop.xlane.xlu0 %732
        %v734 = vsub.f32 %v726, %v733
        %v735 = vmul.f32 %v734, 1.442695
        %v736 = vpow.pop %v735
        %v737 = vsel %vm684, %v736, 0.0
        %738 = vadd.xlane.f32.xlu0 %v737
        %v739 = vpop.xlane.xlu0 %738
        %v740 = vrcp.pop %v739
        %v741 = vmul.f32 %v736, %v740
        %v742 = vpack.c.bf16 %v741, %v741
        %v744 = vsel %vm684, %v742, 0
        %vm746 = vcmask 1043456
        %v748 = vsel %vm746, %v614, 0
        %750 = vmatprep.subr.bf16.mxu0 0
        %751 = vmatpush1.bf16.msra.mxu0 0
        %752 = vmatprep.subr.bf16.mxu0 0
        %753 = vmatpush1.bf16.msra.mxu0 0
        %754 = vmatprep.subr.bf16.mxu0 0
        %755 = vmatpush1.bf16.msra.mxu0 0
        %756 = vmatprep.subr.bf16.mxu0 0
        %757 = vmatpush1.bf16.msra.mxu0 0
        %758 = vmatprep.subr.bf16.mxu0 0
        %759 = vmatpush1.bf16.msra.mxu0 0
        %760 = vmatprep.subr.bf16.mxu0 0
        %761 = vmatpush1.bf16.msra.mxu0 0
        %762 = vmatprep.subr.bf16.mxu0 0
        %763 = vmatpush1.bf16.msra.mxu0 0
        %764 = vmatprep.subr.bf16.mxu0 0
        %765 = vmatpush1.bf16.msra.mxu0 %v748
        %766 = vmatprep.subr.bf16.mxu0 0
        %767 = vmatpush2.bf16.msra.mxu0 0
        %768 = vmatprep.subr.bf16.mxu0 0
        %769 = vmatpush2.bf16.msra.mxu0 0
        %770 = vmatprep.subr.bf16.mxu0 0
        %771 = vmatpush2.bf16.msra.mxu0 0
        %772 = vmatprep.subr.bf16.mxu0 0
        %773 = vmatpush2.bf16.msra.mxu0 0
        %774 = vmatprep.subr.bf16.mxu0 0
        %775 = vmatpush2.bf16.msra.mxu0 0
        %776 = vmatprep.subr.bf16.mxu0 0
        %777 = vmatpush2.bf16.msra.mxu0 0
        %778 = vmatprep.subr.bf16.mxu0 0
        %779 = vmatpush2.bf16.msra.mxu0 0
        %780 = vmatprep.subr.bf16.mxu0 0
        %781 = vmatpush2.bf16.msra.mxu0 0
        %782 = vmatprep.mubr.bf16.mxu0 0
        %783 = vmatmul.mubr.bf16.gmra.mxu0 %v744
        %v784 = vpop.f32.mrf.mxu0
        %v785 = vadd.f32 0.0, %v784
        %v786 = vpop.f32.mrf.mxu0
        %v787 = vpop.f32.mrf.mxu0
        %v788 = vpop.f32.mrf.mxu0
        %789 = vdwg.mxu0
        %v790 = vpack.c.bf16 %v785, %v785
        %vm791 = vcmask 60416
        %792 = vst.msk [vmem:[#allocation2] sm:$0xf] %vm791, %v790
        %794 = vrot.lane.b32.xlu0 %v683, 120
        %v795 = vpop.permute.xlu0 %794
        %v797 = vunpack.c.l.b16 %v613
        %v798 = vpack.c.b16 %v797, %v797
        %799 = vrot.lane.b32.xlu0 %v798, 120
        %v800 = vpop.permute.xlu0 %799
        %v802 = vsel %vm684, %v795, 0
        %v805 = vsel %vm684, %v800, 0
        %807 = vmatprep.subr.bf16.mxu0 0
        %808 = vmatpush1.bf16.xpose.msra.mxu0 0
        %809 = vmatprep.subr.bf16.mxu0 0
        %810 = vmatpush1.bf16.xpose.msra.mxu0 0
        %811 = vmatprep.subr.bf16.mxu0 0
        %812 = vmatpush1.bf16.xpose.msra.mxu0 0
        %813 = vmatprep.subr.bf16.mxu0 0
        %814 = vmatpush1.bf16.xpose.msra.mxu0 0
        %815 = vmatprep.subr.bf16.mxu0 0
        %816 = vmatpush1.bf16.xpose.msra.mxu0 0
        %817 = vmatprep.subr.bf16.mxu0 0
        %818 = vmatpush1.bf16.xpose.msra.mxu0 0
        %819 = vmatprep.subr.bf16.mxu0 0
        %820 = vmatpush1.bf16.xpose.msra.mxu0 0
        %821 = vmatprep.subr.bf16.mxu0 0
        %822 = vmatpush1.bf16.xpose.msra.mxu0 %v805
        %823 = vmatprep.subr.bf16.mxu0 0
        %824 = vmatpush2.bf16.xpose.msra.mxu0 0
        %825 = vmatprep.subr.bf16.mxu0 0
        %826 = vmatpush2.bf16.xpose.msra.mxu0 0
        %827 = vmatprep.subr.bf16.mxu0 0
        %828 = vmatpush2.bf16.xpose.msra.mxu0 0
        %829 = vmatprep.subr.bf16.mxu0 0
        %830 = vmatpush2.bf16.xpose.msra.mxu0 0
        %831 = vmatprep.subr.bf16.mxu0 0
        %832 = vmatpush2.bf16.xpose.msra.mxu0 0
        %833 = vmatprep.subr.bf16.mxu0 0
        %834 = vmatpush2.bf16.xpose.msra.mxu0 0
        %835 = vmatprep.subr.bf16.mxu0 0
        %836 = vmatpush2.bf16.xpose.msra.mxu0 0
        %837 = vmatprep.subr.bf16.mxu0 0
        %838 = vmatpush2.bf16.xpose.msra.mxu0 0
        %839 = vmatprep.mubr.bf16.mxu0 0
        %840 = vmatmul.mubr.bf16.gmra.mxu0 %v802
        %v841 = vpop.f32.mrf.mxu0
        %v842 = vadd.f32 0.0, %v841
        %v843 = vpop.f32.mrf.mxu0
        %v844 = vpop.f32.mrf.mxu0
        %v845 = vpop.f32.mrf.mxu0
        %846 = vdwg.mxu0
        %v847 = vsel %vm684, %v842, -inf
        %848 = vmax.xlane.f32.xlu0 %v847
        %v849 = vpop.xlane.xlu0 %848
        %v850 = vsub.f32 %v842, %v849
        %v851 = vmul.f32 %v850, 1.442695
        %v852 = vpow.pop %v851
        %v853 = vsel %vm684, %v852, 0.0
        %854 = vadd.xlane.f32.xlu0 %v853
        %v855 = vpop.xlane.xlu0 %854
        %v856 = vrcp.pop %v855
        %v857 = vmul.f32 %v852, %v856
        %v858 = vpack.c.bf16 %v857, %v857
        %v860 = vunpack.c.l.b16 %v614
        %v861 = vpack.c.b16 %v860, %v860
        %862 = vrot.lane.b32.xlu0 %v861, 120
        %v863 = vpop.permute.xlu0 %862
        %v865 = vsel %vm684, %v858, 0
        %v868 = vsel %vm746, %v863, 0
        %870 = vmatprep.subr.bf16.mxu0 0
        %871 = vmatpush1.bf16.msra.mxu0 0
        %872 = vmatprep.subr.bf16.mxu0 0
        %873 = vmatpush1.bf16.msra.mxu0 0
        %874 = vmatprep.subr.bf16.mxu0 0
        %875 = vmatpush1.bf16.msra.mxu0 0
        %876 = vmatprep.subr.bf16.mxu0 0
        %877 = vmatpush1.bf16.msra.mxu0 0
        %878 = vmatprep.subr.bf16.mxu0 0
        %879 = vmatpush1.bf16.msra.mxu0 0
        %880 = vmatprep.subr.bf16.mxu0 0
        %881 = vmatpush1.bf16.msra.mxu0 0
        %882 = vmatprep.subr.bf16.mxu0 0
        %883 = vmatpush1.bf16.msra.mxu0 0
        %884 = vmatprep.subr.bf16.mxu0 0
        %885 = vmatpush1.bf16.msra.mxu0 %v868
        %886 = vmatprep.subr.bf16.mxu0 0
        %887 = vmatpush2.bf16.msra.mxu0 0
        %888 = vmatprep.subr.bf16.mxu0 0
        %889 = vmatpush2.bf16.msra.mxu0 0
        %890 = vmatprep.subr.bf16.mxu0 0
        %891 = vmatpush2.bf16.msra.mxu0 0
        %892 = vmatprep.subr.bf16.mxu0 0
        %893 = vmatpush2.bf16.msra.mxu0 0
        %894 = vmatprep.subr.bf16.mxu0 0
        %895 = vmatpush2.bf16.msra.mxu0 0
        %896 = vmatprep.subr.bf16.mxu0 0
        %897 = vmatpush2.bf16.msra.mxu0 0
        %898 = vmatprep.subr.bf16.mxu0 0
        %899 = vmatpush2.bf16.msra.mxu0 0
        %900 = vmatprep.subr.bf16.mxu0 0
        %901 = vmatpush2.bf16.msra.mxu0 0
        %902 = vmatprep.mubr.bf16.mxu0 0
        %903 = vmatmul.mubr.bf16.gmra.mxu0 %v865
        %v904 = vpop.f32.mrf.mxu0
        %v905 = vadd.f32 0.0, %v904
        %v906 = vpop.f32.mrf.mxu0
        %v907 = vpop.f32.mrf.mxu0
        %v908 = vpop.f32.mrf.mxu0
        %909 = vdwg.mxu0
        %v910 = vpack.c.bf16 %v905, %v905
        %v912 = vunpack.c.l.b16 %v910
        %v913 = vpack.c.b16 %v912, %v912
        %914 = vrot.lane.b32.xlu0 %v913, 8
        %v915 = vpop.permute.xlu0 %914
        %vm917 = vcmask 126016
        %918 = vst.msk [vmem:[#allocation2] sm:$0xf] %vm917, %v915
        %919 = vrot.lane.b32.xlu0 %v683, 112
        %v920 = vpop.permute.xlu0 %919
        %921 = vrot.lane.b32.xlu0 %v798, 112
        %v922 = vpop.permute.xlu0 %921
        %v924 = vsel %vm684, %v920, 0
        %v927 = vsel %vm684, %v922, 0
        %929 = vmatprep.subr.bf16.mxu0 0
        %930 = vmatpush1.bf16.xpose.msra.mxu0 0
        %931 = vmatprep.subr.bf16.mxu0 0
        %932 = vmatpush1.bf16.xpose.msra.mxu0 0
        %933 = vmatprep.subr.bf16.mxu0 0
        %934 = vmatpush1.bf16.xpose.msra.mxu0 0
        %935 = vmatprep.subr.bf16.mxu0 0
        %936 = vmatpush1.bf16.xpose.msra.mxu0 0
        %937 = vmatprep.subr.bf16.mxu0 0
        %938 = vmatpush1.bf16.xpose.msra.mxu0 0
        %939 = vmatprep.subr.bf16.mxu0 0
        %940 = vmatpush1.bf16.xpose.msra.mxu0 0
        %941 = vmatprep.subr.bf16.mxu0 0
        %942 = vmatpush1.bf16.xpose.msra.mxu0 0
        %943 = vmatprep.subr.bf16.mxu0 0
        %944 = vmatpush1.bf16.xpose.msra.mxu0 %v927
        %945 = vmatprep.subr.bf16.mxu0 0
        %946 = vmatpush2.bf16.xpose.msra.mxu0 0
        %947 = vmatprep.subr.bf16.mxu0 0
        %948 = vmatpush2.bf16.xpose.msra.mxu0 0
        %949 = vmatprep.subr.bf16.mxu0 0
        %950 = vmatpush2.bf16.xpose.msra.mxu0 0
        %951 = vmatprep.subr.bf16.mxu0 0
        %952 = vmatpush2.bf16.xpose.msra.mxu0 0
        %953 = vmatprep.subr.bf16.mxu0 0
        %954 = vmatpush2.bf16.xpose.msra.mxu0 0
        %955 = vmatprep.subr.bf16.mxu0 0
        %956 = vmatpush2.bf16.xpose.msra.mxu0 0
        %957 = vmatprep.subr.bf16.mxu0 0
        %958 = vmatpush2.bf16.xpose.msra.mxu0 0
        %959 = vmatprep.subr.bf16.mxu0 0
        %960 = vmatpush2.bf16.xpose.msra.mxu0 0
        %961 = vmatprep.mubr.bf16.mxu0 0
        %962 = vmatmul.mubr.bf16.gmra.mxu0 %v924
        %v963 = vpop.f32.mrf.mxu0
        %v964 = vadd.f32 0.0, %v963
        %v965 = vpop.f32.mrf.mxu0
        %v966 = vpop.f32.mrf.mxu0
        %v967 = vpop.f32.mrf.mxu0
        %968 = vdwg.mxu0
        %v969 = vsel %vm684, %v964, -inf
        %970 = vmax.xlane.f32.xlu0 %v969
        %v971 = vpop.xlane.xlu0 %970
        %v972 = vsub.f32 %v964, %v971
        %v973 = vmul.f32 %v972, 1.442695
        %v974 = vpow.pop %v973
        %v975 = vsel %vm684, %v974, 0.0
        %976 = vadd.xlane.f32.xlu0 %v975
        %v977 = vpop.xlane.xlu0 %976
        %v978 = vrcp.pop %v977
        %v979 = vmul.f32 %v974, %v978
        %v980 = vpack.c.bf16 %v979, %v979
        %981 = vrot.lane.b32.xlu0 %v861, 112
        %v982 = vpop.permute.xlu0 %981
        %v984 = vsel %vm684, %v980, 0
        %v987 = vsel %vm746, %v982, 0
        %989 = vmatprep.subr.bf16.mxu0 0
        %990 = vmatpush1.bf16.msra.mxu0 0
        %991 = vmatprep.subr.bf16.mxu0 0
        %992 = vmatpush1.bf16.msra.mxu0 0
        %993 = vmatprep.subr.bf16.mxu0 0
        %994 = vmatpush1.bf16.msra.mxu0 0
        %995 = vmatprep.subr.bf16.mxu0 0
        %996 = vmatpush1.bf16.msra.mxu0 0
        %997 = vmatprep.subr.bf16.mxu0 0
        %998 = vmatpush1.bf16.msra.mxu0 0
        %999 = vmatprep.subr.bf16.mxu0 0
        %1000 = vmatpush1.bf16.msra.mxu0 0
        %1001 = vmatprep.subr.bf16.mxu0 0
        %1002 = vmatpush1.bf16.msra.mxu0 0
        %1003 = vmatprep.subr.bf16.mxu0 0
        %1004 = vmatpush1.bf16.msra.mxu0 %v987
        %1005 = vmatprep.subr.bf16.mxu0 0
        %1006 = vmatpush2.bf16.msra.mxu0 0
        %1007 = vmatprep.subr.bf16.mxu0 0
        %1008 = vmatpush2.bf16.msra.mxu0 0
        %1009 = vmatprep.subr.bf16.mxu0 0
        %1010 = vmatpush2.bf16.msra.mxu0 0
        %1011 = vmatprep.subr.bf16.mxu0 0
        %1012 = vmatpush2.bf16.msra.mxu0 0
        %1013 = vmatprep.subr.bf16.mxu0 0
        %1014 = vmatpush2.bf16.msra.mxu0 0
        %1015 = vmatprep.subr.bf16.mxu0 0
        %1016 = vmatpush2.bf16.msra.mxu0 0
        %1017 = vmatprep.subr.bf16.mxu0 0
        %1018 = vmatpush2.bf16.msra.mxu0 0
        %1019 = vmatprep.subr.bf16.mxu0 0
        %1020 = vmatpush2.bf16.msra.mxu0 0
        %1021 = vmatprep.mubr.bf16.mxu0 0
        %1022 = vmatmul.mubr.bf16.gmra.mxu0 %v984
        %v1023 = vpop.f32.mrf.mxu0
        %v1024 = vadd.f32 0.0, %v1023
        %v1025 = vpop.f32.mrf.mxu0
        %v1026 = vpop.f32.mrf.mxu0
        %v1027 = vpop.f32.mrf.mxu0
        %1028 = vdwg.mxu0
        %v1029 = vpack.c.bf16 %v1024, %v1024
        %v1031 = vunpack.c.l.b16 %v1029
        %v1032 = vpack.c.b16 %v1031, %v1031
        %1033 = vrot.lane.b32.xlu0 %v1032, 16
        %v1034 = vpop.permute.xlu0 %1033
        %vm1036 = vcmask 191616
        %1037 = vst.msk [vmem:[#allocation2] sm:$0xf] %vm1036, %v1034
        %1038 = vrot.lane.b32.xlu0 %v683, 104
        %v1039 = vpop.permute.xlu0 %1038
        %1040 = vrot.lane.b32.xlu0 %v798, 104
        %v1041 = vpop.permute.xlu0 %1040
        %v1043 = vsel %vm684, %v1039, 0
        %v1046 = vsel %vm684, %v1041, 0
        %1048 = vmatprep.subr.bf16.mxu0 0
        %1049 = vmatpush1.bf16.xpose.msra.mxu0 0
        %1050 = vmatprep.subr.bf16.mxu0 0
        %1051 = vmatpush1.bf16.xpose.msra.mxu0 0
        %1052 = vmatprep.subr.bf16.mxu0 0
        %1053 = vmatpush1.bf16.xpose.msra.mxu0 0
        %1054 = vmatprep.subr.bf16.mxu0 0
        %1055 = vmatpush1.bf16.xpose.msra.mxu0 0
        %1056 = vmatprep.subr.bf16.mxu0 0
        %1057 = vmatpush1.bf16.xpose.msra.mxu0 0
        %1058 = vmatprep.subr.bf16.mxu0 0
        %1059 = vmatpush1.bf16.xpose.msra.mxu0 0
        %1060 = vmatprep.subr.bf16.mxu0 0
        %1061 = vmatpush1.bf16.xpose.msra.mxu0 0
        %1062 = vmatprep.subr.bf16.mxu0 0
        %1063 = vmatpush1.bf16.xpose.msra.mxu0 %v1046
        %1064 = vmatprep.subr.bf16.mxu0 0
        %1065 = vmatpush2.bf16.xpose.msra.mxu0 0
        %1066 = vmatprep.subr.bf16.mxu0 0
        %1067 = vmatpush2.bf16.xpose.msra.mxu0 0
        %1068 = vmatprep.subr.bf16.mxu0 0
        %1069 = vmatpush2.bf16.xpose.msra.mxu0 0
        %1070 = vmatprep.subr.bf16.mxu0 0
        %1071 = vmatpush2.bf16.xpose.msra.mxu0 0
        %1072 = vmatprep.subr.bf16.mxu0 0
        %1073 = vmatpush2.bf16.xpose.msra.mxu0 0
        %1074 = vmatprep.subr.bf16.mxu0 0
        %1075 = vmatpush2.bf16.xpose.msra.mxu0 0
        %1076 = vmatprep.subr.bf16.mxu0 0
        %1077 = vmatpush2.bf16.xpose.msra.mxu0 0
        %1078 = vmatprep.subr.bf16.mxu0 0
        %1079 = vmatpush2.bf16.xpose.msra.mxu0 0
        %1080 = vmatprep.mubr.bf16.mxu0 0
        %1081 = vmatmul.mubr.bf16.gmra.mxu0 %v1043
        %v1082 = vpop.f32.mrf.mxu0
        %v1083 = vadd.f32 0.0, %v1082
        %v1084 = vpop.f32.mrf.mxu0
        %v1085 = vpop.f32.mrf.mxu0
        %v1086 = vpop.f32.mrf.mxu0
        %1087 = vdwg.mxu0
        %v1088 = vsel %vm684, %v1083, -inf
        %1089 = vmax.xlane.f32.xlu0 %v1088
        %v1090 = vpop.xlane.xlu0 %1089
        %v1091 = vsub.f32 %v1083, %v1090
        %v1092 = vmul.f32 %v1091, 1.442695
        %v1093 = vpow.pop %v1092
        %v1094 = vsel %vm684, %v1093, 0.0
        %1095 = vadd.xlane.f32.xlu0 %v1094
        %v1096 = vpop.xlane.xlu0 %1095
        %v1097 = vrcp.pop %v1096
        %v1098 = vmul.f32 %v1093, %v1097
        %v1099 = vpack.c.bf16 %v1098, %v1098
        %1100 = vrot.lane.b32.xlu0 %v861, 104
        %v1101 = vpop.permute.xlu0 %1100
        %v1103 = vsel %vm684, %v1099, 0
        %v1106 = vsel %vm746, %v1101, 0
        %1108 = vmatprep.subr.bf16.mxu0 0
        %1109 = vmatpush1.bf16.msra.mxu0 0
        %1110 = vmatprep.subr.bf16.mxu0 0
        %1111 = vmatpush1.bf16.msra.mxu0 0
        %1112 = vmatprep.subr.bf16.mxu0 0
        %1113 = vmatpush1.bf16.msra.mxu0 0
        %1114 = vmatprep.subr.bf16.mxu0 0
        %1115 = vmatpush1.bf16.msra.mxu0 0
        %1116 = vmatprep.subr.bf16.mxu0 0
        %1117 = vmatpush1.bf16.msra.mxu0 0
        %1118 = vmatprep.subr.bf16.mxu0 0
        %1119 = vmatpush1.bf16.msra.mxu0 0
        %1120 = vmatprep.subr.bf16.mxu0 0
        %1121 = vmatpush1.bf16.msra.mxu0 0
        %1122 = vmatprep.subr.bf16.mxu0 0
        %1123 = vmatpush1.bf16.msra.mxu0 %v1106
        %1124 = vmatprep.subr.bf16.mxu0 0
        %1125 = vmatpush2.bf16.msra.mxu0 0
        %1126 = vmatprep.subr.bf16.mxu0 0
        %1127 = vmatpush2.bf16.msra.mxu0 0
        %1128 = vmatprep.subr.bf16.mxu0 0
        %1129 = vmatpush2.bf16.msra.mxu0 0
        %1130 = vmatprep.subr.bf16.mxu0 0
        %1131 = vmatpush2.bf16.msra.mxu0 0
        %1132 = vmatprep.subr.bf16.mxu0 0
        %1133 = vmatpush2.bf16.msra.mxu0 0
        %1134 = vmatprep.subr.bf16.mxu0 0
        %1135 = vmatpush2.bf16.msra.mxu0 0
        %1136 = vmatprep.subr.bf16.mxu0 0
        %1137 = vmatpush2.bf16.msra.mxu0 0
        %1138 = vmatprep.subr.bf16.mxu0 0
        %1139 = vmatpush2.bf16.msra.mxu0 0
        %1140 = vmatprep.mubr.bf16.mxu0 0
        %1141 = vmatmul.mubr.bf16.gmra.mxu0 %v1103
        %v1142 = vpop.f32.mrf.mxu0
        %v1143 = vadd.f32 0.0, %v1142
        %v1144 = vpop.f32.mrf.mxu0
        %v1145 = vpop.f32.mrf.mxu0
        %v1146 = vpop.f32.mrf.mxu0
        %1147 = vdwg.mxu0
        %v1148 = vpack.c.bf16 %v1143, %v1143
        %v1150 = vunpack.c.l.b16 %v1148
        %v1151 = vpack.c.b16 %v1150, %v1150
        %1152 = vrot.lane.b32.xlu0 %v1151, 24
        %v1153 = vpop.permute.xlu0 %1152
        %vm1155 = vcmask 257216
        %1156 = vst.msk [vmem:[#allocation2] sm:$0xf] %vm1155, %v1153
        %v1157 = vld [vmem:[#allocation2] sm:$0xf]
        %v1158 = vld [vmem:[%s5] sm:$0xf]
        %v1159 = vld [vmem:[%s5 + $0x4] sm:$0xf]
        %v1160 = vld [vmem:[%s5 + $0x8] sm:$0xf]
        %v1161 = vld [vmem:[%s5 + $0xc] sm:$0xf]
        %v1162 = vld [vmem:[%s6] sm:$0x1]
        %v1164 = vlaneseq
        %v1165 = vshrl.u32 %v1164, 7
        %v1166 = vsub.s32 0, %v1165
        %v1167 = vrot.slane %v1162, %v1166
        %v1173 = vunpack.c.l.b16 %v1158
        %v1174 = vunpack.c.l.b16 %v1159
        %v1175 = vunpack.c.l.b16 %v1160
        %v1176 = vunpack.c.l.b16 %v1161
        %v1177 = vpack.c.b16 %v1174, %v1173
        %v1178 = vpack.c.b16 %v1176, %v1175
        %v1182 = vsel %vm638, %v1157, 0
        %1184 = vmatprep.subr.bf16.mxu0 0
        %1185 = vmatpush1.bf16.msra.mxu0 0
        %1186 = vmatprep.subr.bf16.mxu0 0
        %1187 = vmatpush1.bf16.msra.mxu0 0
        %1188 = vmatprep.subr.bf16.mxu0 0
        %1189 = vmatpush1.bf16.msra.mxu0 0
        %1190 = vmatprep.subr.bf16.mxu0 0
        %1191 = vmatpush1.bf16.msra.mxu0 0
        %1192 = vmatprep.subr.bf16.mxu0 0
        %1193 = vmatpush1.bf16.msra.mxu0 0
        %1194 = vmatprep.subr.bf16.mxu0 0
        %1195 = vmatpush1.bf16.msra.mxu0 0
        %1196 = vmatprep.subr.bf16.mxu0 0
        %1197 = vmatpush1.bf16.msra.mxu0 %v1178
        %1198 = vmatprep.subr.bf16.mxu0 0
        %1199 = vmatpush1.bf16.msra.mxu0 %v1177
        %1200 = vmatprep.subr.bf16.mxu0 0
        %1201 = vmatpush2.bf16.msra.mxu0 0
        %1202 = vmatprep.subr.bf16.mxu0 0
        %1203 = vmatpush2.bf16.msra.mxu0 0
        %1204 = vmatprep.subr.bf16.mxu0 0
        %1205 = vmatpush2.bf16.msra.mxu0 0
        %1206 = vmatprep.subr.bf16.mxu0 0
        %1207 = vmatpush2.bf16.msra.mxu0 0
        %1208 = vmatprep.subr.bf16.mxu0 0
        %1209 = vmatpush2.bf16.msra.mxu0 0
        %1210 = vmatprep.subr.bf16.mxu0 0
        %1211 = vmatpush2.bf16.msra.mxu0 0
        %1212 = vmatprep.subr.bf16.mxu0 0
        %1213 = vmatpush2.bf16.msra.mxu0 0
        %1214 = vmatprep.subr.bf16.mxu0 0
        %1215 = vmatpush2.bf16.msra.mxu0 0
        %1216 = vmatprep.mubr.bf16.mxu0 0
        %1217 = vmatmul.mubr.bf16.gmra.mxu0 %v1182
        %v1218 = vpop.f32.mrf.mxu0
        %v1219 = vadd.f32 %v1167, %v1218
        %v1220 = vpop.f32.mrf.mxu0
        %v1221 = vpop.f32.mrf.mxu0
        %v1222 = vpop.f32.mrf.mxu0
        %1223 = vdwg.mxu0
        %v1224 = vld [vmem:[%s7] sm:$0x1]
        %v1225 = vld [vmem:[%s8] sm:$0x1]
        %v1226 = vsel %vm638, %v1219, 0.0
        %1227 = vadd.xlane.f32.xlu0 %v1226
        %v1228 = vpop.xlane.xlu0 %1227
        %v1229 = vrcp.pop 32.0
        %v1230 = vmul.f32 %v1228, %v1229
        %v1231 = vsub.f32 %v1219, %v1230
        %v1232 = vmul.f32 %v1231, %v1231
        %v1233 = vsel %vm638, %v1232, 0.0
        %1234 = vadd.xlane.f32.xlu0 %v1233
        %v1235 = vpop.xlane.xlu0 %1234
        %v1236 = vmul.f32 %v1235, %v1229
        %v1237 = vadd.f32 %v1236, 1e-05
        %v1238 = vrsqrt.pop %v1237
        %v1239 = vmul.f32 %v1231, %v1238
        %v1241 = vlaneseq
        %v1242 = vshrl.u32 %v1241, 7
        %v1243 = vsub.s32 0, %v1242
        %v1244 = vrot.slane %v1224, %v1243
        %v1246 = vmul.f32 %v1239, %v1244
        %v1248 = vlaneseq
        %v1249 = vshrl.u32 %v1248, 7
        %v1250 = vsub.s32 0, %v1249
        %v1251 = vrot.slane %v1225, %v1250
        %v1253 = vadd.f32 %v1246, %v1251
        %v1254 = vpack.c.bf16 %v1253, %v1253
        %v1255 = vld [vmem:[%s9] sm:$0xf]
        %v1256 = vld [vmem:[%s9 + $0x4] sm:$0xf]
        %v1257 = vld [vmem:[%s9 + $0x8] sm:$0xf]
        %v1258 = vld [vmem:[%s9 + $0xc] sm:$0xf]
        %v1259 = vld [vmem:[#allocation9] sm:$0x1]
        %v1261 = vlaneseq
        %v1262 = vshrl.u32 %v1261, 7
        %v1263 = vsub.s32 0, %v1262
        %v1264 = vrot.slane %v1259, %v1263
        %v1270 = vunpack.c.l.b16 %v1255
        %v1271 = vunpack.c.l.b16 %v1256
        %v1272 = vunpack.c.l.b16 %v1257
        %v1273 = vunpack.c.l.b16 %v1258
        %v1274 = vpack.c.b16 %v1271, %v1270
        %v1275 = vpack.c.b16 %v1273, %v1272
        %v1279 = vsel %vm638, %v1254, 0
        %1281 = vmatprep.subr.bf16.mxu0 0
        %1282 = vmatpush1.bf16.msra.mxu0 0
        %1283 = vmatprep.subr.bf16.mxu0 0
        %1284 = vmatpush1.bf16.msra.mxu0 0
        %1285 = vmatprep.subr.bf16.mxu0 0
        %1286 = vmatpush1.bf16.msra.mxu0 0
        %1287 = vmatprep.subr.bf16.mxu0 0
        %1288 = vmatpush1.bf16.msra.mxu0 0
        %1289 = vmatprep.subr.bf16.mxu0 0
        %1290 = vmatpush1.bf16.msra.mxu0 0
        %1291 = vmatprep.subr.bf16.mxu0 0
        %1292 = vmatpush1.bf16.msra.mxu0 0
        %1293 = vmatprep.subr.bf16.mxu0 0
        %1294 = vmatpush1.bf16.msra.mxu0 %v1275
        %1295 = vmatprep.subr.bf16.mxu0 0
        %1296 = vmatpush1.bf16.msra.mxu0 %v1274
        %1297 = vmatprep.subr.bf16.mxu0 0
        %1298 = vmatpush2.bf16.msra.mxu0 0
        %1299 = vmatprep.subr.bf16.mxu0 0
        %1300 = vmatpush2.bf16.msra.mxu0 0
        %1301 = vmatprep.subr.bf16.mxu0 0
        %1302 = vmatpush2.bf16.msra.mxu0 0
        %1303 = vmatprep.subr.bf16.mxu0 0
        %1304 = vmatpush2.bf16.msra.mxu0 0
        %1305 = vmatprep.subr.bf16.mxu0 0
        %1306 = vmatpush2.bf16.msra.mxu0 0
        %1307 = vmatprep.subr.bf16.mxu0 0
        %1308 = vmatpush2.bf16.msra.mxu0 0
        %1309 = vmatprep.subr.bf16.mxu0 0
        %1310 = vmatpush2.bf16.msra.mxu0 0
        %1311 = vmatprep.subr.bf16.mxu0 0
        %1312 = vmatpush2.bf16.msra.mxu0 0
        %1313 = vmatprep.mubr.bf16.mxu0 0
        %1314 = vmatmul.mubr.bf16.gmra.mxu0 %v1279
        %v1315 = vpop.f32.mrf.mxu0
        %v1316 = vadd.f32 %v1264, %v1315
        %v1317 = vpop.f32.mrf.mxu0
        %v1318 = vpop.f32.mrf.mxu0
        %v1319 = vpop.f32.mrf.mxu0
        %1320 = vdwg.mxu0
        %v1321 = vmax.f32 %v1316, 0.0
        %v1322 = vpack.c.bf16 %v1321, %v1321
        %v1323 = vld [vmem:[%s11] sm:$0xf]
        %v1324 = vld [vmem:[%s11 + $0x4] sm:$0xf]
        %v1325 = vld [vmem:[%s11 + $0x8] sm:$0xf]
        %v1326 = vld [vmem:[%s11 + $0xc] sm:$0xf]
        %v1327 = vld [vmem:[%s11 + $0x10] sm:$0xf]
        %v1328 = vld [vmem:[%s11 + $0x14] sm:$0xf]
        %v1329 = vld [vmem:[%s11 + $0x18] sm:$0xf]
        %v1330 = vld [vmem:[%s11 + $0x1c] sm:$0xf]
        %v1331 = vld [vmem:[%s12] sm:$0x1]
        %v1333 = vlaneseq
        %v1334 = vshrl.u32 %v1333, 7
        %v1335 = vsub.s32 0, %v1334
        %v1336 = vrot.slane %v1331, %v1335
        %v1346 = vunpack.c.l.b16 %v1323
        %v1347 = vunpack.c.l.b16 %v1324
        %v1348 = vunpack.c.l.b16 %v1325
        %v1349 = vunpack.c.l.b16 %v1326
        %v1350 = vunpack.c.l.b16 %v1327
        %v1351 = vunpack.c.l.b16 %v1328
        %v1352 = vunpack.c.l.b16 %v1329
        %v1353 = vunpack.c.l.b16 %v1330
        %v1354 = vpack.c.b16 %v1347, %v1346
        %v1355 = vpack.c.b16 %v1349, %v1348
        %v1356 = vpack.c.b16 %v1351, %v1350
        %v1357 = vpack.c.b16 %v1353, %v1352
        %vm1362 = vcmask 523264
        %v1364 = vsel %vm1362, %v1322, 0
        %1366 = vmatprep.subr.bf16.mxu0 0
        %1367 = vmatpush1.bf16.msra.mxu0 0
        %1368 = vmatprep.subr.bf16.mxu0 0
        %1369 = vmatpush1.bf16.msra.mxu0 0
        %1370 = vmatprep.subr.bf16.mxu0 0
        %1371 = vmatpush1.bf16.msra.mxu0 0
        %1372 = vmatprep.subr.bf16.mxu0 0
        %1373 = vmatpush1.bf16.msra.mxu0 0
        %1374 = vmatprep.subr.bf16.mxu0 0
        %1375 = vmatpush1.bf16.msra.mxu0 %v1357
        %1376 = vmatprep.subr.bf16.mxu0 0
        %1377 = vmatpush1.bf16.msra.mxu0 %v1356
        %1378 = vmatprep.subr.bf16.mxu0 0
        %1379 = vmatpush1.bf16.msra.mxu0 %v1355
        %1380 = vmatprep.subr.bf16.mxu0 0
        %1381 = vmatpush1.bf16.msra.mxu0 %v1354
        %1382 = vmatprep.subr.bf16.mxu0 0
        %1383 = vmatpush2.bf16.msra.mxu0 0
        %1384 = vmatprep.subr.bf16.mxu0 0
        %1385 = vmatpush2.bf16.msra.mxu0 0
        %1386 = vmatprep.subr.bf16.mxu0 0
        %1387 = vmatpush2.bf16.msra.mxu0 0
        %1388 = vmatprep.subr.bf16.mxu0 0
        %1389 = vmatpush2.bf16.msra.mxu0 0
        %1390 = vmatprep.subr.bf16.mxu0 0
        %1391 = vmatpush2.bf16.msra.mxu0 0
        %1392 = vmatprep.subr.bf16.mxu0 0
        %1393 = vmatpush2.bf16.msra.mxu0 0
        %1394 = vmatprep.subr.bf16.mxu0 0
        %1395 = vmatpush2.bf16.msra.mxu0 0
        %1396 = vmatprep.subr.bf16.mxu0 0
        %1397 = vmatpush2.bf16.msra.mxu0 0
        %1398 = vmatprep.mubr.bf16.mxu0 0
        %1399 = vmatmul.mubr.bf16.gmra.mxu0 %v1364
        %v1400 = vpop.f32.mrf.mxu0
        %v1401 = vadd.f32 %v1336, %v1400
        %v1402 = vpop.f32.mrf.mxu0
        %v1403 = vpop.f32.mrf.mxu0
        %v1404 = vpop.f32.mrf.mxu0
        %1405 = vdwg.mxu0
        %v1406 = vadd.f32 %v1401, %v1253
        %v1407 = vld [vmem:[%s13] sm:$0x1]
        %v1408 = vld [vmem:[%s14] sm:$0x1]
        %v1409 = vsel %vm638, %v1406, 0.0
        %1410 = vadd.xlane.f32.xlu0 %v1409
        %v1411 = vpop.xlane.xlu0 %1410
        %v1412 = vmul.f32 %v1411, %v1229
        %v1413 = vsub.f32 %v1406, %v1412
        %v1414 = vmul.f32 %v1413, %v1413
        %v1415 = vsel %vm638, %v1414, 0.0
        %1416 = vadd.xlane.f32.xlu0 %v1415
        %v1417 = vpop.xlane.xlu0 %1416
        %v1418 = vmul.f32 %v1417, %v1229
        %v1419 = vadd.f32 %v1418, 1e-05
        %v1420 = vrsqrt.pop %v1419
        %v1421 = vmul.f32 %v1413, %v1420
        %v1423 = vlaneseq
        %v1424 = vshrl.u32 %v1423, 7
        %v1425 = vsub.s32 0, %v1424
        %v1426 = vrot.slane %v1407, %v1425
        %v1428 = vmul.f32 %v1421, %v1426
        %v1430 = vlaneseq
        %v1431 = vshrl.u32 %v1430, 7
        %v1432 = vsub.s32 0, %v1431
        %v1433 = vrot.slane %v1408, %v1432
        %v1435 = vadd.f32 %v1428, %v1433
        %1436 = vst.msk [vmem:[%s610] sm:$0xff] %vm638, %v1435
        %s1437 = sand.u32 %s390, 1
        %s1438 = scalar_lea.sflag [#allocation5], %s1437
        %s1439 = sand.u32 %s390, 1
        %s1440 = smul.addr %s1439, 8
        %s1441 = scalar_lea.vmem [#allocation11], %s1440
        // Predicated region
        $region97: #{tpu_custom_call.1} parent=79 // pred_check
          %p1442 = pneg %p400
        $region98: #{tpu_custom_call.1} parent=79 // pred_check_branch
          %1444 = sbr.rel (%p1442) target = $region100
        $region99: #{tpu_custom_call.1} parent=79 // pred_region
          %s1446 = ssub.s32 128, 128
          %1447 = vsyncadd %s1438, %s1446
          %s1448 = sadd.s32 %s41, %s40
          %s1449 = smul.addr %s1448, 128
          %s1450 = scalar_lea.hbm %s15, %s1449
          %s1452 = sshll.u32 %s1441, 4
          %s1453 = int_to_ptr.vmem [resolvable:$true] %s1452
          %1455 = dma.vmem_to_hbm [thread:$0]  %s1453, 128, %s1450, %s1438
        $region100: #{tpu_custom_call.1} parent=79 // pred_fallthru
          _
      $region80: #{tpu_custom_call.1} parent=5 // pred_fallthru
        _
      %p1456 = scmp.le.s32.totalorder 2, %s31
      // Predicated region
      $region101: #{tpu_custom_call.1} parent=5 // pred_check
        %p1457 = pneg %p1456
      $region102: #{tpu_custom_call.1} parent=5 // pred_check_branch
        %1459 = sbr.rel (%p1457) target = $region104
      $region103: #{tpu_custom_call.1} parent=5 // pred_region
        %s1460 = ssub.s32 %s31, 2
        // Predicated region
        $region105: #{tpu_custom_call.1} parent=103 // pred_check
          %p1461 = pneg %p406
        $region106: #{tpu_custom_call.1} parent=103 // pred_check_branch
          %1463 = sbr.rel (%p1461) target = $region108
        $region107: #{tpu_custom_call.1} parent=103 // pred_region
          %s1464 = sand.u32 %s391, 1
          %s1465 = scalar_lea.sflag [#allocation5], %s1464
          %s1466 = sand.u32 %s391, 1
          %s1467 = smul.addr %s1466, 8
          %s1468 = scalar_lea.vmem [#allocation11], %s1467
          %1469 = dma.done %s1465, 128
        $region108: #{tpu_custom_call.1} parent=103 // pred_fallthru
          _
      $region104: #{tpu_custom_call.1} parent=5 // pred_fallthru
        _
    $region6: #{tpu_custom_call.1} parent=1 // loop_footer
      %s35 = sadd.s32 1, %s31
    $region7: #{tpu_custom_call.1} parent=1 // loop_footer_branch
      %30 = sbr.rel target = $region3
    $region8: #{tpu_custom_call.1} parent=1 // loop_exit
      _
    %1470 = vsyncpa [#allocation4], 1
    %s1471 = scalar_lea.sflag [#allocation4], 1
    %1472 = vsyncpa %s1471, 1
    %1473 = vsyncpa [#allocation7], 1
    %s1474 = scalar_lea.sflag [#allocation7], 1
    %1475 = vsyncpa %s1474, 1
    %1476 = vsyncpa [#allocation10], 1
    %1477 = vsyncpa [#allocation5], 1
    %s1478 = scalar_lea.sflag [#allocation5], 1
    %1479 = vsyncpa %s1478, 1

</llo_original>
